<compile_context>
chip_gen: v5e
topology: v5e:2x2
jax: 0.10.0
libtpu: 0.0.40
codegen_flags: <defaults>
</compile_context>

<pallas_src>
import functools
import math

import jax
import jax.numpy as jnp
from jax.experimental import pallas as pl
from jax.experimental.pallas import tpu as pltpu


# ----------------------------------------------------------------------------
# Hardware-gated tile selection
# ----------------------------------------------------------------------------
_HW_CONFIG = None


def _hw_config():
    """Returns (row-tile candidates, lane-tile candidates, vmem_limit or None)."""
    global _HW_CONFIG
    if _HW_CONFIG is None:
        try:
            vmem = int(pltpu.get_tpu_info().vmem_capacity_bytes)
        except Exception:
            vmem = 64 << 20                      # conservative (v7x-like) default
        if vmem >= (100 << 20):
            # 128 MiB VMEM parts (v5e / v6e): bigger tiles, raise scoped limit.
            _HW_CONFIG = ((512, 256, 128, 64, 32, 16, 8),
                          (1024, 512, 256, 128),
                          64 << 20)
        else:
            # 64 MiB VMEM parts (v7x): conservative tiles, default scoped limit.
            _HW_CONFIG = ((256, 128, 64, 32, 16, 8),
                          (512, 256, 128),
                          None)
    return _HW_CONFIG


_ATTN_TQ_CANDIDATES = (256, 128, 64, 32, 16, 8)   # query-row tiles (sublane)
_ATTN_TK_CANDIDATES = (512, 256, 128)             # kv tiles (lane dim of scores)

# Fuse LayerNorm into the matmul epilogue when the full feature row fits one
# lane tile of the output block.
_MAX_FUSED_LN_N = 2048


def _pick_tile(dim, candidates):
    """Largest candidate that evenly divides `dim`, else the full dim (legal)."""
    for c in candidates:
        if dim >= c and dim % c == 0:
            return c
    return dim


def _round_up(x, m):
    return ((x + m - 1) // m) * m


# ----------------------------------------------------------------------------
# Pallas kernels
# ----------------------------------------------------------------------------
def _make_linear_kernel(relu, has_residual, has_ln):
    def kernel(*refs):
        x_ref, w_ref, b_ref = refs[:3]
        pos = 3
        r_ref = g_ref = beta_ref = None
        if has_residual:
            r_ref = refs[pos]; pos += 1
        if has_ln:
            g_ref = refs[pos]; beta_ref = refs[pos + 1]; pos += 2
        o_ref = refs[pos]
        acc_ref = refs[pos + 1]

        k = pl.program_id(2)

        @pl.when(k == 0)
        def _():
            acc_ref[...] = jnp.zeros_like(acc_ref)

        # x and w are already bf16 (activation stream is bf16) -> no per-K cast.
        acc_ref[...] += jnp.dot(x_ref[...], w_ref[...],
                                preferred_element_type=jnp.float32)

        @pl.when(k == pl.num_programs(2) - 1)
        def _():
            y = acc_ref[...] + b_ref[...]                 # f32 epilogue math
            if relu:
                y = jnp.maximum(y, 0.0)
            if has_residual:
                y = y + r_ref[...].astype(jnp.float32)
            if has_ln:
                mean = jnp.mean(y, axis=-1, keepdims=True)
                var = jnp.mean((y - mean) ** 2, axis=-1, keepdims=True)
                y = (y - mean) * jax.lax.rsqrt(var + 1e-5) * g_ref[...] + beta_ref[...]
            o_ref[...] = y.astype(o_ref.dtype)

    return kernel


def _layernorm_kernel(x_ref, g_ref, b_ref, o_ref):
    # Fallback standalone LayerNorm (only used when d_model is too wide to fuse).
    x = x_ref[...].astype(jnp.float32)
    mean = jnp.mean(x, axis=-1, keepdims=True)
    var = jnp.mean((x - mean) ** 2, axis=-1, keepdims=True)
    y = (x - mean) * jax.lax.rsqrt(var + 1e-5) * g_ref[...] + b_ref[...]
    o_ref[...] = y.astype(o_ref.dtype)


def _make_attention_kernel(causal):
    """Flash-style attention for one (batch, head, q-tile) over kv tiles."""

    def kernel(q_ref, k_ref, v_ref, mask_ref, o_ref, m_sc, l_sc, acc_sc):
        ki = pl.program_id(3)

        @pl.when(ki == 0)
        def _():
            m_sc[...] = jnp.full_like(m_sc, -jnp.inf)
            l_sc[...] = jnp.zeros_like(l_sc)
            acc_sc[...] = jnp.zeros_like(acc_sc)

        q = q_ref[...]                                    # (tq, dk) bf16; scale folded into W_q
        k = k_ref[...]                                    # (tk, dk) bf16
        # q @ k^T without materializing a transpose (contract the dk axis).
        s = jax.lax.dot_general(q, k, (((1,), (1,)), ((), ())),
                                preferred_element_type=jnp.float32)   # (tq, tk)

        keep = mask_ref[...] > 0.0                        # (1, tk) or (tq, 1) keep-mask
        if causal:
            tq, tk = s.shape
            rows = pl.program_id(2) * tq + jax.lax.broadcasted_iota(
                jnp.int32, (tq, tk), 0)
            cols = ki * tk + jax.lax.broadcasted_iota(jnp.int32, (tq, tk), 1)
            keep = jnp.logical_and(keep, rows >= cols)
        s = jnp.where(keep, s, -1e9)                      # matches torch masked_fill(-1e9)

        m_prev = m_sc[...]
        m_new = jnp.maximum(m_prev, jnp.max(s, axis=-1, keepdims=True))
        alpha = jnp.exp(m_prev - m_new)
        p = jnp.exp(s - m_new)
        l_sc[...] = alpha * l_sc[...] + jnp.sum(p, axis=-1, keepdims=True)
        acc_sc[...] = alpha * acc_sc[...] + jnp.dot(
            p.astype(jnp.bfloat16), v_ref[...], preferred_element_type=jnp.float32)
        m_sc[...] = m_new

        @pl.when(ki == pl.num_programs(3) - 1)
        def _():
            o_ref[...] = (acc_sc[...] *
                          pl.reciprocal(l_sc[...], approx=True)).astype(o_ref.dtype)

    return kernel


# ----------------------------------------------------------------------------
# Pallas wrappers
# ----------------------------------------------------------------------------
def pallas_linear(x, w, b, *, relu=False, residual=None, ln=None,
                  out_dtype=jnp.bfloat16):
    """y = x @ w + b (+residual) (+ReLU) (+LayerNorm).  x:(M,K), w:(K,N)."""
    M, K = x.shape
    N = w.shape[1]
    tm_cands, tl_cands, vmem_limit = _hw_config()
    tm = _pick_tile(M, tm_cands)
    tk = _pick_tile(K, tl_cands)
    tn = N if ln is not None else _pick_tile(N, tl_cands)   # LN needs the full row
    grid = (M // tm, N // tn, K // tk)

    in_specs = [
        pl.BlockSpec((tm, tk), lambda i, j, k: (i, k)),
        pl.BlockSpec((tk, tn), lambda i, j, k: (k, j)),
        pl.BlockSpec((1, tn), lambda i, j, k: (0, j)),
    ]
    args = [x.astype(jnp.bfloat16), w.astype(jnp.bfloat16),
            b.reshape(1, N).astype(jnp.float32)]
    if residual is not None:
        in_specs.append(pl.BlockSpec((tm, tn), lambda i, j, k: (i, j)))
        args.append(residual.astype(jnp.bfloat16))
    if ln is not None:
        gamma, beta = ln
        in_specs.append(pl.BlockSpec((1, tn), lambda i, j, k: (0, j)))
        in_specs.append(pl.BlockSpec((1, tn), lambda i, j, k: (0, j)))
        args.append(gamma.reshape(1, N).astype(jnp.float32))
        args.append(beta.reshape(1, N).astype(jnp.float32))

    cp = dict(dimension_semantics=("parallel", "parallel", "arbitrary"))
    if vmem_limit is not None:
        cp["vmem_limit_bytes"] = vmem_limit

    return pl.pallas_call(
        _make_linear_kernel(relu, residual is not None, ln is not None),
        out_shape=jax.ShapeDtypeStruct((M, N), out_dtype),
        grid=grid,
        in_specs=in_specs,
        out_specs=pl.BlockSpec((tm, tn), lambda i, j, k: (i, j)),
        scratch_shapes=[pltpu.VMEM((tm, tn), jnp.float32)],
        compiler_params=pltpu.CompilerParams(**cp),
    )(*args)


def pallas_layernorm(x2, gamma, beta):
    """Standalone LayerNorm on (M, N) rows (fallback when N is too wide to fuse)."""
    M, N = x2.shape
    tm_cands, _, vmem_limit = _hw_config()
    tm = _pick_tile(M, tm_cands)
    cp = dict(dimension_semantics=("parallel",))
    if vmem_limit is not None:
        cp["vmem_limit_bytes"] = vmem_limit
    return pl.pallas_call(
        _layernorm_kernel,
        out_shape=jax.ShapeDtypeStruct((M, N), jnp.bfloat16),
        grid=(M // tm,),
        in_specs=[
            pl.BlockSpec((tm, N), lambda i: (i, 0)),
            pl.BlockSpec((1, N), lambda i: (0, 0)),
            pl.BlockSpec((1, N), lambda i: (0, 0)),
        ],
        out_specs=pl.BlockSpec((tm, N), lambda i: (i, 0)),
        compiler_params=pltpu.CompilerParams(**cp),
    )(x2, gamma.reshape(1, N).astype(jnp.float32),
      beta.reshape(1, N).astype(jnp.float32))


def linear_residual_layernorm(x2, w, b, residual, gamma, beta):
    """Project + residual add + LayerNorm (fused when the feature row fits)."""
    if w.shape[1] <= _MAX_FUSED_LN_N:
        return pallas_linear(x2, w, b, residual=residual, ln=(gamma, beta))
    # TODO(synk): very wide d_model falls back to a separate LayerNorm pass.
    y = pallas_linear(x2, w, b, residual=residual)
    return pallas_layernorm(y, gamma, beta)


def pallas_attention(q, k, v, mask, *, causal, mask_is_query):
    """q:(B,H,Sq,dk)  k,v:(B,H,Sk,dk)  mask: (B,Sq,1) or (B,1,Sk) keep-mask (f32)."""
    B, H, Sq, dk = q.shape
    Sk = k.shape[2]
    tq = _pick_tile(Sq, _ATTN_TQ_CANDIDATES)
    tk = _pick_tile(Sk, _ATTN_TK_CANDIDATES)
    grid = (B, H, Sq // tq, Sk // tk)

    if mask_is_query:
        mask_spec = pl.BlockSpec((None, tq, 1), lambda b, h, qi, ki: (b, qi, 0))
    else:
        mask_spec = pl.BlockSpec((None, 1, tk), lambda b, h, qi, ki: (b, 0, ki))

    return pl.pallas_call(
        _make_attention_kernel(causal),
        out_shape=jax.ShapeDtypeStruct((B, H, Sq, dk), jnp.bfloat16),
        grid=grid,
        in_specs=[
            pl.BlockSpec((None, None, tq, dk), lambda b, h, qi, ki: (b, h, qi, 0)),
            pl.BlockSpec((None, None, tk, dk), lambda b, h, qi, ki: (b, h, ki, 0)),
            pl.BlockSpec((None, None, tk, dk), lambda b, h, qi, ki: (b, h, ki, 0)),
            mask_spec,
        ],
        out_specs=pl.BlockSpec((None, None, tq, dk),
                               lambda b, h, qi, ki: (b, h, qi, 0)),
        scratch_shapes=[pltpu.VMEM((tq, 1), jnp.float32),
                        pltpu.VMEM((tq, 1), jnp.float32),
                        pltpu.VMEM((tq, dk), jnp.float32)],
        compiler_params=pltpu.CompilerParams(
            dimension_semantics=("parallel", "parallel", "parallel", "arbitrary")),
    )(q, k, v, mask)


# ----------------------------------------------------------------------------
# Module forward passes (composed from kernels; glue is plain JAX)
# ----------------------------------------------------------------------------
def _split_heads(t, B, S, H, dk):
    return t.reshape(B, S, H, dk).transpose(0, 2, 1, 3)        # (B, H, S, dk)


def _merge_heads(t, B, S, D):
    return t.transpose(0, 2, 1, 3).reshape(B * S, D)


def self_mha_forward(p, x, mask, ln_g, ln_b, *, causal, mask_is_query, num_heads):
    B, S, D = x.shape
    H, dk = num_heads, D // num_heads
    x2 = x.reshape(B * S, D)

    qkv = pallas_linear(x2, p["w_qkv"], p["b_qkv"])             # fused (D, 3D) proj
    Q = _split_heads(qkv[:, :D], B, S, H, dk)
    K = _split_heads(qkv[:, D:2 * D], B, S, H, dk)
    V = _split_heads(qkv[:, 2 * D:], B, S, H, dk)

    attn = pallas_attention(Q, K, V, mask, causal=causal, mask_is_query=mask_is_query)
    attn2 = _merge_heads(attn, B, S, D)

    out = linear_residual_layernorm(attn2, p["wo"], p["bo"], x2, ln_g, ln_b)
    return out.reshape(B, S, D)


def cross_mha_forward(p, x, enc_out, mask, ln_g, ln_b, *, num_heads):
    B, Sq, D = x.shape
    Sk = enc_out.shape[1]
    H, dk = num_heads, D // num_heads
    x2 = x.reshape(B * Sq, D)

    q = pallas_linear(x2, p["w_q"], p["b_q"])
    kv = pallas_linear(enc_out.reshape(B * Sk, D), p["w_kv"], p["b_kv"])
    Q = _split_heads(q, B, Sq, H, dk)
    K = _split_heads(kv[:, :D], B, Sk, H, dk)
    V = _split_heads(kv[:, D:], B, Sk, H, dk)

    attn = pallas_attention(Q, K, V, mask, causal=False, mask_is_query=False)
    attn2 = _merge_heads(attn, B, Sq, D)

    out = linear_residual_layernorm(attn2, p["wo"], p["bo"], x2, ln_g, ln_b)
    return out.reshape(B, Sq, D)


def ffn_forward(p, x, ln_g, ln_b):
    B, S, D = x.shape
    x2 = x.reshape(B * S, D)
    h = pallas_linear(x2, p["w1"], p["b1"], relu=True)
    y = linear_residual_layernorm(h, p["w2"], p["b2"], x2, ln_g, ln_b)
    return y.reshape(B, S, D)


def encoder_layer_forward(p, x, src_mask, num_heads):
    x = self_mha_forward(p["self_attn"], x, src_mask, p["ln1_g"], p["ln1_b"],
                         causal=False, mask_is_query=False, num_heads=num_heads)
    x = ffn_forward(p["ffn"], x, p["ln2_g"], p["ln2_b"])
    return x


def decoder_layer_forward(p, x, enc_out, src_mask, tgt_mask, num_heads):
    x = self_mha_forward(p["self_attn"], x, tgt_mask, p["ln1_g"], p["ln1_b"],
                         causal=True, mask_is_query=True, num_heads=num_heads)
    x = cross_mha_forward(p["cross_attn"], x, enc_out, src_mask,
                          p["ln2_g"], p["ln2_b"], num_heads=num_heads)
    x = ffn_forward(p["ffn"], x, p["ln3_g"], p["ln3_b"])
    return x


def positional_encoding_table(d_model, max_seq_length):
    position = jnp.arange(max_seq_length, dtype=jnp.float32)[:, None]
    div_term = jnp.exp(
        jnp.arange(0, d_model, 2, dtype=jnp.float32) * -(math.log(10000.0) / d_model))
    pe = jnp.zeros((max_seq_length, d_model), dtype=jnp.float32)
    pe = pe.at[:, 0::2].set(jnp.sin(position * div_term))
    pe = pe.at[:, 1::2].set(jnp.cos(position * div_term))
    return pe


def generate_masks(src, tgt):
    """Tiny keep-masks (1=keep, 0=mask); no (B,Sq,Sk) mask is ever materialized.

    src_mask masks padded *keys* (enc self-attn, cross-attn); tgt_mask masks
    padded *queries* (dec self-attn) — the causal part is generated in-kernel.
    """
    src_mask = (src != 0).astype(jnp.float32)[:, None, :]     # (B, 1, Ss)
    tgt_mask = (tgt != 0).astype(jnp.float32)[:, :, None]     # (B, St, 1)
    return src_mask, tgt_mask


def transformer_forward(params, src, tgt, *, num_heads, tgt_vocab):
    src_mask, tgt_mask = generate_masks(src, tgt)
    pe = params["pe"]

    # Glue in plain JAX: embedding gather + positional encoding, then bf16 stream.
    src_emb = (jnp.take(params["enc_embedding"], src, axis=0)
               + pe[None, :src.shape[1], :]).astype(jnp.bfloat16)
    tgt_emb = (jnp.take(params["dec_embedding"], tgt, axis=0)
               + pe[None, :tgt.shape[1], :]).astype(jnp.bfloat16)

    enc_out = src_emb
    for lp in params["encoder_layers"]:
        enc_out = encoder_layer_forward(lp, enc_out, src_mask, num_heads)

    dec_out = tgt_emb
    for lp in params["decoder_layers"]:
        dec_out = decoder_layer_forward(lp, dec_out, enc_out, src_mask, tgt_mask,
                                        num_heads)

    # Final vocab projection: padded to a 128-lane multiple for lane-dense stores.
    B, St, D = dec_out.shape
    logits = pallas_linear(dec_out.reshape(B * St, D),
                           params["fc_w"], params["fc_b"], out_dtype=jnp.float32)
    return logits.reshape(B, St, -1)[:, :, :tgt_vocab]


# ----------------------------------------------------------------------------
# Deterministic parameter initialization (matmul weights stored bf16)
# ----------------------------------------------------------------------------
def _rand_w(key, din, dout):
    return jax.random.normal(key, (din, dout), jnp.float32) * 0.05


def _init_self_mha(key, d_model, num_heads):
    kq, kk, kv, ko = jax.random.split(key, 4)
    scale = 1.0 / math.sqrt(d_model // num_heads)
    wq = _rand_w(kq, d_model, d_model) * scale          # fold 1/sqrt(dk) into W_q
    wk = _rand_w(kk, d_model, d_model)
    wv = _rand_w(kv, d_model, d_model)
    return {
        "w_qkv": jnp.concatenate([wq, wk, wv], axis=1).astype(jnp.bfloat16),
        "b_qkv": jnp.zeros((3 * d_model,), jnp.float32),
        "wo": _rand_w(ko, d_model, d_model).astype(jnp.bfloat16),
        "bo": jnp.zeros((d_model,), jnp.float32),
    }


def _init_cross_mha(key, d_model, num_heads):
    kq, kk, kv, ko = jax.random.split(key, 4)
    scale = 1.0 / math.sqrt(d_model // num_heads)
    return {
        "w_q": (_rand_w(kq, d_model, d_model) * scale).astype(jnp.bfloat16),
        "b_q": jnp.zeros((d_model,), jnp.float32),
        "w_kv": jnp.concatenate(
            [_rand_w(kk, d_model, d_model), _rand_w(kv, d_model, d_model)],
            axis=1).astype(jnp.bfloat16),
        "b_kv": jnp.zeros((2 * d_model,), jnp.float32),
        "wo": _rand_w(ko, d_model, d_model).astype(jnp.bfloat16),
        "bo": jnp.zeros((d_model,), jnp.float32),
    }


def _init_ffn(key, d_model, d_ff):
    k1, k2 = jax.random.split(key)
    return {
        "w1": _rand_w(k1, d_model, d_ff).astype(jnp.bfloat16),
        "b1": jnp.zeros((d_ff,), jnp.float32),
        "w2": _rand_w(k2, d_ff, d_model).astype(jnp.bfloat16),
        "b2": jnp.zeros((d_model,), jnp.float32),
    }


def _ln_params(d_model):
    return jnp.ones((d_model,), jnp.float32), jnp.zeros((d_model,), jnp.float32)


def _init_encoder_layer(key, d_model, num_heads, d_ff):
    k1, k2 = jax.random.split(key)
    g1, b1 = _ln_params(d_model)
    g2, b2 = _ln_params(d_model)
    return {
        "self_attn": _init_self_mha(k1, d_model, num_heads),
        "ffn": _init_ffn(k2, d_model, d_ff),
        "ln1_g": g1, "ln1_b": b1, "ln2_g": g2, "ln2_b": b2,
    }


def _init_decoder_layer(key, d_model, num_heads, d_ff):
    k1, k2, k3 = jax.random.split(key, 3)
    g1, b1 = _ln_params(d_model)
    g2, b2 = _ln_params(d_model)
    g3, b3 = _ln_params(d_model)
    return {
        "self_attn": _init_self_mha(k1, d_model, num_heads),
        "cross_attn": _init_cross_mha(k2, d_model, num_heads),
        "ffn": _init_ffn(k3, d_model, d_ff),
        "ln1_g": g1, "ln1_b": b1, "ln2_g": g2, "ln2_b": b2, "ln3_g": g3, "ln3_b": b3,
    }


def init_transformer(key, src_vocab, tgt_vocab, d_model, num_heads,
                     num_layers, d_ff, max_seq_length):
    keys = jax.random.split(key, 3 + 2 * num_layers)
    params = {
        "enc_embedding": jax.random.normal(keys[0], (src_vocab, d_model),
                                           jnp.float32) * 0.1,
        "dec_embedding": jax.random.normal(keys[1], (tgt_vocab, d_model),
                                           jnp.float32) * 0.1,
        "pe": positional_encoding_table(d_model, max_seq_length),
        "encoder_layers": [
            _init_encoder_layer(keys[2 + i], d_model, num_heads, d_ff)
            for i in range(num_layers)
        ],
        "decoder_layers": [
            _init_decoder_layer(keys[2 + num_layers + i], d_model, num_heads, d_ff)
            for i in range(num_layers)
        ],
    }
    # Final projection padded up to a 128-lane multiple (lane-dense stores).
    vocab_pad = _round_up(tgt_vocab, 128)
    fc_w = jnp.zeros((d_model, vocab_pad), jnp.float32)
    fc_w = fc_w.at[:, :tgt_vocab].set(
        _rand_w(keys[2 + 2 * num_layers], d_model, tgt_vocab))
    params["fc_w"] = fc_w.astype(jnp.bfloat16)
    params["fc_b"] = jnp.zeros((vocab_pad,), jnp.float32)
    return params


# ----------------------------------------------------------------------------
if __name__ == "__main__":
    # Small config: batch=2, seq=8, d_model=32, heads=4, layers=2, d_ff=64.
    src_vocab, tgt_vocab = 16, 16
    d_model, num_heads, num_layers, d_ff = 32, 4, 2, 64
    max_seq_length = 16
    B, S = 2, 8

    key = jax.random.PRNGKey(0)
    k_params, k_src, k_tgt = jax.random.split(key, 3)

    params = init_transformer(k_params, src_vocab, tgt_vocab, d_model,
                              num_heads, num_layers, d_ff, max_seq_length)

    src = jax.random.randint(k_src, (B, S), 1, src_vocab, dtype=jnp.int32)
    tgt = jax.random.randint(k_tgt, (B, S), 1, tgt_vocab, dtype=jnp.int32)
    # Add some padding tokens (id 0) so the masks are exercised.
    src = src.at[:, -1].set(0)
    tgt = tgt.at[0, -2:].set(0)

    fwd = jax.jit(functools.partial(transformer_forward,
                                    num_heads=num_heads, tgt_vocab=tgt_vocab))
    out = jax.block_until_ready(fwd(params, src, tgt))
    assert out.shape == (B, S, tgt_vocab), out.shape
    assert bool(jnp.all(jnp.isfinite(out)))
    print("KERNEL_OK")
</pallas_src>

<mosaic_0001>
module attributes {stable_mosaic.version = 11 : i64} {
  func.func @kernel(%arg0: i32, %arg1: i32, %arg2: i32, %arg3: memref<16x32xbf16, #tpu.memory_space<vmem>>, %arg4: memref<32x96xbf16, #tpu.memory_space<vmem>>, %arg5: memref<1x96xf32, #tpu.memory_space<vmem>>, %arg6: memref<16x96xbf16, #tpu.memory_space<vmem>>, %arg7: memref<16x96xf32, #tpu.memory_space<vmem>>) attributes {dimension_semantics = [#tpu.dimension_semantics<parallel>, #tpu.dimension_semantics<parallel>, #tpu.dimension_semantics<arbitrary>], iteration_bounds = array<i64: 1, 1, 1>, scalar_prefetch = 0 : i64, scratch_operands = 1 : i64, tpu.core_type = #tpu.core_type<tc>, window_params = [{transform_indices = @transform_0, window_bounds = array<i64: 16, 32>}, {transform_indices = @transform_1, window_bounds = array<i64: 32, 96>}, {transform_indices = @transform_2, window_bounds = array<i64: 1, 96>}, {transform_indices = @transform_3, window_bounds = array<i64: 16, 96>}]} {
    %c0_i32 = arith.constant 0 : i32
    %0 = arith.cmpi eq, %arg2, %c0_i32 : i32
    %1 = arith.extui %0 : i1 to i32
    %c0_i32_0 = arith.constant 0 : i32
    %2 = arith.cmpi ne, %1, %c0_i32_0 : i32
    scf.if %2 {
      %cst_10 = arith.constant 0.000000e+00 : f32
      %12 = vector.broadcast %cst_10 : f32 to vector<16x96xf32>
      %c0_11 = arith.constant 0 : index
      %c0_12 = arith.constant 0 : index
      %13 = vector.load %arg7[%c0_11, %c0_12] : memref<16x96xf32, #tpu.memory_space<vmem>>, vector<16x96xf32>
      tpu.vector_store %arg7[%c0_11, %c0_12], %12 {strides = array<i32>} : memref<16x96xf32, #tpu.memory_space<vmem>>, vector<16x96xf32>,
    } else {
    }
    %c0 = arith.constant 0 : index
    %c0_1 = arith.constant 0 : index
    %3 = vector.load %arg7[%c0, %c0_1] : memref<16x96xf32, #tpu.memory_space<vmem>>, vector<16x96xf32>
    %c0_2 = arith.constant 0 : index
    %c0_3 = arith.constant 0 : index
    %4 = vector.load %arg3[%c0_2, %c0_3] : memref<16x32xbf16, #tpu.memory_space<vmem>>, vector<16x32xbf16>
    %c0_4 = arith.constant 0 : index
    %c0_5 = arith.constant 0 : index
    %5 = vector.load %arg4[%c0_4, %c0_5] : memref<32x96xbf16, #tpu.memory_space<vmem>>, vector<32x96xbf16>
    %cst = arith.constant dense<0.000000e+00> : vector<16x96xf32>
    %6 = tpu.matmul %4, %5, %cst {dimension_numbers = #tpu.dot_dimension_numbers<[1], [0], [0], [1], [0, 0, 1, 1], [], []>} : vector<16x32xbf16>, vector<32x96xbf16>, vector<16x96xf32> -> vector<16x96xf32>
    %7 = arith.addf %3, %6 : vector<16x96xf32>
    %c0_6 = arith.constant 0 : index
    %c0_7 = arith.constant 0 : index
    %8 = vector.load %arg7[%c0_6, %c0_7] : memref<16x96xf32, #tpu.memory_space<vmem>>, vector<16x96xf32>
    tpu.vector_store %arg7[%c0_6, %c0_7], %7 {strides = array<i32>} : memref<16x96xf32, #tpu.memory_space<vmem>>, vector<16x96xf32>,
    %c0_i32_8 = arith.constant 0 : i32
    %9 = arith.cmpi eq, %arg2, %c0_i32_8 : i32
    %10 = arith.extui %9 : i1 to i32
    %c0_i32_9 = arith.constant 0 : i32
    %11 = arith.cmpi ne, %10, %c0_i32_9 : i32
    scf.if %11 {
      %c0_10 = arith.constant 0 : index
      %c0_11 = arith.constant 0 : index
      %12 = vector.load %arg7[%c0_10, %c0_11] : memref<16x96xf32, #tpu.memory_space<vmem>>, vector<16x96xf32>
      %c0_12 = arith.constant 0 : index
      %c0_13 = arith.constant 0 : index
      %13 = vector.load %arg5[%c0_12, %c0_13] : memref<1x96xf32, #tpu.memory_space<vmem>>, vector<1x96xf32>
      %14 = vector.broadcast %13 : vector<1x96xf32> to vector<16x96xf32>
      %15 = arith.addf %12, %14 : vector<16x96xf32>
      %16 = arith.truncf %15 : vector<16x96xf32> to vector<16x96xbf16>
      %c0_14 = arith.constant 0 : index
      %c0_15 = arith.constant 0 : index
      %17 = vector.load %arg6[%c0_14, %c0_15] : memref<16x96xbf16, #tpu.memory_space<vmem>>, vector<16x96xbf16>
      tpu.vector_store %arg6[%c0_14, %c0_15], %16 {strides = array<i32>} : memref<16x96xbf16, #tpu.memory_space<vmem>>, vector<16x96xbf16>,
    } else {
    }
    return
  }
  func.func @transform_0(%arg0: i32, %arg1: i32, %arg2: i32) -> (i32, i32) {
    %c0_i32 = arith.constant 0 : i32
    return %arg0, %arg2 : i32, i32
  }
  func.func @transform_1(%arg0: i32, %arg1: i32, %arg2: i32) -> (i32, i32) {
    %c0_i32 = arith.constant 0 : i32
    return %arg2, %arg1 : i32, i32
  }
  func.func @transform_2(%arg0: i32, %arg1: i32, %arg2: i32) -> (i32, i32) {
    %c0_i32 = arith.constant 0 : i32
    %c0_i32_0 = arith.constant 0 : i32
    return %c0_i32, %arg1 : i32, i32
  }
  func.func @transform_3(%arg0: i32, %arg1: i32, %arg2: i32) -> (i32, i32) {
    %c0_i32 = arith.constant 0 : i32
    return %arg0, %arg1 : i32, i32
  }
}

module attributes {stable_mosaic.version = 11 : i64} {
  func.func @kernel(%arg0: i32, %arg1: i32, %arg2: i32, %arg3: i32, %arg4: memref<1x1x8x8xbf16, #tpu.memory_space<vmem>>, %arg5: memref<1x1x8x8xbf16, #tpu.memory_space<vmem>>, %arg6: memref<1x1x8x8xbf16, #tpu.memory_space<vmem>>, %arg7: memref<1x8x1xf32, #tpu.memory_space<vmem>>, %arg8: memref<1x1x8x8xbf16, #tpu.memory_space<vmem>>, %arg9: memref<8x1xf32, #tpu.memory_space<vmem>>, %arg10: memref<8x1xf32, #tpu.memory_space<vmem>>, %arg11: memref<8x8xf32, #tpu.memory_space<vmem>>) attributes {dimension_semantics = [#tpu.dimension_semantics<parallel>, #tpu.dimension_semantics<parallel>, #tpu.dimension_semantics<parallel>, #tpu.dimension_semantics<arbitrary>], iteration_bounds = array<i64: 2, 4, 1, 1>, scalar_prefetch = 0 : i64, scratch_operands = 3 : i64, tpu.core_type = #tpu.core_type<tc>, window_params = [{transform_indices = @transform_0, window_bounds = array<i64: 1, 1, 8, 8>}, {transform_indices = @transform_1, window_bounds = array<i64: 1, 1, 8, 8>}, {transform_indices = @transform_2, window_bounds = array<i64: 1, 1, 8, 8>}, {transform_indices = @transform_3, window_bounds = array<i64: 1, 8, 1>}, {transform_indices = @transform_4, window_bounds = array<i64: 1, 1, 8, 8>}]} {
    %c0_i32 = arith.constant 0 : i32
    %0 = arith.cmpi eq, %arg3, %c0_i32 : i32
    %1 = arith.extui %0 : i1 to i32
    %c0_i32_0 = arith.constant 0 : i32
    %2 = arith.cmpi ne, %1, %c0_i32_0 : i32
    scf.if %2 {
      %cst_35 = arith.constant 0xFF800000 : f32
      %53 = vector.broadcast %cst_35 : f32 to vector<8x1xf32>
      %c0_36 = arith.constant 0 : index
      %c0_37 = arith.constant 0 : index
      %54 = vector.load %arg9[%c0_36, %c0_37] : memref<8x1xf32, #tpu.memory_space<vmem>>, vector<8x1xf32>
      tpu.vector_store %arg9[%c0_36, %c0_37], %53 {strides = array<i32>} : memref<8x1xf32, #tpu.memory_space<vmem>>, vector<8x1xf32>,
      %cst_38 = arith.constant 0.000000e+00 : f32
      %55 = vector.broadcast %cst_38 : f32 to vector<8x1xf32>
      %c0_39 = arith.constant 0 : index
      %c0_40 = arith.constant 0 : index
      %56 = vector.load %arg10[%c0_39, %c0_40] : memref<8x1xf32, #tpu.memory_space<vmem>>, vector<8x1xf32>
      tpu.vector_store %arg10[%c0_39, %c0_40], %55 {strides = array<i32>} : memref<8x1xf32, #tpu.memory_space<vmem>>, vector<8x1xf32>,
      %cst_41 = arith.constant 0.000000e+00 : f32
      %57 = vector.broadcast %cst_41 : f32 to vector<8x8xf32>
      %c0_42 = arith.constant 0 : index
      %c0_43 = arith.constant 0 : index
      %58 = vector.load %arg11[%c0_42, %c0_43] : memref<8x8xf32, #tpu.memory_space<vmem>>, vector<8x8xf32>
      tpu.vector_store %arg11[%c0_42, %c0_43], %57 {strides = array<i32>} : memref<8x8xf32, #tpu.memory_space<vmem>>, vector<8x8xf32>,
    } else {
    }
    %c0 = arith.constant 0 : index
    %c0_1 = arith.constant 0 : index
    %c0_2 = arith.constant 0 : index
    %c0_3 = arith.constant 0 : index
    %3 = vector.load %arg4[%c0, %c0_1, %c0_2, %c0_3] : memref<1x1x8x8xbf16, #tpu.memory_space<vmem>>, vector<1x1x8x8xbf16>
    %4 = vector.shape_cast %3 : vector<1x1x8x8xbf16> to vector<8x8xbf16>
    %c0_4 = arith.constant 0 : index
    %c0_5 = arith.constant 0 : index
    %c0_6 = arith.constant 0 : index
    %c0_7 = arith.constant 0 : index
    %5 = vector.load %arg5[%c0_4, %c0_5, %c0_6, %c0_7] : memref<1x1x8x8xbf16, #tpu.memory_space<vmem>>, vector<1x1x8x8xbf16>
    %6 = vector.shape_cast %5 : vector<1x1x8x8xbf16> to vector<8x8xbf16>
    %cst = arith.constant dense<0.000000e+00> : vector<8x8xf32>
    %7 = tpu.matmul %4, %6, %cst {dimension_numbers = #tpu.dot_dimension_numbers<[1], [1], [0], [0], [0, 0, 1, 0], [], []>} : vector<8x8xbf16>, vector<8x8xbf16>, vector<8x8xf32> -> vector<8x8xf32>
    %c0_8 = arith.constant 0 : index
    %c0_9 = arith.constant 0 : index
    %c0_10 = arith.constant 0 : index
    %8 = vector.load %arg7[%c0_8, %c0_9, %c0_10] : memref<1x8x1xf32, #tpu.memory_space<vmem>>, vector<1x8x1xf32>
    %9 = vector.shape_cast %8 : vector<1x8x1xf32> to vector<8x1xf32>
    %cst_11 = arith.constant 0.000000e+00 : f32
    %10 = vector.broadcast %cst_11 : f32 to vector<8x1xf32>
    %11 = arith.cmpf ogt, %9, %10 : vector<8x1xf32>
    %c8_i32 = arith.constant 8 : i32
    %12 = arith.muli %arg2, %c8_i32 : i32
    %13 = tpu.iota {dimensions = array<i32: 0>} : vector<8x8xi32>
    %14 = vector.broadcast %12 : i32 to vector<8x8xi32>
    %15 = arith.addi %14, %13 : vector<8x8xi32>
    %c8_i32_12 = arith.constant 8 : i32
    %16 = arith.muli %arg3, %c8_i32_12 : i32
    %17 = tpu.iota {dimensions = array<i32: 1>} : vector<8x8xi32>
    %18 = vector.broadcast %16 : i32 to vector<8x8xi32>
    %19 = arith.addi %18, %17 : vector<8x8xi32>
    %20 = arith.cmpi sge, %15, %19 : vector<8x8xi32>
    %21 = vector.broadcast %11 : vector<8x1xi1> to vector<8x8xi1>
    %22 = arith.andi %21, %20 : vector<8x8xi1>
    %cst_13 = arith.constant -1.000000e+09 : f32
    %23 = vector.broadcast %cst_13 : f32 to vector<8x8xf32>
    %24 = arith.select %22, %7, %23 : vector<8x8xi1>, vector<8x8xf32>
    %c0_14 = arith.constant 0 : index
    %c0_15 = arith.constant 0 : index
    %25 = vector.load %arg9[%c0_14, %c0_15] : memref<8x1xf32, #tpu.memory_space<vmem>>, vector<8x1xf32>
    %cst_16 = arith.constant dense<0xFF800000> : vector<8xf32>
    %26 = vector.multi_reduction <maximumf>, %24, %cst_16 [1] : vector<8x8xf32> to vector<8xf32>
    %27 = vector.shape_cast %26 : vector<8xf32> to vector<8x1xf32>
    %28 = arith.maximumf %25, %27 : vector<8x1xf32>
    %29 = arith.subf %25, %28 : vector<8x1xf32>
    %30 = math.exp %29 : vector<8x1xf32>
    %31 = vector.broadcast %28 : vector<8x1xf32> to vector<8x8xf32>
    %32 = arith.subf %24, %31 : vector<8x8xf32>
    %33 = math.exp %32 : vector<8x8xf32>
    %c0_17 = arith.constant 0 : index
    %c0_18 = arith.constant 0 : index
    %34 = vector.load %arg10[%c0_17, %c0_18] : memref<8x1xf32, #tpu.memory_space<vmem>>, vector<8x1xf32>
    %35 = arith.mulf %30, %34 : vector<8x1xf32>
    %cst_19 = arith.constant dense<0.000000e+00> : vector<8xf32>
    %36 = vector.multi_reduction <add>, %33, %cst_19 [1] : vector<8x8xf32> to vector<8xf32>
    %37 = vector.shape_cast %36 : vector<8xf32> to vector<8x1xf32>
    %38 = arith.addf %35, %37 : vector<8x1xf32>
    %c0_20 = arith.constant 0 : index
    %c0_21 = arith.constant 0 : index
    %39 = vector.load %arg10[%c0_20, %c0_21] : memref<8x1xf32, #tpu.memory_space<vmem>>, vector<8x1xf32>
    tpu.vector_store %arg10[%c0_20, %c0_21], %38 {strides = array<i32>} : memref<8x1xf32, #tpu.memory_space<vmem>>, vector<8x1xf32>,
    %c0_22 = arith.constant 0 : index
    %c0_23 = arith.constant 0 : index
    %40 = vector.load %arg11[%c0_22, %c0_23] : memref<8x8xf32, #tpu.memory_space<vmem>>, vector<8x8xf32>
    %41 = vector.broadcast %30 : vector<8x1xf32> to vector<8x8xf32>
    %42 = arith.mulf %41, %40 : vector<8x8xf32>
    %43 = arith.truncf %33 : vector<8x8xf32> to vector<8x8xbf16>
    %c0_24 = arith.constant 0 : index
    %c0_25 = arith.constant 0 : index
    %c0_26 = arith.constant 0 : index
    %c0_27 = arith.constant 0 : index
    %44 = vector.load %arg6[%c0_24, %c0_25, %c0_26, %c0_27] : memref<1x1x8x8xbf16, #tpu.memory_space<vmem>>, vector<1x1x8x8xbf16>
    %45 = vector.shape_cast %44 : vector<1x1x8x8xbf16> to vector<8x8xbf16>
    %cst_28 = arith.constant dense<0.000000e+00> : vector<8x8xf32>
    %46 = tpu.matmul %43, %45, %cst_28 {dimension_numbers = #tpu.dot_dimension_numbers<[1], [0], [0], [1], [0, 0, 1, 1], [], []>} : vector<8x8xbf16>, vector<8x8xbf16>, vector<8x8xf32> -> vector<8x8xf32>
    %47 = arith.addf %42, %46 : vector<8x8xf32>
    %c0_29 = arith.constant 0 : index
    %c0_30 = arith.constant 0 : index
    %48 = vector.load %arg11[%c0_29, %c0_30] : memref<8x8xf32, #tpu.memory_space<vmem>>, vector<8x8xf32>
    tpu.vector_store %arg11[%c0_29, %c0_30], %47 {strides = array<i32>} : memref<8x8xf32, #tpu.memory_space<vmem>>, vector<8x8xf32>,
    %c0_31 = arith.constant 0 : index
    %c0_32 = arith.constant 0 : index
    %49 = vector.load %arg9[%c0_31, %c0_32] : memref<8x1xf32, #tpu.memory_space<vmem>>, vector<8x1xf32>
    tpu.vector_store %arg9[%c0_31, %c0_32], %28 {strides = array<i32>} : memref<8x1xf32, #tpu.memory_space<vmem>>, vector<8x1xf32>,
    %c0_i32_33 = arith.constant 0 : i32
    %50 = arith.cmpi eq, %arg3, %c0_i32_33 : i32
    %51 = arith.extui %50 : i1 to i32
    %c0_i32_34 = arith.constant 0 : i32
    %52 = arith.cmpi ne, %51, %c0_i32_34 : i32
    scf.if %52 {
      %c0_35 = arith.constant 0 : index
      %c0_36 = arith.constant 0 : index
      %53 = vector.load %arg11[%c0_35, %c0_36] : memref<8x8xf32, #tpu.memory_space<vmem>>, vector<8x8xf32>
      %c0_37 = arith.constant 0 : index
      %c0_38 = arith.constant 0 : index
      %54 = vector.load %arg10[%c0_37, %c0_38] : memref<8x1xf32, #tpu.memory_space<vmem>>, vector<8x1xf32>
      %55 = tpu.reciprocal %54 {approx = true} : vector<8x1xf32> -> vector<8x1xf32>
      %56 = vector.broadcast %55 : vector<8x1xf32> to vector<8x8xf32>
      %57 = arith.mulf %53, %56 : vector<8x8xf32>
      %58 = arith.truncf %57 : vector<8x8xf32> to vector<8x8xbf16>
      %c0_39 = arith.constant 0 : index
      %c0_40 = arith.constant 0 : index
      %c0_41 = arith.constant 0 : index
      %c0_42 = arith.constant 0 : index
      %59 = vector.load %arg8[%c0_39, %c0_40, %c0_41, %c0_42] : memref<1x1x8x8xbf16, #tpu.memory_space<vmem>>, vector<1x1x8x8xbf16>
      %60 = vector.shape_cast %59 : vector<1x1x8x8xbf16> to vector<8x8xbf16>
      %61 = vector.shape_cast %58 : vector<8x8xbf16> to vector<1x1x8x8xbf16>
      tpu.vector_store %arg8[%c0_39, %c0_40, %c0_41, %c0_42], %61 {strides = array<i32>} : memref<1x1x8x8xbf16, #tpu.memory_space<vmem>>, vector<1x1x8x8xbf16>,
    } else {
    }
    return
  }
  func.func @transform_0(%arg0: i32, %arg1: i32, %arg2: i32, %arg3: i32) -> (i32, i32, i32, i32) {
    %c0_i32 = arith.constant 0 : i32
    %c0_i32_0 = arith.constant 0 : i32
    return %arg0, %arg1, %arg2, %c0_i32 : i32, i32, i32, i32
  }
  func.func @transform_1(%arg0: i32, %arg1: i32, %arg2: i32, %arg3: i32) -> (i32, i32, i32, i32) {
    %c0_i32 = arith.constant 0 : i32
    %c0_i32_0 = arith.constant 0 : i32
    return %arg0, %arg1, %arg3, %c0_i32 : i32, i32, i32, i32
  }
  func.func @transform_2(%arg0: i32, %arg1: i32, %arg2: i32, %arg3: i32) -> (i32, i32, i32, i32) {
    %c0_i32 = arith.constant 0 : i32
    %c0_i32_0 = arith.constant 0 : i32
    return %arg0, %arg1, %arg3, %c0_i32 : i32, i32, i32, i32
  }
  func.func @transform_3(%arg0: i32, %arg1: i32, %arg2: i32, %arg3: i32) -> (i32, i32, i32) {
    %c0_i32 = arith.constant 0 : i32
    %c0_i32_0 = arith.constant 0 : i32
    return %arg0, %arg2, %c0_i32 : i32, i32, i32
  }
  func.func @transform_4(%arg0: i32, %arg1: i32, %arg2: i32, %arg3: i32) -> (i32, i32, i32, i32) {
    %c0_i32 = arith.constant 0 : i32
    %c0_i32_0 = arith.constant 0 : i32
    return %arg0, %arg1, %arg2, %c0_i32 : i32, i32, i32, i32
  }
}

module attributes {stable_mosaic.version = 11 : i64} {
  func.func @kernel(%arg0: i32, %arg1: i32, %arg2: i32, %arg3: memref<16x32xbf16, #tpu.memory_space<vmem>>, %arg4: memref<32x32xbf16, #tpu.memory_space<vmem>>, %arg5: memref<1x32xf32, #tpu.memory_space<vmem>>, %arg6: memref<16x32xbf16, #tpu.memory_space<vmem>>, %arg7: memref<1x32xf32, #tpu.memory_space<vmem>>, %arg8: memref<1x32xf32, #tpu.memory_space<vmem>>, %arg9: memref<16x32xbf16, #tpu.memory_space<vmem>>, %arg10: memref<16x32xf32, #tpu.memory_space<vmem>>) attributes {dimension_semantics = [#tpu.dimension_semantics<parallel>, #tpu.dimension_semantics<parallel>, #tpu.dimension_semantics<arbitrary>], iteration_bounds = array<i64: 1, 1, 1>, scalar_prefetch = 0 : i64, scratch_operands = 1 : i64, tpu.core_type = #tpu.core_type<tc>, window_params = [{transform_indices = @transform_0, window_bounds = array<i64: 16, 32>}, {transform_indices = @transform_1, window_bounds = array<i64: 32, 32>}, {transform_indices = @transform_2, window_bounds = array<i64: 1, 32>}, {transform_indices = @transform_3, window_bounds = array<i64: 16, 32>}, {transform_indices = @transform_4, window_bounds = array<i64: 1, 32>}, {transform_indices = @transform_5, window_bounds = array<i64: 1, 32>}, {transform_indices = @transform_6, window_bounds = array<i64: 16, 32>}]} {
    %c0_i32 = arith.constant 0 : i32
    %0 = arith.cmpi eq, %arg2, %c0_i32 : i32
    %1 = arith.extui %0 : i1 to i32
    %c0_i32_0 = arith.constant 0 : i32
    %2 = arith.cmpi ne, %1, %c0_i32_0 : i32
    scf.if %2 {
      %cst_10 = arith.constant 0.000000e+00 : f32
      %12 = vector.broadcast %cst_10 : f32 to vector<16x32xf32>
      %c0_11 = arith.constant 0 : index
      %c0_12 = arith.constant 0 : index
      %13 = vector.load %arg10[%c0_11, %c0_12] : memref<16x32xf32, #tpu.memory_space<vmem>>, vector<16x32xf32>
      tpu.vector_store %arg10[%c0_11, %c0_12], %12 {strides = array<i32>} : memref<16x32xf32, #tpu.memory_space<vmem>>, vector<16x32xf32>,
    } else {
    }
    %c0 = arith.constant 0 : index
    %c0_1 = arith.constant 0 : index
    %3 = vector.load %arg10[%c0, %c0_1] : memref<16x32xf32, #tpu.memory_space<vmem>>, vector<16x32xf32>
    %c0_2 = arith.constant 0 : index
    %c0_3 = arith.constant 0 : index
    %4 = vector.load %arg3[%c0_2, %c0_3] : memref<16x32xbf16, #tpu.memory_space<vmem>>, vector<16x32xbf16>
    %c0_4 = arith.constant 0 : index
    %c0_5 = arith.constant 0 : index
    %5 = vector.load %arg4[%c0_4, %c0_5] : memref<32x32xbf16, #tpu.memory_space<vmem>>, vector<32x32xbf16>
    %cst = arith.constant dense<0.000000e+00> : vector<16x32xf32>
    %6 = tpu.matmul %4, %5, %cst {dimension_numbers = #tpu.dot_dimension_numbers<[1], [0], [0], [1], [0, 0, 1, 1], [], []>} : vector<16x32xbf16>, vector<32x32xbf16>, vector<16x32xf32> -> vector<16x32xf32>
    %7 = arith.addf %3, %6 : vector<16x32xf32>
    %c0_6 = arith.constant 0 : index
    %c0_7 = arith.constant 0 : index
    %8 = vector.load %arg10[%c0_6, %c0_7] : memref<16x32xf32, #tpu.memory_space<vmem>>, vector<16x32xf32>
    tpu.vector_store %arg10[%c0_6, %c0_7], %7 {strides = array<i32>} : memref<16x32xf32, #tpu.memory_space<vmem>>, vector<16x32xf32>,
    %c0_i32_8 = arith.constant 0 : i32
    %9 = arith.cmpi eq, %arg2, %c0_i32_8 : i32
    %10 = arith.extui %9 : i1 to i32
    %c0_i32_9 = arith.constant 0 : i32
    %11 = arith.cmpi ne, %10, %c0_i32_9 : i32
    scf.if %11 {
      %c0_10 = arith.constant 0 : index
      %c0_11 = arith.constant 0 : index
      %12 = vector.load %arg10[%c0_10, %c0_11] : memref<16x32xf32, #tpu.memory_space<vmem>>, vector<16x32xf32>
      %c0_12 = arith.constant 0 : index
      %c0_13 = arith.constant 0 : index
      %13 = vector.load %arg5[%c0_12, %c0_13] : memref<1x32xf32, #tpu.memory_space<vmem>>, vector<1x32xf32>
      %14 = vector.broadcast %13 : vector<1x32xf32> to vector<16x32xf32>
      %15 = arith.addf %12, %14 : vector<16x32xf32>
      %c0_14 = arith.constant 0 : index
      %c0_15 = arith.constant 0 : index
      %16 = vector.load %arg6[%c0_14, %c0_15] : memref<16x32xbf16, #tpu.memory_space<vmem>>, vector<16x32xbf16>
      %17 = arith.extf %16 : vector<16x32xbf16> to vector<16x32xf32>
      %18 = arith.addf %15, %17 : vector<16x32xf32>
      %cst_16 = arith.constant dense<0.000000e+00> : vector<16xf32>
      %19 = vector.multi_reduction <add>, %18, %cst_16 [1] : vector<16x32xf32> to vector<16xf32>
      %20 = vector.shape_cast %19 : vector<16xf32> to vector<16x1xf32>
      %cst_17 = arith.constant 3.200000e+01 : f32
      %21 = vector.broadcast %cst_17 : f32 to vector<16x1xf32>
      %22 = arith.divf %20, %21 : vector<16x1xf32>
      %23 = vector.broadcast %22 : vector<16x1xf32> to vector<16x32xf32>
      %24 = arith.subf %18, %23 : vector<16x32xf32>
      %25 = arith.mulf %24, %24 : vector<16x32xf32>
      %cst_18 = arith.constant dense<0.000000e+00> : vector<16xf32>
      %26 = vector.multi_reduction <add>, %25, %cst_18 [1] : vector<16x32xf32> to vector<16xf32>
      %27 = vector.shape_cast %26 : vector<16xf32> to vector<16x1xf32>
      %cst_19 = arith.constant 3.200000e+01 : f32
      %28 = vector.broadcast %cst_19 : f32 to vector<16x1xf32>
      %29 = arith.divf %27, %28 : vector<16x1xf32>
      %30 = vector.broadcast %22 : vector<16x1xf32> to vector<16x32xf32>
      %31 = arith.subf %18, %30 : vector<16x32xf32>
      %cst_20 = arith.constant 9.99999974E-6 : f32
      %32 = vector.broadcast %cst_20 : f32 to vector<16x1xf32>
      %33 = arith.addf %29, %32 : vector<16x1xf32>
      %34 = math.rsqrt %33 : vector<16x1xf32>
      %35 = vector.broadcast %34 : vector<16x1xf32> to vector<16x32xf32>
      %36 = arith.mulf %31, %35 : vector<16x32xf32>
      %c0_21 = arith.constant 0 : index
      %c0_22 = arith.constant 0 : index
      %37 = vector.load %arg7[%c0_21, %c0_22] : memref<1x32xf32, #tpu.memory_space<vmem>>, vector<1x32xf32>
      %38 = vector.broadcast %37 : vector<1x32xf32> to vector<16x32xf32>
      %39 = arith.mulf %36, %38 : vector<16x32xf32>
      %c0_23 = arith.constant 0 : index
      %c0_24 = arith.constant 0 : index
      %40 = vector.load %arg8[%c0_23, %c0_24] : memref<1x32xf32, #tpu.memory_space<vmem>>, vector<1x32xf32>
      %41 = vector.broadcast %40 : vector<1x32xf32> to vector<16x32xf32>
      %42 = arith.addf %39, %41 : vector<16x32xf32>
      %43 = arith.truncf %42 : vector<16x32xf32> to vector<16x32xbf16>
      %c0_25 = arith.constant 0 : index
      %c0_26 = arith.constant 0 : index
      %44 = vector.load %arg9[%c0_25, %c0_26] : memref<16x32xbf16, #tpu.memory_space<vmem>>, vector<16x32xbf16>
      tpu.vector_store %arg9[%c0_25, %c0_26], %43 {strides = array<i32>} : memref<16x32xbf16, #tpu.memory_space<vmem>>, vector<16x32xbf16>,
    } else {
    }
    return
  }
  func.func @transform_0(%arg0: i32, %arg1: i32, %arg2: i32) -> (i32, i32) {
    %c0_i32 = arith.constant 0 : i32
    return %arg0, %arg2 : i32, i32
  }
  func.func @transform_1(%arg0: i32, %arg1: i32, %arg2: i32) -> (i32, i32) {
    %c0_i32 = arith.constant 0 : i32
    return %arg2, %arg1 : i32, i32
  }
  func.func @transform_2(%arg0: i32, %arg1: i32, %arg2: i32) -> (i32, i32) {
    %c0_i32 = arith.constant 0 : i32
    %c0_i32_0 = arith.constant 0 : i32
    return %c0_i32, %arg1 : i32, i32
  }
  func.func @transform_3(%arg0: i32, %arg1: i32, %arg2: i32) -> (i32, i32) {
    %c0_i32 = arith.constant 0 : i32
    return %arg0, %arg1 : i32, i32
  }
  func.func @transform_4(%arg0: i32, %arg1: i32, %arg2: i32) -> (i32, i32) {
    %c0_i32 = arith.constant 0 : i32
    %c0_i32_0 = arith.constant 0 : i32
    return %c0_i32, %arg1 : i32, i32
  }
  func.func @transform_5(%arg0: i32, %arg1: i32, %arg2: i32) -> (i32, i32) {
    %c0_i32 = arith.constant 0 : i32
    %c0_i32_0 = arith.constant 0 : i32
    return %c0_i32, %arg1 : i32, i32
  }
  func.func @transform_6(%arg0: i32, %arg1: i32, %arg2: i32) -> (i32, i32) {
    %c0_i32 = arith.constant 0 : i32
    return %arg0, %arg1 : i32, i32
  }
}

module attributes {stable_mosaic.version = 11 : i64} {
  func.func @kernel(%arg0: i32, %arg1: i32, %arg2: i32, %arg3: memref<16x32xbf16, #tpu.memory_space<vmem>>, %arg4: memref<32x32xbf16, #tpu.memory_space<vmem>>, %arg5: memref<1x32xf32, #tpu.memory_space<vmem>>, %arg6: memref<16x32xbf16, #tpu.memory_space<vmem>>, %arg7: memref<16x32xf32, #tpu.memory_space<vmem>>) attributes {dimension_semantics = [#tpu.dimension_semantics<parallel>, #tpu.dimension_semantics<parallel>, #tpu.dimension_semantics<arbitrary>], iteration_bounds = array<i64: 1, 1, 1>, scalar_prefetch = 0 : i64, scratch_operands = 1 : i64, tpu.core_type = #tpu.core_type<tc>, window_params = [{transform_indices = @transform_0, window_bounds = array<i64: 16, 32>}, {transform_indices = @transform_1, window_bounds = array<i64: 32, 32>}, {transform_indices = @transform_2, window_bounds = array<i64: 1, 32>}, {transform_indices = @transform_3, window_bounds = array<i64: 16, 32>}]} {
    %c0_i32 = arith.constant 0 : i32
    %0 = arith.cmpi eq, %arg2, %c0_i32 : i32
    %1 = arith.extui %0 : i1 to i32
    %c0_i32_0 = arith.constant 0 : i32
    %2 = arith.cmpi ne, %1, %c0_i32_0 : i32
    scf.if %2 {
      %cst_10 = arith.constant 0.000000e+00 : f32
      %12 = vector.broadcast %cst_10 : f32 to vector<16x32xf32>
      %c0_11 = arith.constant 0 : index
      %c0_12 = arith.constant 0 : index
      %13 = vector.load %arg7[%c0_11, %c0_12] : memref<16x32xf32, #tpu.memory_space<vmem>>, vector<16x32xf32>
      tpu.vector_store %arg7[%c0_11, %c0_12], %12 {strides = array<i32>} : memref<16x32xf32, #tpu.memory_space<vmem>>, vector<16x32xf32>,
    } else {
    }
    %c0 = arith.constant 0 : index
    %c0_1 = arith.constant 0 : index
    %3 = vector.load %arg7[%c0, %c0_1] : memref<16x32xf32, #tpu.memory_space<vmem>>, vector<16x32xf32>
    %c0_2 = arith.constant 0 : index
    %c0_3 = arith.constant 0 : index
    %4 = vector.load %arg3[%c0_2, %c0_3] : memref<16x32xbf16, #tpu.memory_space<vmem>>, vector<16x32xbf16>
    %c0_4 = arith.constant 0 : index
    %c0_5 = arith.constant 0 : index
    %5 = vector.load %arg4[%c0_4, %c0_5] : memref<32x32xbf16, #tpu.memory_space<vmem>>, vector<32x32xbf16>
    %cst = arith.constant dense<0.000000e+00> : vector<16x32xf32>
    %6 = tpu.matmul %4, %5, %cst {dimension_numbers = #tpu.dot_dimension_numbers<[1], [0], [0], [1], [0, 0, 1, 1], [], []>} : vector<16x32xbf16>, vector<32x32xbf16>, vector<16x32xf32> -> vector<16x32xf32>
    %7 = arith.addf %3, %6 : vector<16x32xf32>
    %c0_6 = arith.constant 0 : index
    %c0_7 = arith.constant 0 : index
    %8 = vector.load %arg7[%c0_6, %c0_7] : memref<16x32xf32, #tpu.memory_space<vmem>>, vector<16x32xf32>
    tpu.vector_store %arg7[%c0_6, %c0_7], %7 {strides = array<i32>} : memref<16x32xf32, #tpu.memory_space<vmem>>, vector<16x32xf32>,
    %c0_i32_8 = arith.constant 0 : i32
    %9 = arith.cmpi eq, %arg2, %c0_i32_8 : i32
    %10 = arith.extui %9 : i1 to i32
    %c0_i32_9 = arith.constant 0 : i32
    %11 = arith.cmpi ne, %10, %c0_i32_9 : i32
    scf.if %11 {
      %c0_10 = arith.constant 0 : index
      %c0_11 = arith.constant 0 : index
      %12 = vector.load %arg7[%c0_10, %c0_11] : memref<16x32xf32, #tpu.memory_space<vmem>>, vector<16x32xf32>
      %c0_12 = arith.constant 0 : index
      %c0_13 = arith.constant 0 : index
      %13 = vector.load %arg5[%c0_12, %c0_13] : memref<1x32xf32, #tpu.memory_space<vmem>>, vector<1x32xf32>
      %14 = vector.broadcast %13 : vector<1x32xf32> to vector<16x32xf32>
      %15 = arith.addf %12, %14 : vector<16x32xf32>
      %16 = arith.truncf %15 : vector<16x32xf32> to vector<16x32xbf16>
      %c0_14 = arith.constant 0 : index
      %c0_15 = arith.constant 0 : index
      %17 = vector.load %arg6[%c0_14, %c0_15] : memref<16x32xbf16, #tpu.memory_space<vmem>>, vector<16x32xbf16>
      tpu.vector_store %arg6[%c0_14, %c0_15], %16 {strides = array<i32>} : memref<16x32xbf16, #tpu.memory_space<vmem>>, vector<16x32xbf16>,
    } else {
    }
    return
  }
  func.func @transform_0(%arg0: i32, %arg1: i32, %arg2: i32) -> (i32, i32) {
    %c0_i32 = arith.constant 0 : i32
    return %arg0, %arg2 : i32, i32
  }
  func.func @transform_1(%arg0: i32, %arg1: i32, %arg2: i32) -> (i32, i32) {
    %c0_i32 = arith.constant 0 : i32
    return %arg2, %arg1 : i32, i32
  }
  func.func @transform_2(%arg0: i32, %arg1: i32, %arg2: i32) -> (i32, i32) {
    %c0_i32 = arith.constant 0 : i32
    %c0_i32_0 = arith.constant 0 : i32
    return %c0_i32, %arg1 : i32, i32
  }
  func.func @transform_3(%arg0: i32, %arg1: i32, %arg2: i32) -> (i32, i32) {
    %c0_i32 = arith.constant 0 : i32
    return %arg0, %arg1 : i32, i32
  }
}

module attributes {stable_mosaic.version = 11 : i64} {
  func.func @kernel(%arg0: i32, %arg1: i32, %arg2: i32, %arg3: memref<16x32xbf16, #tpu.memory_space<vmem>>, %arg4: memref<32x64xbf16, #tpu.memory_space<vmem>>, %arg5: memref<1x64xf32, #tpu.memory_space<vmem>>, %arg6: memref<16x64xbf16, #tpu.memory_space<vmem>>, %arg7: memref<16x64xf32, #tpu.memory_space<vmem>>) attributes {dimension_semantics = [#tpu.dimension_semantics<parallel>, #tpu.dimension_semantics<parallel>, #tpu.dimension_semantics<arbitrary>], iteration_bounds = array<i64: 1, 1, 1>, scalar_prefetch = 0 : i64, scratch_operands = 1 : i64, tpu.core_type = #tpu.core_type<tc>, window_params = [{transform_indices = @transform_0, window_bounds = array<i64: 16, 32>}, {transform_indices = @transform_1, window_bounds = array<i64: 32, 64>}, {transform_indices = @transform_2, window_bounds = array<i64: 1, 64>}, {transform_indices = @transform_3, window_bounds = array<i64: 16, 64>}]} {
    %c0_i32 = arith.constant 0 : i32
    %0 = arith.cmpi eq, %arg2, %c0_i32 : i32
    %1 = arith.extui %0 : i1 to i32
    %c0_i32_0 = arith.constant 0 : i32
    %2 = arith.cmpi ne, %1, %c0_i32_0 : i32
    scf.if %2 {
      %cst_10 = arith.constant 0.000000e+00 : f32
      %12 = vector.broadcast %cst_10 : f32 to vector<16x64xf32>
      %c0_11 = arith.constant 0 : index
      %c0_12 = arith.constant 0 : index
      %13 = vector.load %arg7[%c0_11, %c0_12] : memref<16x64xf32, #tpu.memory_space<vmem>>, vector<16x64xf32>
      tpu.vector_store %arg7[%c0_11, %c0_12], %12 {strides = array<i32>} : memref<16x64xf32, #tpu.memory_space<vmem>>, vector<16x64xf32>,
    } else {
    }
    %c0 = arith.constant 0 : index
    %c0_1 = arith.constant 0 : index
    %3 = vector.load %arg7[%c0, %c0_1] : memref<16x64xf32, #tpu.memory_space<vmem>>, vector<16x64xf32>
    %c0_2 = arith.constant 0 : index
    %c0_3 = arith.constant 0 : index
    %4 = vector.load %arg3[%c0_2, %c0_3] : memref<16x32xbf16, #tpu.memory_space<vmem>>, vector<16x32xbf16>
    %c0_4 = arith.constant 0 : index
    %c0_5 = arith.constant 0 : index
    %5 = vector.load %arg4[%c0_4, %c0_5] : memref<32x64xbf16, #tpu.memory_space<vmem>>, vector<32x64xbf16>
    %cst = arith.constant dense<0.000000e+00> : vector<16x64xf32>
    %6 = tpu.matmul %4, %5, %cst {dimension_numbers = #tpu.dot_dimension_numbers<[1], [0], [0], [1], [0, 0, 1, 1], [], []>} : vector<16x32xbf16>, vector<32x64xbf16>, vector<16x64xf32> -> vector<16x64xf32>
    %7 = arith.addf %3, %6 : vector<16x64xf32>
    %c0_6 = arith.constant 0 : index
    %c0_7 = arith.constant 0 : index
    %8 = vector.load %arg7[%c0_6, %c0_7] : memref<16x64xf32, #tpu.memory_space<vmem>>, vector<16x64xf32>
    tpu.vector_store %arg7[%c0_6, %c0_7], %7 {strides = array<i32>} : memref<16x64xf32, #tpu.memory_space<vmem>>, vector<16x64xf32>,
    %c0_i32_8 = arith.constant 0 : i32
    %9 = arith.cmpi eq, %arg2, %c0_i32_8 : i32
    %10 = arith.extui %9 : i1 to i32
    %c0_i32_9 = arith.constant 0 : i32
    %11 = arith.cmpi ne, %10, %c0_i32_9 : i32
    scf.if %11 {
      %c0_10 = arith.constant 0 : index
      %c0_11 = arith.constant 0 : index
      %12 = vector.load %arg7[%c0_10, %c0_11] : memref<16x64xf32, #tpu.memory_space<vmem>>, vector<16x64xf32>
      %c0_12 = arith.constant 0 : index
      %c0_13 = arith.constant 0 : index
      %13 = vector.load %arg5[%c0_12, %c0_13] : memref<1x64xf32, #tpu.memory_space<vmem>>, vector<1x64xf32>
      %14 = vector.broadcast %13 : vector<1x64xf32> to vector<16x64xf32>
      %15 = arith.addf %12, %14 : vector<16x64xf32>
      %cst_14 = arith.constant 0.000000e+00 : f32
      %16 = vector.broadcast %cst_14 : f32 to vector<16x64xf32>
      %17 = arith.maximumf %15, %16 : vector<16x64xf32>
      %18 = arith.truncf %17 : vector<16x64xf32> to vector<16x64xbf16>
      %c0_15 = arith.constant 0 : index
      %c0_16 = arith.constant 0 : index
      %19 = vector.load %arg6[%c0_15, %c0_16] : memref<16x64xbf16, #tpu.memory_space<vmem>>, vector<16x64xbf16>
      tpu.vector_store %arg6[%c0_15, %c0_16], %18 {strides = array<i32>} : memref<16x64xbf16, #tpu.memory_space<vmem>>, vector<16x64xbf16>,
    } else {
    }
    return
  }
  func.func @transform_0(%arg0: i32, %arg1: i32, %arg2: i32) -> (i32, i32) {
    %c0_i32 = arith.constant 0 : i32
    return %arg0, %arg2 : i32, i32
  }
  func.func @transform_1(%arg0: i32, %arg1: i32, %arg2: i32) -> (i32, i32) {
    %c0_i32 = arith.constant 0 : i32
    return %arg2, %arg1 : i32, i32
  }
  func.func @transform_2(%arg0: i32, %arg1: i32, %arg2: i32) -> (i32, i32) {
    %c0_i32 = arith.constant 0 : i32
    %c0_i32_0 = arith.constant 0 : i32
    return %c0_i32, %arg1 : i32, i32
  }
  func.func @transform_3(%arg0: i32, %arg1: i32, %arg2: i32) -> (i32, i32) {
    %c0_i32 = arith.constant 0 : i32
    return %arg0, %arg1 : i32, i32
  }
}

module attributes {stable_mosaic.version = 11 : i64} {
  func.func @kernel(%arg0: i32, %arg1: i32, %arg2: i32, %arg3: i32, %arg4: memref<1x1x8x8xbf16, #tpu.memory_space<vmem>>, %arg5: memref<1x1x8x8xbf16, #tpu.memory_space<vmem>>, %arg6: memref<1x1x8x8xbf16, #tpu.memory_space<vmem>>, %arg7: memref<1x1x8xf32, #tpu.memory_space<vmem>>, %arg8: memref<1x1x8x8xbf16, #tpu.memory_space<vmem>>, %arg9: memref<8x1xf32, #tpu.memory_space<vmem>>, %arg10: memref<8x1xf32, #tpu.memory_space<vmem>>, %arg11: memref<8x8xf32, #tpu.memory_space<vmem>>) attributes {dimension_semantics = [#tpu.dimension_semantics<parallel>, #tpu.dimension_semantics<parallel>, #tpu.dimension_semantics<parallel>, #tpu.dimension_semantics<arbitrary>], iteration_bounds = array<i64: 2, 4, 1, 1>, scalar_prefetch = 0 : i64, scratch_operands = 3 : i64, tpu.core_type = #tpu.core_type<tc>, window_params = [{transform_indices = @transform_0, window_bounds = array<i64: 1, 1, 8, 8>}, {transform_indices = @transform_1, window_bounds = array<i64: 1, 1, 8, 8>}, {transform_indices = @transform_2, window_bounds = array<i64: 1, 1, 8, 8>}, {transform_indices = @transform_3, window_bounds = array<i64: 1, 1, 8>}, {transform_indices = @transform_4, window_bounds = array<i64: 1, 1, 8, 8>}]} {
    %c0_i32 = arith.constant 0 : i32
    %0 = arith.cmpi eq, %arg3, %c0_i32 : i32
    %1 = arith.extui %0 : i1 to i32
    %c0_i32_0 = arith.constant 0 : i32
    %2 = arith.cmpi ne, %1, %c0_i32_0 : i32
    scf.if %2 {
      %cst_34 = arith.constant 0xFF800000 : f32
      %44 = vector.broadcast %cst_34 : f32 to vector<8x1xf32>
      %c0_35 = arith.constant 0 : index
      %c0_36 = arith.constant 0 : index
      %45 = vector.load %arg9[%c0_35, %c0_36] : memref<8x1xf32, #tpu.memory_space<vmem>>, vector<8x1xf32>
      tpu.vector_store %arg9[%c0_35, %c0_36], %44 {strides = array<i32>} : memref<8x1xf32, #tpu.memory_space<vmem>>, vector<8x1xf32>,
      %cst_37 = arith.constant 0.000000e+00 : f32
      %46 = vector.broadcast %cst_37 : f32 to vector<8x1xf32>
      %c0_38 = arith.constant 0 : index
      %c0_39 = arith.constant 0 : index
      %47 = vector.load %arg10[%c0_38, %c0_39] : memref<8x1xf32, #tpu.memory_space<vmem>>, vector<8x1xf32>
      tpu.vector_store %arg10[%c0_38, %c0_39], %46 {strides = array<i32>} : memref<8x1xf32, #tpu.memory_space<vmem>>, vector<8x1xf32>,
      %cst_40 = arith.constant 0.000000e+00 : f32
      %48 = vector.broadcast %cst_40 : f32 to vector<8x8xf32>
      %c0_41 = arith.constant 0 : index
      %c0_42 = arith.constant 0 : index
      %49 = vector.load %arg11[%c0_41, %c0_42] : memref<8x8xf32, #tpu.memory_space<vmem>>, vector<8x8xf32>
      tpu.vector_store %arg11[%c0_41, %c0_42], %48 {strides = array<i32>} : memref<8x8xf32, #tpu.memory_space<vmem>>, vector<8x8xf32>,
    } else {
    }
    %c0 = arith.constant 0 : index
    %c0_1 = arith.constant 0 : index
    %c0_2 = arith.constant 0 : index
    %c0_3 = arith.constant 0 : index
    %3 = vector.load %arg4[%c0, %c0_1, %c0_2, %c0_3] : memref<1x1x8x8xbf16, #tpu.memory_space<vmem>>, vector<1x1x8x8xbf16>
    %4 = vector.shape_cast %3 : vector<1x1x8x8xbf16> to vector<8x8xbf16>
    %c0_4 = arith.constant 0 : index
    %c0_5 = arith.constant 0 : index
    %c0_6 = arith.constant 0 : index
    %c0_7 = arith.constant 0 : index
    %5 = vector.load %arg5[%c0_4, %c0_5, %c0_6, %c0_7] : memref<1x1x8x8xbf16, #tpu.memory_space<vmem>>, vector<1x1x8x8xbf16>
    %6 = vector.shape_cast %5 : vector<1x1x8x8xbf16> to vector<8x8xbf16>
    %cst = arith.constant dense<0.000000e+00> : vector<8x8xf32>
    %7 = tpu.matmul %4, %6, %cst {dimension_numbers = #tpu.dot_dimension_numbers<[1], [1], [0], [0], [0, 0, 1, 0], [], []>} : vector<8x8xbf16>, vector<8x8xbf16>, vector<8x8xf32> -> vector<8x8xf32>
    %c0_8 = arith.constant 0 : index
    %c0_9 = arith.constant 0 : index
    %c0_10 = arith.constant 0 : index
    %8 = vector.load %arg7[%c0_8, %c0_9, %c0_10] : memref<1x1x8xf32, #tpu.memory_space<vmem>>, vector<1x1x8xf32>
    %9 = vector.shape_cast %8 : vector<1x1x8xf32> to vector<1x8xf32>
    %cst_11 = arith.constant 0.000000e+00 : f32
    %10 = vector.broadcast %cst_11 : f32 to vector<1x8xf32>
    %11 = arith.cmpf ogt, %9, %10 : vector<1x8xf32>
    %cst_12 = arith.constant -1.000000e+09 : f32
    %12 = vector.shape_cast %11 : vector<1x8xi1> to vector<1x8xi1>
    %13 = vector.broadcast %12 : vector<1x8xi1> to vector<8x8xi1>
    %14 = vector.broadcast %cst_12 : f32 to vector<8x8xf32>
    %15 = arith.select %13, %7, %14 : vector<8x8xi1>, vector<8x8xf32>
    %c0_13 = arith.constant 0 : index
    %c0_14 = arith.constant 0 : index
    %16 = vector.load %arg9[%c0_13, %c0_14] : memref<8x1xf32, #tpu.memory_space<vmem>>, vector<8x1xf32>
    %cst_15 = arith.constant dense<0xFF800000> : vector<8xf32>
    %17 = vector.multi_reduction <maximumf>, %15, %cst_15 [1] : vector<8x8xf32> to vector<8xf32>
    %18 = vector.shape_cast %17 : vector<8xf32> to vector<8x1xf32>
    %19 = arith.maximumf %16, %18 : vector<8x1xf32>
    %20 = arith.subf %16, %19 : vector<8x1xf32>
    %21 = math.exp %20 : vector<8x1xf32>
    %22 = vector.broadcast %19 : vector<8x1xf32> to vector<8x8xf32>
    %23 = arith.subf %15, %22 : vector<8x8xf32>
    %24 = math.exp %23 : vector<8x8xf32>
    %c0_16 = arith.constant 0 : index
    %c0_17 = arith.constant 0 : index
    %25 = vector.load %arg10[%c0_16, %c0_17] : memref<8x1xf32, #tpu.memory_space<vmem>>, vector<8x1xf32>
    %26 = arith.mulf %21, %25 : vector<8x1xf32>
    %cst_18 = arith.constant dense<0.000000e+00> : vector<8xf32>
    %27 = vector.multi_reduction <add>, %24, %cst_18 [1] : vector<8x8xf32> to vector<8xf32>
    %28 = vector.shape_cast %27 : vector<8xf32> to vector<8x1xf32>
    %29 = arith.addf %26, %28 : vector<8x1xf32>
    %c0_19 = arith.constant 0 : index
    %c0_20 = arith.constant 0 : index
    %30 = vector.load %arg10[%c0_19, %c0_20] : memref<8x1xf32, #tpu.memory_space<vmem>>, vector<8x1xf32>
    tpu.vector_store %arg10[%c0_19, %c0_20], %29 {strides = array<i32>} : memref<8x1xf32, #tpu.memory_space<vmem>>, vector<8x1xf32>,
    %c0_21 = arith.constant 0 : index
    %c0_22 = arith.constant 0 : index
    %31 = vector.load %arg11[%c0_21, %c0_22] : memref<8x8xf32, #tpu.memory_space<vmem>>, vector<8x8xf32>
    %32 = vector.broadcast %21 : vector<8x1xf32> to vector<8x8xf32>
    %33 = arith.mulf %32, %31 : vector<8x8xf32>
    %34 = arith.truncf %24 : vector<8x8xf32> to vector<8x8xbf16>
    %c0_23 = arith.constant 0 : index
    %c0_24 = arith.constant 0 : index
    %c0_25 = arith.constant 0 : index
    %c0_26 = arith.constant 0 : index
    %35 = vector.load %arg6[%c0_23, %c0_24, %c0_25, %c0_26] : memref<1x1x8x8xbf16, #tpu.memory_space<vmem>>, vector<1x1x8x8xbf16>
    %36 = vector.shape_cast %35 : vector<1x1x8x8xbf16> to vector<8x8xbf16>
    %cst_27 = arith.constant dense<0.000000e+00> : vector<8x8xf32>
    %37 = tpu.matmul %34, %36, %cst_27 {dimension_numbers = #tpu.dot_dimension_numbers<[1], [0], [0], [1], [0, 0, 1, 1], [], []>} : vector<8x8xbf16>, vector<8x8xbf16>, vector<8x8xf32> -> vector<8x8xf32>
    %38 = arith.addf %33, %37 : vector<8x8xf32>
    %c0_28 = arith.constant 0 : index
    %c0_29 = arith.constant 0 : index
    %39 = vector.load %arg11[%c0_28, %c0_29] : memref<8x8xf32, #tpu.memory_space<vmem>>, vector<8x8xf32>
    tpu.vector_store %arg11[%c0_28, %c0_29], %38 {strides = array<i32>} : memref<8x8xf32, #tpu.memory_space<vmem>>, vector<8x8xf32>,
    %c0_30 = arith.constant 0 : index
    %c0_31 = arith.constant 0 : index
    %40 = vector.load %arg9[%c0_30, %c0_31] : memref<8x1xf32, #tpu.memory_space<vmem>>, vector<8x1xf32>
    tpu.vector_store %arg9[%c0_30, %c0_31], %19 {strides = array<i32>} : memref<8x1xf32, #tpu.memory_space<vmem>>, vector<8x1xf32>,
    %c0_i32_32 = arith.constant 0 : i32
    %41 = arith.cmpi eq, %arg3, %c0_i32_32 : i32
    %42 = arith.extui %41 : i1 to i32
    %c0_i32_33 = arith.constant 0 : i32
    %43 = arith.cmpi ne, %42, %c0_i32_33 : i32
    scf.if %43 {
      %c0_34 = arith.constant 0 : index
      %c0_35 = arith.constant 0 : index
      %44 = vector.load %arg11[%c0_34, %c0_35] : memref<8x8xf32, #tpu.memory_space<vmem>>, vector<8x8xf32>
      %c0_36 = arith.constant 0 : index
      %c0_37 = arith.constant 0 : index
      %45 = vector.load %arg10[%c0_36, %c0_37] : memref<8x1xf32, #tpu.memory_space<vmem>>, vector<8x1xf32>
      %46 = tpu.reciprocal %45 {approx = true} : vector<8x1xf32> -> vector<8x1xf32>
      %47 = vector.broadcast %46 : vector<8x1xf32> to vector<8x8xf32>
      %48 = arith.mulf %44, %47 : vector<8x8xf32>
      %49 = arith.truncf %48 : vector<8x8xf32> to vector<8x8xbf16>
      %c0_38 = arith.constant 0 : index
      %c0_39 = arith.constant 0 : index
      %c0_40 = arith.constant 0 : index
      %c0_41 = arith.constant 0 : index
      %50 = vector.load %arg8[%c0_38, %c0_39, %c0_40, %c0_41] : memref<1x1x8x8xbf16, #tpu.memory_space<vmem>>, vector<1x1x8x8xbf16>
      %51 = vector.shape_cast %50 : vector<1x1x8x8xbf16> to vector<8x8xbf16>
      %52 = vector.shape_cast %49 : vector<8x8xbf16> to vector<1x1x8x8xbf16>
      tpu.vector_store %arg8[%c0_38, %c0_39, %c0_40, %c0_41], %52 {strides = array<i32>} : memref<1x1x8x8xbf16, #tpu.memory_space<vmem>>, vector<1x1x8x8xbf16>,
    } else {
    }
    return
  }
  func.func @transform_0(%arg0: i32, %arg1: i32, %arg2: i32, %arg3: i32) -> (i32, i32, i32, i32) {
    %c0_i32 = arith.constant 0 : i32
    %c0_i32_0 = arith.constant 0 : i32
    return %arg0, %arg1, %arg2, %c0_i32 : i32, i32, i32, i32
  }
  func.func @transform_1(%arg0: i32, %arg1: i32, %arg2: i32, %arg3: i32) -> (i32, i32, i32, i32) {
    %c0_i32 = arith.constant 0 : i32
    %c0_i32_0 = arith.constant 0 : i32
    return %arg0, %arg1, %arg3, %c0_i32 : i32, i32, i32, i32
  }
  func.func @transform_2(%arg0: i32, %arg1: i32, %arg2: i32, %arg3: i32) -> (i32, i32, i32, i32) {
    %c0_i32 = arith.constant 0 : i32
    %c0_i32_0 = arith.constant 0 : i32
    return %arg0, %arg1, %arg3, %c0_i32 : i32, i32, i32, i32
  }
  func.func @transform_3(%arg0: i32, %arg1: i32, %arg2: i32, %arg3: i32) -> (i32, i32, i32) {
    %c0_i32 = arith.constant 0 : i32
    %c0_i32_0 = arith.constant 0 : i32
    return %arg0, %c0_i32, %arg3 : i32, i32, i32
  }
  func.func @transform_4(%arg0: i32, %arg1: i32, %arg2: i32, %arg3: i32) -> (i32, i32, i32, i32) {
    %c0_i32 = arith.constant 0 : i32
    %c0_i32_0 = arith.constant 0 : i32
    return %arg0, %arg1, %arg2, %c0_i32 : i32, i32, i32, i32
  }
}

module attributes {stable_mosaic.version = 11 : i64} {
  func.func @kernel(%arg0: i32, %arg1: i32, %arg2: i32, %arg3: memref<16x64xbf16, #tpu.memory_space<vmem>>, %arg4: memref<64x32xbf16, #tpu.memory_space<vmem>>, %arg5: memref<1x32xf32, #tpu.memory_space<vmem>>, %arg6: memref<16x32xbf16, #tpu.memory_space<vmem>>, %arg7: memref<1x32xf32, #tpu.memory_space<vmem>>, %arg8: memref<1x32xf32, #tpu.memory_space<vmem>>, %arg9: memref<16x32xbf16, #tpu.memory_space<vmem>>, %arg10: memref<16x32xf32, #tpu.memory_space<vmem>>) attributes {dimension_semantics = [#tpu.dimension_semantics<parallel>, #tpu.dimension_semantics<parallel>, #tpu.dimension_semantics<arbitrary>], iteration_bounds = array<i64: 1, 1, 1>, scalar_prefetch = 0 : i64, scratch_operands = 1 : i64, tpu.core_type = #tpu.core_type<tc>, window_params = [{transform_indices = @transform_0, window_bounds = array<i64: 16, 64>}, {transform_indices = @transform_1, window_bounds = array<i64: 64, 32>}, {transform_indices = @transform_2, window_bounds = array<i64: 1, 32>}, {transform_indices = @transform_3, window_bounds = array<i64: 16, 32>}, {transform_indices = @transform_4, window_bounds = array<i64: 1, 32>}, {transform_indices = @transform_5, window_bounds = array<i64: 1, 32>}, {transform_indices = @transform_6, window_bounds = array<i64: 16, 32>}]} {
    %c0_i32 = arith.constant 0 : i32
    %0 = arith.cmpi eq, %arg2, %c0_i32 : i32
    %1 = arith.extui %0 : i1 to i32
    %c0_i32_0 = arith.constant 0 : i32
    %2 = arith.cmpi ne, %1, %c0_i32_0 : i32
    scf.if %2 {
      %cst_10 = arith.constant 0.000000e+00 : f32
      %12 = vector.broadcast %cst_10 : f32 to vector<16x32xf32>
      %c0_11 = arith.constant 0 : index
      %c0_12 = arith.constant 0 : index
      %13 = vector.load %arg10[%c0_11, %c0_12] : memref<16x32xf32, #tpu.memory_space<vmem>>, vector<16x32xf32>
      tpu.vector_store %arg10[%c0_11, %c0_12], %12 {strides = array<i32>} : memref<16x32xf32, #tpu.memory_space<vmem>>, vector<16x32xf32>,
    } else {
    }
    %c0 = arith.constant 0 : index
    %c0_1 = arith.constant 0 : index
    %3 = vector.load %arg10[%c0, %c0_1] : memref<16x32xf32, #tpu.memory_space<vmem>>, vector<16x32xf32>
    %c0_2 = arith.constant 0 : index
    %c0_3 = arith.constant 0 : index
    %4 = vector.load %arg3[%c0_2, %c0_3] : memref<16x64xbf16, #tpu.memory_space<vmem>>, vector<16x64xbf16>
    %c0_4 = arith.constant 0 : index
    %c0_5 = arith.constant 0 : index
    %5 = vector.load %arg4[%c0_4, %c0_5] : memref<64x32xbf16, #tpu.memory_space<vmem>>, vector<64x32xbf16>
    %cst = arith.constant dense<0.000000e+00> : vector<16x32xf32>
    %6 = tpu.matmul %4, %5, %cst {dimension_numbers = #tpu.dot_dimension_numbers<[1], [0], [0], [1], [0, 0, 1, 1], [], []>} : vector<16x64xbf16>, vector<64x32xbf16>, vector<16x32xf32> -> vector<16x32xf32>
    %7 = arith.addf %3, %6 : vector<16x32xf32>
    %c0_6 = arith.constant 0 : index
    %c0_7 = arith.constant 0 : index
    %8 = vector.load %arg10[%c0_6, %c0_7] : memref<16x32xf32, #tpu.memory_space<vmem>>, vector<16x32xf32>
    tpu.vector_store %arg10[%c0_6, %c0_7], %7 {strides = array<i32>} : memref<16x32xf32, #tpu.memory_space<vmem>>, vector<16x32xf32>,
    %c0_i32_8 = arith.constant 0 : i32
    %9 = arith.cmpi eq, %arg2, %c0_i32_8 : i32
    %10 = arith.extui %9 : i1 to i32
    %c0_i32_9 = arith.constant 0 : i32
    %11 = arith.cmpi ne, %10, %c0_i32_9 : i32
    scf.if %11 {
      %c0_10 = arith.constant 0 : index
      %c0_11 = arith.constant 0 : index
      %12 = vector.load %arg10[%c0_10, %c0_11] : memref<16x32xf32, #tpu.memory_space<vmem>>, vector<16x32xf32>
      %c0_12 = arith.constant 0 : index
      %c0_13 = arith.constant 0 : index
      %13 = vector.load %arg5[%c0_12, %c0_13] : memref<1x32xf32, #tpu.memory_space<vmem>>, vector<1x32xf32>
      %14 = vector.broadcast %13 : vector<1x32xf32> to vector<16x32xf32>
      %15 = arith.addf %12, %14 : vector<16x32xf32>
      %c0_14 = arith.constant 0 : index
      %c0_15 = arith.constant 0 : index
      %16 = vector.load %arg6[%c0_14, %c0_15] : memref<16x32xbf16, #tpu.memory_space<vmem>>, vector<16x32xbf16>
      %17 = arith.extf %16 : vector<16x32xbf16> to vector<16x32xf32>
      %18 = arith.addf %15, %17 : vector<16x32xf32>
      %cst_16 = arith.constant dense<0.000000e+00> : vector<16xf32>
      %19 = vector.multi_reduction <add>, %18, %cst_16 [1] : vector<16x32xf32> to vector<16xf32>
      %20 = vector.shape_cast %19 : vector<16xf32> to vector<16x1xf32>
      %cst_17 = arith.constant 3.200000e+01 : f32
      %21 = vector.broadcast %cst_17 : f32 to vector<16x1xf32>
      %22 = arith.divf %20, %21 : vector<16x1xf32>
      %23 = vector.broadcast %22 : vector<16x1xf32> to vector<16x32xf32>
      %24 = arith.subf %18, %23 : vector<16x32xf32>
      %25 = arith.mulf %24, %24 : vector<16x32xf32>
      %cst_18 = arith.constant dense<0.000000e+00> : vector<16xf32>
      %26 = vector.multi_reduction <add>, %25, %cst_18 [1] : vector<16x32xf32> to vector<16xf32>
      %27 = vector.shape_cast %26 : vector<16xf32> to vector<16x1xf32>
      %cst_19 = arith.constant 3.200000e+01 : f32
      %28 = vector.broadcast %cst_19 : f32 to vector<16x1xf32>
      %29 = arith.divf %27, %28 : vector<16x1xf32>
      %30 = vector.broadcast %22 : vector<16x1xf32> to vector<16x32xf32>
      %31 = arith.subf %18, %30 : vector<16x32xf32>
      %cst_20 = arith.constant 9.99999974E-6 : f32
      %32 = vector.broadcast %cst_20 : f32 to vector<16x1xf32>
      %33 = arith.addf %29, %32 : vector<16x1xf32>
      %34 = math.rsqrt %33 : vector<16x1xf32>
      %35 = vector.broadcast %34 : vector<16x1xf32> to vector<16x32xf32>
      %36 = arith.mulf %31, %35 : vector<16x32xf32>
      %c0_21 = arith.constant 0 : index
      %c0_22 = arith.constant 0 : index
      %37 = vector.load %arg7[%c0_21, %c0_22] : memref<1x32xf32, #tpu.memory_space<vmem>>, vector<1x32xf32>
      %38 = vector.broadcast %37 : vector<1x32xf32> to vector<16x32xf32>
      %39 = arith.mulf %36, %38 : vector<16x32xf32>
      %c0_23 = arith.constant 0 : index
      %c0_24 = arith.constant 0 : index
      %40 = vector.load %arg8[%c0_23, %c0_24] : memref<1x32xf32, #tpu.memory_space<vmem>>, vector<1x32xf32>
      %41 = vector.broadcast %40 : vector<1x32xf32> to vector<16x32xf32>
      %42 = arith.addf %39, %41 : vector<16x32xf32>
      %43 = arith.truncf %42 : vector<16x32xf32> to vector<16x32xbf16>
      %c0_25 = arith.constant 0 : index
      %c0_26 = arith.constant 0 : index
      %44 = vector.load %arg9[%c0_25, %c0_26] : memref<16x32xbf16, #tpu.memory_space<vmem>>, vector<16x32xbf16>
      tpu.vector_store %arg9[%c0_25, %c0_26], %43 {strides = array<i32>} : memref<16x32xbf16, #tpu.memory_space<vmem>>, vector<16x32xbf16>,
    } else {
    }
    return
  }
  func.func @transform_0(%arg0: i32, %arg1: i32, %arg2: i32) -> (i32, i32) {
    %c0_i32 = arith.constant 0 : i32
    return %arg0, %arg2 : i32, i32
  }
  func.func @transform_1(%arg0: i32, %arg1: i32, %arg2: i32) -> (i32, i32) {
    %c0_i32 = arith.constant 0 : i32
    return %arg2, %arg1 : i32, i32
  }
  func.func @transform_2(%arg0: i32, %arg1: i32, %arg2: i32) -> (i32, i32) {
    %c0_i32 = arith.constant 0 : i32
    %c0_i32_0 = arith.constant 0 : i32
    return %c0_i32, %arg1 : i32, i32
  }
  func.func @transform_3(%arg0: i32, %arg1: i32, %arg2: i32) -> (i32, i32) {
    %c0_i32 = arith.constant 0 : i32
    return %arg0, %arg1 : i32, i32
  }
  func.func @transform_4(%arg0: i32, %arg1: i32, %arg2: i32) -> (i32, i32) {
    %c0_i32 = arith.constant 0 : i32
    %c0_i32_0 = arith.constant 0 : i32
    return %c0_i32, %arg1 : i32, i32
  }
  func.func @transform_5(%arg0: i32, %arg1: i32, %arg2: i32) -> (i32, i32) {
    %c0_i32 = arith.constant 0 : i32
    %c0_i32_0 = arith.constant 0 : i32
    return %c0_i32, %arg1 : i32, i32
  }
  func.func @transform_6(%arg0: i32, %arg1: i32, %arg2: i32) -> (i32, i32) {
    %c0_i32 = arith.constant 0 : i32
    return %arg0, %arg1 : i32, i32
  }
}

module attributes {stable_mosaic.version = 11 : i64} {
  func.func @kernel(%arg0: i32, %arg1: i32, %arg2: i32, %arg3: memref<16x32xbf16, #tpu.memory_space<vmem>>, %arg4: memref<32x64xbf16, #tpu.memory_space<vmem>>, %arg5: memref<1x64xf32, #tpu.memory_space<vmem>>, %arg6: memref<16x64xbf16, #tpu.memory_space<vmem>>, %arg7: memref<16x64xf32, #tpu.memory_space<vmem>>) attributes {dimension_semantics = [#tpu.dimension_semantics<parallel>, #tpu.dimension_semantics<parallel>, #tpu.dimension_semantics<arbitrary>], iteration_bounds = array<i64: 1, 1, 1>, scalar_prefetch = 0 : i64, scratch_operands = 1 : i64, tpu.core_type = #tpu.core_type<tc>, window_params = [{transform_indices = @transform_0, window_bounds = array<i64: 16, 32>}, {transform_indices = @transform_1, window_bounds = array<i64: 32, 64>}, {transform_indices = @transform_2, window_bounds = array<i64: 1, 64>}, {transform_indices = @transform_3, window_bounds = array<i64: 16, 64>}]} {
    %c0_i32 = arith.constant 0 : i32
    %0 = arith.cmpi eq, %arg2, %c0_i32 : i32
    %1 = arith.extui %0 : i1 to i32
    %c0_i32_0 = arith.constant 0 : i32
    %2 = arith.cmpi ne, %1, %c0_i32_0 : i32
    scf.if %2 {
      %cst_10 = arith.constant 0.000000e+00 : f32
      %12 = vector.broadcast %cst_10 : f32 to vector<16x64xf32>
      %c0_11 = arith.constant 0 : index
      %c0_12 = arith.constant 0 : index
      %13 = vector.load %arg7[%c0_11, %c0_12] : memref<16x64xf32, #tpu.memory_space<vmem>>, vector<16x64xf32>
      tpu.vector_store %arg7[%c0_11, %c0_12], %12 {strides = array<i32>} : memref<16x64xf32, #tpu.memory_space<vmem>>, vector<16x64xf32>,
    } else {
    }
    %c0 = arith.constant 0 : index
    %c0_1 = arith.constant 0 : index
    %3 = vector.load %arg7[%c0, %c0_1] : memref<16x64xf32, #tpu.memory_space<vmem>>, vector<16x64xf32>
    %c0_2 = arith.constant 0 : index
    %c0_3 = arith.constant 0 : index
    %4 = vector.load %arg3[%c0_2, %c0_3] : memref<16x32xbf16, #tpu.memory_space<vmem>>, vector<16x32xbf16>
    %c0_4 = arith.constant 0 : index
    %c0_5 = arith.constant 0 : index
    %5 = vector.load %arg4[%c0_4, %c0_5] : memref<32x64xbf16, #tpu.memory_space<vmem>>, vector<32x64xbf16>
    %cst = arith.constant dense<0.000000e+00> : vector<16x64xf32>
    %6 = tpu.matmul %4, %5, %cst {dimension_numbers = #tpu.dot_dimension_numbers<[1], [0], [0], [1], [0, 0, 1, 1], [], []>} : vector<16x32xbf16>, vector<32x64xbf16>, vector<16x64xf32> -> vector<16x64xf32>
    %7 = arith.addf %3, %6 : vector<16x64xf32>
    %c0_6 = arith.constant 0 : index
    %c0_7 = arith.constant 0 : index
    %8 = vector.load %arg7[%c0_6, %c0_7] : memref<16x64xf32, #tpu.memory_space<vmem>>, vector<16x64xf32>
    tpu.vector_store %arg7[%c0_6, %c0_7], %7 {strides = array<i32>} : memref<16x64xf32, #tpu.memory_space<vmem>>, vector<16x64xf32>,
    %c0_i32_8 = arith.constant 0 : i32
    %9 = arith.cmpi eq, %arg2, %c0_i32_8 : i32
    %10 = arith.extui %9 : i1 to i32
    %c0_i32_9 = arith.constant 0 : i32
    %11 = arith.cmpi ne, %10, %c0_i32_9 : i32
    scf.if %11 {
      %c0_10 = arith.constant 0 : index
      %c0_11 = arith.constant 0 : index
      %12 = vector.load %arg7[%c0_10, %c0_11] : memref<16x64xf32, #tpu.memory_space<vmem>>, vector<16x64xf32>
      %c0_12 = arith.constant 0 : index
      %c0_13 = arith.constant 0 : index
      %13 = vector.load %arg5[%c0_12, %c0_13] : memref<1x64xf32, #tpu.memory_space<vmem>>, vector<1x64xf32>
      %14 = vector.broadcast %13 : vector<1x64xf32> to vector<16x64xf32>
      %15 = arith.addf %12, %14 : vector<16x64xf32>
      %16 = arith.truncf %15 : vector<16x64xf32> to vector<16x64xbf16>
      %c0_14 = arith.constant 0 : index
      %c0_15 = arith.constant 0 : index
      %17 = vector.load %arg6[%c0_14, %c0_15] : memref<16x64xbf16, #tpu.memory_space<vmem>>, vector<16x64xbf16>
      tpu.vector_store %arg6[%c0_14, %c0_15], %16 {strides = array<i32>} : memref<16x64xbf16, #tpu.memory_space<vmem>>, vector<16x64xbf16>,
    } else {
    }
    return
  }
  func.func @transform_0(%arg0: i32, %arg1: i32, %arg2: i32) -> (i32, i32) {
    %c0_i32 = arith.constant 0 : i32
    return %arg0, %arg2 : i32, i32
  }
  func.func @transform_1(%arg0: i32, %arg1: i32, %arg2: i32) -> (i32, i32) {
    %c0_i32 = arith.constant 0 : i32
    return %arg2, %arg1 : i32, i32
  }
  func.func @transform_2(%arg0: i32, %arg1: i32, %arg2: i32) -> (i32, i32) {
    %c0_i32 = arith.constant 0 : i32
    %c0_i32_0 = arith.constant 0 : i32
    return %c0_i32, %arg1 : i32, i32
  }
  func.func @transform_3(%arg0: i32, %arg1: i32, %arg2: i32) -> (i32, i32) {
    %c0_i32 = arith.constant 0 : i32
    return %arg0, %arg1 : i32, i32
  }
}

module attributes {stable_mosaic.version = 11 : i64} {
  func.func @kernel(%arg0: i32, %arg1: i32, %arg2: i32, %arg3: memref<16x32xbf16, #tpu.memory_space<vmem>>, %arg4: memref<32x128xbf16, #tpu.memory_space<vmem>>, %arg5: memref<1x128xf32, #tpu.memory_space<vmem>>, %arg6: memref<16x128xf32, #tpu.memory_space<vmem>>, %arg7: memref<16x128xf32, #tpu.memory_space<vmem>>) attributes {dimension_semantics = [#tpu.dimension_semantics<parallel>, #tpu.dimension_semantics<parallel>, #tpu.dimension_semantics<arbitrary>], iteration_bounds = array<i64: 1, 1, 1>, scalar_prefetch = 0 : i64, scratch_operands = 1 : i64, tpu.core_type = #tpu.core_type<tc>, window_params = [{transform_indices = @transform_0, window_bounds = array<i64: 16, 32>}, {transform_indices = @transform_1, window_bounds = array<i64: 32, 128>}, {transform_indices = @transform_2, window_bounds = array<i64: 1, 128>}, {transform_indices = @transform_3, window_bounds = array<i64: 16, 128>}]} {
    %c0_i32 = arith.constant 0 : i32
    %0 = arith.cmpi eq, %arg2, %c0_i32 : i32
    %1 = arith.extui %0 : i1 to i32
    %c0_i32_0 = arith.constant 0 : i32
    %2 = arith.cmpi ne, %1, %c0_i32_0 : i32
    scf.if %2 {
      %cst_10 = arith.constant 0.000000e+00 : f32
      %12 = vector.broadcast %cst_10 : f32 to vector<16x128xf32>
      %c0_11 = arith.constant 0 : index
      %c0_12 = arith.constant 0 : index
      %13 = vector.load %arg7[%c0_11, %c0_12] : memref<16x128xf32, #tpu.memory_space<vmem>>, vector<16x128xf32>
      tpu.vector_store %arg7[%c0_11, %c0_12], %12 {strides = array<i32>} : memref<16x128xf32, #tpu.memory_space<vmem>>, vector<16x128xf32>,
    } else {
    }
    %c0 = arith.constant 0 : index
    %c0_1 = arith.constant 0 : index
    %3 = vector.load %arg7[%c0, %c0_1] : memref<16x128xf32, #tpu.memory_space<vmem>>, vector<16x128xf32>
    %c0_2 = arith.constant 0 : index
    %c0_3 = arith.constant 0 : index
    %4 = vector.load %arg3[%c0_2, %c0_3] : memref<16x32xbf16, #tpu.memory_space<vmem>>, vector<16x32xbf16>
    %c0_4 = arith.constant 0 : index
    %c0_5 = arith.constant 0 : index
    %5 = vector.load %arg4[%c0_4, %c0_5] : memref<32x128xbf16, #tpu.memory_space<vmem>>, vector<32x128xbf16>
    %cst = arith.constant dense<0.000000e+00> : vector<16x128xf32>
    %6 = tpu.matmul %4, %5, %cst {dimension_numbers = #tpu.dot_dimension_numbers<[1], [0], [0], [1], [0, 0, 1, 1], [], []>} : vector<16x32xbf16>, vector<32x128xbf16>, vector<16x128xf32> -> vector<16x128xf32>
    %7 = arith.addf %3, %6 : vector<16x128xf32>
    %c0_6 = arith.constant 0 : index
    %c0_7 = arith.constant 0 : index
    %8 = vector.load %arg7[%c0_6, %c0_7] : memref<16x128xf32, #tpu.memory_space<vmem>>, vector<16x128xf32>
    tpu.vector_store %arg7[%c0_6, %c0_7], %7 {strides = array<i32>} : memref<16x128xf32, #tpu.memory_space<vmem>>, vector<16x128xf32>,
    %c0_i32_8 = arith.constant 0 : i32
    %9 = arith.cmpi eq, %arg2, %c0_i32_8 : i32
    %10 = arith.extui %9 : i1 to i32
    %c0_i32_9 = arith.constant 0 : i32
    %11 = arith.cmpi ne, %10, %c0_i32_9 : i32
    scf.if %11 {
      %c0_10 = arith.constant 0 : index
      %c0_11 = arith.constant 0 : index
      %12 = vector.load %arg7[%c0_10, %c0_11] : memref<16x128xf32, #tpu.memory_space<vmem>>, vector<16x128xf32>
      %c0_12 = arith.constant 0 : index
      %c0_13 = arith.constant 0 : index
      %13 = vector.load %arg5[%c0_12, %c0_13] : memref<1x128xf32, #tpu.memory_space<vmem>>, vector<1x128xf32>
      %14 = vector.broadcast %13 : vector<1x128xf32> to vector<16x128xf32>
      %15 = arith.addf %12, %14 : vector<16x128xf32>
      %c0_14 = arith.constant 0 : index
      %c0_15 = arith.constant 0 : index
      %16 = vector.load %arg6[%c0_14, %c0_15] : memref<16x128xf32, #tpu.memory_space<vmem>>, vector<16x128xf32>
      tpu.vector_store %arg6[%c0_14, %c0_15], %15 {strides = array<i32>} : memref<16x128xf32, #tpu.memory_space<vmem>>, vector<16x128xf32>,
    } else {
    }
    return
  }
  func.func @transform_0(%arg0: i32, %arg1: i32, %arg2: i32) -> (i32, i32) {
    %c0_i32 = arith.constant 0 : i32
    return %arg0, %arg2 : i32, i32
  }
  func.func @transform_1(%arg0: i32, %arg1: i32, %arg2: i32) -> (i32, i32) {
    %c0_i32 = arith.constant 0 : i32
    return %arg2, %arg1 : i32, i32
  }
  func.func @transform_2(%arg0: i32, %arg1: i32, %arg2: i32) -> (i32, i32) {
    %c0_i32 = arith.constant 0 : i32
    %c0_i32_0 = arith.constant 0 : i32
    return %c0_i32, %arg1 : i32, i32
  }
  func.func @transform_3(%arg0: i32, %arg1: i32, %arg2: i32) -> (i32, i32) {
    %c0_i32 = arith.constant 0 : i32
    return %arg0, %arg1 : i32, i32
  }
}

</mosaic_0001>

<llo_original>
// kernel: transformer_forward.39
$region0: #{transformer_forward.39}
  #allocation0 [shape = 'u32[]', space=smem, size = 0x4, offset = 0x4, fixed_abs, tag = 'smem constant byte address 0x4 - core index']
  #allocation1 [shape = 'u32[72,128]{1,0:T(1,128)}', space=vmem, size = 0x9000, scoped, tag = 'internal scratch']
  #allocation2 [shape = 'f32[16,96]{1,0:T(8,128)}', space=vmem, size = 0x2000, scoped, tag = 'scratch operand']
  %s0 = inlined_call_operand.vmem [shape: bf16[16,32], index: 0, kind: input, shape index: {}]
  %s1 = inlined_call_operand.vmem [shape: bf16[32,96], index: 1, kind: input, shape index: {}]
  %s2 = inlined_call_operand.vmem [shape: f32[1,96], index: 2, kind: input, shape index: {}]
  %s3 = inlined_call_operand.vmem [shape: bf16[16,96], index: 3, kind: output, shape index: {}]
  %s4 = sld [smem:[#allocation0]]
  $region30: #{transformer_forward.39} parent=0
    _
  %s6 = ssub.s32 1, %s4
  %s7 = scalar_select 0, %s6, %s4
  // Predicated region
  $region2: #{transformer_forward.39} parent=0 // pred_check
    _
  $region3: #{transformer_forward.39} parent=0 // pred_check_branch
    %9 = sbr.rel (0) target = $region5
  $region4: #{transformer_forward.39} parent=0 // pred_region
    _
  $region5: #{transformer_forward.39} parent=0 // pred_fallthru
    _
  // Predicated region
  $region6: #{transformer_forward.39} parent=0 // pred_check
    _
  $region7: #{transformer_forward.39} parent=0 // pred_check_branch
    %11 = sbr.rel (0) target = $region9
  $region8: #{transformer_forward.39} parent=0 // pred_region
    _
  $region9: #{transformer_forward.39} parent=0 // pred_fallthru
    _
  // Predicated region
  $region10: #{transformer_forward.39} parent=0 // pred_check
    _
  $region11: #{transformer_forward.39} parent=0 // pred_check_branch
    %13 = sbr.rel (0) target = $region13
  $region12: #{transformer_forward.39} parent=0 // pred_region
    _
  $region13: #{transformer_forward.39} parent=0 // pred_fallthru
    _
  %p15 = scmp.eq.s32.totalorder 0, 0
  // Predicated region
  $region14: #{transformer_forward.39} parent=0 // pred_check
    %p16 = pneg %p15
  $region15: #{transformer_forward.39} parent=0 // pred_check_branch
    %18 = sbr.rel (%p16) target = $region17
  $region16: #{transformer_forward.39} parent=0 // pred_region
    %vm19 = vcmask 785408
    %20 = vst.msk [vmem:[#allocation2] sm:$0xff] %vm19, 0.0
    %21 = vst.msk [vmem:[#allocation2 + $0x8] sm:$0xff] %vm19, 0.0
  $region17: #{transformer_forward.39} parent=0 // pred_fallthru
    _
  %v22 = vld [vmem:[#allocation2] sm:$0xff]
  %v23 = vld [vmem:[#allocation2 + $0x8] sm:$0xff]
  %v24 = vld [vmem:[%s0] sm:$0xf]
  %v25 = vld [vmem:[%s0 + $0x4] sm:$0xf]
  %v26 = vld [vmem:[%s1] sm:$0xf]
  %v27 = vld [vmem:[%s1 + $0x4] sm:$0xf]
  %v28 = vld [vmem:[%s1 + $0x8] sm:$0xf]
  %v29 = vld [vmem:[%s1 + $0xc] sm:$0xf]
  %v32 = vunpack.c.l.b16 %v24
  %v33 = vunpack.c.l.b16 %v25
  %v34 = vpack.c.b16 %v33, %v32
  %v39 = vunpack.c.l.b16 %v26
  %v40 = vunpack.c.l.b16 %v27
  %v41 = vunpack.c.l.b16 %v28
  %v42 = vunpack.c.l.b16 %v29
  %v43 = vpack.c.b16 %v40, %v39
  %v44 = vpack.c.b16 %v42, %v41
  %vm47 = vcmask 261120
  %v49 = vsel %vm47, %v34, 0
  %51 = vmatpush.bf16.msra.mxu0 0
  %52 = vmatpush.bf16.msra.mxu0 0
  %53 = vmatpush.bf16.msra.mxu0 0
  %54 = vmatpush.bf16.msra.mxu0 0
  %55 = vmatpush.bf16.msra.mxu0 0
  %56 = vmatpush.bf16.msra.mxu0 0
  %57 = vmatpush.bf16.msra.mxu0 %v44
  %58 = vmatpush.bf16.msra.mxu0 %v43
  %59 = vmatmul.bf16.gmra.mxu0 %v49
  %v60 = vpop.f32.mrf.mxu0
  %v61 = vadd.f32 0.0, %v60
  %v62 = vpop.f32.mrf.mxu0
  %v63 = vadd.f32 0.0, %v62
  %64 = vdwg.mxu0
  %v65 = vadd.f32 %v22, %v61
  %v66 = vadd.f32 %v23, %v63
  %vm67 = vcmask 785408
  %68 = vst.msk [vmem:[#allocation2] sm:$0xff] %vm67, %v65
  %69 = vst.msk [vmem:[#allocation2 + $0x8] sm:$0xff] %vm67, %v66
  // Predicated region
  $region18: #{transformer_forward.39} parent=0 // pred_check
    %p70 = pneg %p15
  $region19: #{transformer_forward.39} parent=0 // pred_check_branch
    %72 = sbr.rel (%p70) target = $region21
  $region20: #{transformer_forward.39} parent=0 // pred_region
    %v73 = vld [vmem:[#allocation2] sm:$0xff]
    %v74 = vld [vmem:[#allocation2 + $0x8] sm:$0xff]
    %v75 = vld [vmem:[%s2] sm:$0x1]
    %v77 = vperm.slane %v75, 0
    %v79 = vadd.f32 %v73, %v77
    %v80 = vadd.f32 %v74, %v77
    %v81 = vpack.c.bf16 %v79, %v79
    %v82 = vpack.c.bf16 %v80, %v80
    %vm83 = vcmask 781312
    %84 = vst.msk [vmem:[%s3] sm:$0xf] %vm83, %v81
    %85 = vst.msk [vmem:[%s3 + $0x4] sm:$0xf] %vm83, %v82
  $region21: #{transformer_forward.39} parent=0 // pred_fallthru
    _
  // Predicated region
  $region22: #{transformer_forward.39} parent=0 // pred_check
    _
  $region23: #{transformer_forward.39} parent=0 // pred_check_branch
    %87 = sbr.rel (0) target = $region25
  $region24: #{transformer_forward.39} parent=0 // pred_region
    _
  $region25: #{transformer_forward.39} parent=0 // pred_fallthru
    _
  // Predicated region
  $region26: #{transformer_forward.39} parent=0 // pred_check
    _
  $region27: #{transformer_forward.39} parent=0 // pred_check_branch
    %89 = sbr.rel (0) target = $region29
  $region28: #{transformer_forward.39} parent=0 // pred_region
    _
  $region29: #{transformer_forward.39} parent=0 // pred_fallthru
    _

// kernel: transformer_forward.40
$region0: #{transformer_forward.40}
  #allocation0 [shape = 'u32[]', space=smem, size = 0x4, offset = 0x4, fixed_abs, tag = 'smem constant byte address 0x4 - core index']
  #allocation1 [shape = 'u32[72,128]{1,0:T(1,128)}', space=vmem, size = 0x9000, scoped, tag = 'internal scratch']
  #allocation2 [shape = 'f32[8,1]{1,0:T(8,128)}', space=vmem, size = 0x1000, scoped, tag = 'scratch operand']
  #allocation3 [shape = 'f32[8,1]{1,0:T(8,128)}', space=vmem, size = 0x1000, scoped, tag = 'scratch operand']
  #allocation4 [shape = 'f32[8,8]{1,0:T(8,128)}', space=vmem, size = 0x1000, scoped, tag = 'scratch operand']
  %s0 = inlined_call_operand.vmem [shape: bf16[2,4,8,8], index: 0, kind: input, shape index: {}]
  %s1 = inlined_call_operand.vmem [shape: bf16[2,4,8,8], index: 1, kind: input, shape index: {}]
  %s2 = inlined_call_operand.vmem [shape: bf16[2,4,8,8], index: 2, kind: input, shape index: {}]
  %s3 = inlined_call_operand.vmem [shape: f32[2,8,1], index: 3, kind: input, shape index: {}]
  %s4 = inlined_call_operand.vmem [shape: bf16[2,4,8,8], index: 4, kind: output, shape index: {}]
  %s5 = sld [smem:[#allocation0]]
  $region57: #{transformer_forward.40} parent=0
    _
  %s7 = ssub.s32 1, %s5
  %s8 = scalar_select 0, %s7, %s5
  loop: start=0, step=1, limit=10
  $region2: #{transformer_forward.40} parent=0 // loop_pre_header
    _
  $region3: #{transformer_forward.40} parent=0 // loop_header
    %s10 = sphi 0, %s14
    %p11 = scmp.ge.s32.totalorder %s10, 10
    %s17 = sphi 0, %s43
    %s18 = sphi 0, %s39
    %s19 = sphi 0, %s35
    %s20 = sphi 0, %s31
    %s21 = sphi 0, %s17
    %s22 = sphi 0, %s18
    %s23 = sphi 0, %s19
    %s24 = sphi 0, %s20
    %s25 = sphi 0, %s21
    %s26 = sphi 0, %s22
    %s27 = sphi 0, %s23
    %s28 = sphi 0, %s24
    %s50 = sphi 0, %s52
    %s53 = sphi 0, %s50
    %s54 = sphi 0, %s53
    %s70 = sphi 0, %s54
    %s80 = sphi 0, %s82
    %s83 = sphi 0, %s80
    %s84 = sphi 0, %s83
    %s100 = sphi 0, %s84
    %s110 = sphi 0, %s112
    %s113 = sphi 0, %s110
    %s114 = sphi 0, %s113
    %s130 = sphi 0, %s114
    %s138 = sphi 0, %s140
    %s141 = sphi 0, %s138
    %s142 = sphi 0, %s141
    %s158 = sphi 0, %s142
    %s168 = sphi 0, %s170
    %s171 = sphi 0, %s168
    %s172 = sphi 0, %s171
    %s188 = sphi 0, %s172
  $region4: #{transformer_forward.40} parent=0 // loop_header_branch
    %13 = sbr.rel (%p11) target = $region8
  $region5: #{transformer_forward.40} parent=0 // loop_body
    %s15 = ssub.s32 %s10, 1
    %s16 = ssub.s32 %s10, 2
    %s29 = sadd.s32 1, %s20
    %p30 = scmp.ge.s32.totalorder %s29, 1
    %s31 = scalar_select %p30, 0, %s29
    %s32 = sadd.s32 1, %s19
    %s33 = scalar_select %p30, %s32, %s19
    %p34 = scmp.ge.s32.totalorder %s33, 1
    %s35 = scalar_select %p34, 0, %s33
    %s36 = sadd.s32 1, %s18
    %s37 = scalar_select %p34, %s36, %s18
    %p38 = scmp.ge.s32.totalorder %s37, 4
    %s39 = scalar_select %p38, 0, %s37
    %s40 = sadd.s32 1, %s17
    %s41 = scalar_select %p38, %s40, %s17
    %p42 = scmp.ge.s32.totalorder %s41, 2
    %s43 = scalar_select %p42, 0, %s41
    %s44 = ssub.s32 %s17, %s43
    %s45 = ssub.s32 %s18, %s39
    %s46 = sor.u32 %s44, %s45
    %s47 = ssub.s32 %s19, %s35
    %s48 = sor.u32 %s46, %s47
    %p49 = scmp.eq.s32.totalorder %s48, 0
    %s51 = sadd.s32 %s50, 1
    %s52 = scalar_select %p49, %s50, %s51
    %p55 = pneg %p49
    %p56 = scmp.eq.s32.totalorder %s10, 7
    %p57 = por %p55, %p56
    %p58 = scmp.ne.s32.totalorder %s50, %s53
    %p59 = scmp.eq.s32.totalorder %s10, 0
    %p60 = por %p58, %p59
    %p61 = scmp.ne.s32.totalorder %s50, %s53
    %p62 = scmp.eq.s32.totalorder %s15, 7
    %p63 = por %p61, %p62
    %p64 = scmp.ne.s32.totalorder %s53, %s54
    %p65 = scmp.eq.s32.totalorder %s15, 0
    %p66 = por %p64, %p65
    %p67 = scmp.ne.s32.totalorder %s53, %s54
    %p68 = scmp.eq.s32.totalorder %s16, 7
    %p69 = por %p67, %p68
    %p71 = scmp.ne.s32.totalorder %s54, %s70
    %p72 = scmp.eq.s32.totalorder %s16, 0
    %p73 = por %p71, %p72
    %s74 = ssub.s32 %s17, %s43
    %s75 = ssub.s32 %s18, %s39
    %s76 = sor.u32 %s74, %s75
    %s77 = ssub.s32 %s20, %s31
    %s78 = sor.u32 %s76, %s77
    %p79 = scmp.eq.s32.totalorder %s78, 0
    %s81 = sadd.s32 %s80, 1
    %s82 = scalar_select %p79, %s80, %s81
    %p85 = pneg %p79
    %p86 = scmp.eq.s32.totalorder %s10, 7
    %p87 = por %p85, %p86
    %p88 = scmp.ne.s32.totalorder %s80, %s83
    %p89 = scmp.eq.s32.totalorder %s10, 0
    %p90 = por %p88, %p89
    %p91 = scmp.ne.s32.totalorder %s80, %s83
    %p92 = scmp.eq.s32.totalorder %s15, 7
    %p93 = por %p91, %p92
    %p94 = scmp.ne.s32.totalorder %s83, %s84
    %p95 = scmp.eq.s32.totalorder %s15, 0
    %p96 = por %p94, %p95
    %p97 = scmp.ne.s32.totalorder %s83, %s84
    %p98 = scmp.eq.s32.totalorder %s16, 7
    %p99 = por %p97, %p98
    %p101 = scmp.ne.s32.totalorder %s84, %s100
    %p102 = scmp.eq.s32.totalorder %s16, 0
    %p103 = por %p101, %p102
    %s104 = ssub.s32 %s17, %s43
    %s105 = ssub.s32 %s18, %s39
    %s106 = sor.u32 %s104, %s105
    %s107 = ssub.s32 %s20, %s31
    %s108 = sor.u32 %s106, %s107
    %p109 = scmp.eq.s32.totalorder %s108, 0
    %s111 = sadd.s32 %s110, 1
    %s112 = scalar_select %p109, %s110, %s111
    %p115 = pneg %p109
    %p116 = scmp.eq.s32.totalorder %s10, 7
    %p117 = por %p115, %p116
    %p118 = scmp.ne.s32.totalorder %s110, %s113
    %p119 = scmp.eq.s32.totalorder %s10, 0
    %p120 = por %p118, %p119
    %p121 = scmp.ne.s32.totalorder %s110, %s113
    %p122 = scmp.eq.s32.totalorder %s15, 7
    %p123 = por %p121, %p122
    %p124 = scmp.ne.s32.totalorder %s113, %s114
    %p125 = scmp.eq.s32.totalorder %s15, 0
    %p126 = por %p124, %p125
    %p127 = scmp.ne.s32.totalorder %s113, %s114
    %p128 = scmp.eq.s32.totalorder %s16, 7
    %p129 = por %p127, %p128
    %p131 = scmp.ne.s32.totalorder %s114, %s130
    %p132 = scmp.eq.s32.totalorder %s16, 0
    %p133 = por %p131, %p132
    %s134 = ssub.s32 %s17, %s43
    %s135 = ssub.s32 %s19, %s35
    %s136 = sor.u32 %s134, %s135
    %p137 = scmp.eq.s32.totalorder %s136, 0
    %s139 = sadd.s32 %s138, 1
    %s140 = scalar_select %p137, %s138, %s139
    %p143 = pneg %p137
    %p144 = scmp.eq.s32.totalorder %s10, 7
    %p145 = por %p143, %p144
    %p146 = scmp.ne.s32.totalorder %s138, %s141
    %p147 = scmp.eq.s32.totalorder %s10, 0
    %p148 = por %p146, %p147
    %p149 = scmp.ne.s32.totalorder %s138, %s141
    %p150 = scmp.eq.s32.totalorder %s15, 7
    %p151 = por %p149, %p150
    %p152 = scmp.ne.s32.totalorder %s141, %s142
    %p153 = scmp.eq.s32.totalorder %s15, 0
    %p154 = por %p152, %p153
    %p155 = scmp.ne.s32.totalorder %s141, %s142
    %p156 = scmp.eq.s32.totalorder %s16, 7
    %p157 = por %p155, %p156
    %p159 = scmp.ne.s32.totalorder %s142, %s158
    %p160 = scmp.eq.s32.totalorder %s16, 0
    %p161 = por %p159, %p160
    %s162 = ssub.s32 %s17, %s43
    %s163 = ssub.s32 %s18, %s39
    %s164 = sor.u32 %s162, %s163
    %s165 = ssub.s32 %s19, %s35
    %s166 = sor.u32 %s164, %s165
    %p167 = scmp.eq.s32.totalorder %s166, 0
    %s169 = sadd.s32 %s168, 1
    %s170 = scalar_select %p167, %s168, %s169
    %p173 = pneg %p167
    %p174 = scmp.eq.s32.totalorder %s10, 7
    %p175 = por %p173, %p174
    %p176 = scmp.ne.s32.totalorder %s168, %s171
    %p177 = scmp.eq.s32.totalorder %s10, 0
    %p178 = por %p176, %p177
    %p179 = scmp.ne.s32.totalorder %s168, %s171
    %p180 = scmp.eq.s32.totalorder %s15, 7
    %p181 = por %p179, %p180
    %p182 = scmp.ne.s32.totalorder %s171, %s172
    %p183 = scmp.eq.s32.totalorder %s15, 0
    %p184 = por %p182, %p183
    %p185 = scmp.ne.s32.totalorder %s171, %s172
    %p186 = scmp.eq.s32.totalorder %s16, 7
    %p187 = por %p185, %p186
    %p189 = scmp.ne.s32.totalorder %s172, %s188
    %p190 = scmp.eq.s32.totalorder %s16, 0
    %p191 = por %p189, %p190
    %p192 = scmp.le.s32.totalorder 1, %s10
    %p193 = scmp.lt.s32.totalorder %s10, 9
    %p194 = pnand %p192, %p193
    %p195 = pneg %p194
    // Predicated region
    $region9: #{transformer_forward.40} parent=5 // pred_check
      _
    $region10: #{transformer_forward.40} parent=5 // pred_check_branch
      %197 = sbr.rel (%p194) target = $region12
    $region11: #{transformer_forward.40} parent=5 // pred_region
      %s198 = ssub.s32 %s10, 1
    $region12: #{transformer_forward.40} parent=5 // pred_fallthru
      _
    %p199 = scmp.lt.s32.totalorder %s10, 8
    // Predicated region
    $region13: #{transformer_forward.40} parent=5 // pred_check
      %p200 = pneg %p199
    $region14: #{transformer_forward.40} parent=5 // pred_check_branch
      %202 = sbr.rel (%p200) target = $region16
    $region15: #{transformer_forward.40} parent=5 // pred_region
      // Predicated region
      $region17: #{transformer_forward.40} parent=15 // pred_check
        %p203 = pneg %p60
      $region18: #{transformer_forward.40} parent=15 // pred_check_branch
        %205 = sbr.rel (%p203) target = $region20
      $region19: #{transformer_forward.40} parent=15 // pred_region
        %p206 = scmp.lt.s32.totalorder %s17, 1
        %s207 = scalar_select %p206, %s17, 1
        %p208 = scmp.lt.s32.totalorder %s18, 3
        %s209 = scalar_select %p208, %s18, 3
        %p210 = scmp.lt.s32.totalorder %s19, 0
        %s211 = scalar_select %p210, %s19, 0
        %s212 = sadd.s32 %s211, %s209
        %s213 = smul.addr %s207, 4
        %s214 = sadd.s32 %s212, %s213
        %s215 = smul.addr %s214, 4
        %s216 = scalar_lea.vmem %s0, %s215
      $region20: #{transformer_forward.40} parent=15 // pred_fallthru
        _
      // Predicated region
      $region21: #{transformer_forward.40} parent=15 // pred_check
        %p217 = pneg %p90
      $region22: #{transformer_forward.40} parent=15 // pred_check_branch
        %219 = sbr.rel (%p217) target = $region24
      $region23: #{transformer_forward.40} parent=15 // pred_region
        %p220 = scmp.lt.s32.totalorder %s17, 1
        %s221 = scalar_select %p220, %s17, 1
        %p222 = scmp.lt.s32.totalorder %s18, 3
        %s223 = scalar_select %p222, %s18, 3
        %p224 = scmp.lt.s32.totalorder %s20, 0
        %s225 = scalar_select %p224, %s20, 0
        %s226 = sadd.s32 %s225, %s223
        %s227 = smul.addr %s221, 4
        %s228 = sadd.s32 %s226, %s227
        %s229 = smul.addr %s228, 4
        %s230 = scalar_lea.vmem %s1, %s229
      $region24: #{transformer_forward.40} parent=15 // pred_fallthru
        _
      // Predicated region
      $region25: #{transformer_forward.40} parent=15 // pred_check
        %p231 = pneg %p120
      $region26: #{transformer_forward.40} parent=15 // pred_check_branch
        %233 = sbr.rel (%p231) target = $region28
      $region27: #{transformer_forward.40} parent=15 // pred_region
        %p234 = scmp.lt.s32.totalorder %s17, 1
        %s235 = scalar_select %p234, %s17, 1
        %p236 = scmp.lt.s32.totalorder %s18, 3
        %s237 = scalar_select %p236, %s18, 3
        %p238 = scmp.lt.s32.totalorder %s20, 0
        %s239 = scalar_select %p238, %s20, 0
        %s240 = sadd.s32 %s239, %s237
        %s241 = smul.addr %s235, 4
        %s242 = sadd.s32 %s240, %s241
        %s243 = smul.addr %s242, 4
        %s244 = scalar_lea.vmem %s2, %s243
      $region28: #{transformer_forward.40} parent=15 // pred_fallthru
        _
      // Predicated region
      $region29: #{transformer_forward.40} parent=15 // pred_check
        %p245 = pneg %p148
      $region30: #{transformer_forward.40} parent=15 // pred_check_branch
        %247 = sbr.rel (%p245) target = $region32
      $region31: #{transformer_forward.40} parent=15 // pred_region
        %p248 = scmp.lt.s32.totalorder %s17, 1
        %s249 = scalar_select %p248, %s17, 1
        %p250 = scmp.lt.s32.totalorder %s19, 0
        %s251 = scalar_select %p250, %s19, 0
        %s252 = sadd.s32 %s251, %s249
        %s253 = smul.addr %s252, 8
        %s254 = scalar_lea.vmem %s3, %s253
      $region32: #{transformer_forward.40} parent=15 // pred_fallthru
        _
    $region16: #{transformer_forward.40} parent=5 // pred_fallthru
      _
    %p255 = scmp.le.s32.totalorder 1, %s10
    %p256 = scmp.lt.s32.totalorder %s10, 9
    %p257 = pnand %p255, %p256
    %p258 = pneg %p257
    // Predicated region
    $region33: #{transformer_forward.40} parent=5 // pred_check
      _
    $region34: #{transformer_forward.40} parent=5 // pred_check_branch
      %260 = sbr.rel (%p257) target = $region36
    $region35: #{transformer_forward.40} parent=5 // pred_region
      %s261 = ssub.s32 %s10, 1
      %p262 = scmp.lt.s32.totalorder %s21, 1
      %s263 = scalar_select %p262, %s21, 1
      %p264 = scmp.lt.s32.totalorder %s22, 3
      %s265 = scalar_select %p264, %s22, 3
      %p266 = scmp.lt.s32.totalorder %s23, 0
      %s267 = scalar_select %p266, %s23, 0
      %s268 = sadd.s32 %s267, %s265
      %s269 = smul.addr %s263, 4
      %s270 = sadd.s32 %s268, %s269
      %s271 = smul.addr %s270, 4
      %s272 = scalar_lea.vmem %s0, %s271
      %p273 = pneg %p66
      %p274 = pneg %p63
      %p275 = scmp.lt.s32.totalorder %s21, 1
      %s276 = scalar_select %p275, %s21, 1
      %p277 = scmp.lt.s32.totalorder %s22, 3
      %s278 = scalar_select %p277, %s22, 3
      %p279 = scmp.lt.s32.totalorder %s24, 0
      %s280 = scalar_select %p279, %s24, 0
      %s281 = sadd.s32 %s280, %s278
      %s282 = smul.addr %s276, 4
      %s283 = sadd.s32 %s281, %s282
      %s284 = smul.addr %s283, 4
      %s285 = scalar_lea.vmem %s1, %s284
      %p286 = pneg %p96
      %p287 = pneg %p93
      %p288 = scmp.lt.s32.totalorder %s21, 1
      %s289 = scalar_select %p288, %s21, 1
      %p290 = scmp.lt.s32.totalorder %s22, 3
      %s291 = scalar_select %p290, %s22, 3
      %p292 = scmp.lt.s32.totalorder %s24, 0
      %s293 = scalar_select %p292, %s24, 0
      %s294 = sadd.s32 %s293, %s291
      %s295 = smul.addr %s289, 4
      %s296 = sadd.s32 %s294, %s295
      %s297 = smul.addr %s296, 4
      %s298 = scalar_lea.vmem %s2, %s297
      %p299 = pneg %p126
      %p300 = pneg %p123
      %p301 = scmp.lt.s32.totalorder %s21, 1
      %s302 = scalar_select %p301, %s21, 1
      %p303 = scmp.lt.s32.totalorder %s23, 0
      %s304 = scalar_select %p303, %s23, 0
      %s305 = sadd.s32 %s304, %s302
      %s306 = smul.addr %s305, 8
      %s307 = scalar_lea.vmem %s3, %s306
      %p308 = pneg %p154
      %p309 = pneg %p151
      %p310 = pneg %p184
      %p311 = pneg %p181
      %p312 = scmp.lt.s32.totalorder %s21, 1
      %s313 = scalar_select %p312, %s21, 1
      %p314 = scmp.lt.s32.totalorder %s22, 3
      %s315 = scalar_select %p314, %s22, 3
      %p316 = scmp.lt.s32.totalorder %s23, 0
      %s317 = scalar_select %p316, %s23, 0
      %s318 = sadd.s32 %s317, %s315
      %s319 = smul.addr %s313, 4
      %s320 = sadd.s32 %s318, %s319
      %s321 = smul.addr %s320, 4
      %s322 = scalar_lea.vmem %s4, %s321
      %p323 = scmp.lt.s32.totalorder %s21, 1
      %s324 = scalar_select %p323, %s21, 1
      %p325 = scmp.lt.s32.totalorder %s22, 3
      %s326 = scalar_select %p325, %s22, 3
      %p327 = scmp.lt.s32.totalorder %s23, 0
      %s328 = scalar_select %p327, %s23, 0
      %s329 = sadd.s32 %s328, %s326
      %s330 = smul.addr %s324, 4
      %s331 = sadd.s32 %s329, %s330
      %s332 = smul.addr %s331, 4
      %s333 = scalar_lea.vmem %s0, %s332
      %p334 = scmp.lt.s32.totalorder %s21, 1
      %s335 = scalar_select %p334, %s21, 1
      %p336 = scmp.lt.s32.totalorder %s22, 3
      %s337 = scalar_select %p336, %s22, 3
      %p338 = scmp.lt.s32.totalorder %s24, 0
      %s339 = scalar_select %p338, %s24, 0
      %s340 = sadd.s32 %s339, %s337
      %s341 = smul.addr %s335, 4
      %s342 = sadd.s32 %s340, %s341
      %s343 = smul.addr %s342, 4
      %s344 = scalar_lea.vmem %s1, %s343
      %p345 = scmp.lt.s32.totalorder %s21, 1
      %s346 = scalar_select %p345, %s21, 1
      %p347 = scmp.lt.s32.totalorder %s22, 3
      %s348 = scalar_select %p347, %s22, 3
      %p349 = scmp.lt.s32.totalorder %s24, 0
      %s350 = scalar_select %p349, %s24, 0
      %s351 = sadd.s32 %s350, %s348
      %s352 = smul.addr %s346, 4
      %s353 = sadd.s32 %s351, %s352
      %s354 = smul.addr %s353, 4
      %s355 = scalar_lea.vmem %s2, %s354
      %p356 = scmp.lt.s32.totalorder %s21, 1
      %s357 = scalar_select %p356, %s21, 1
      %p358 = scmp.lt.s32.totalorder %s23, 0
      %s359 = scalar_select %p358, %s23, 0
      %s360 = sadd.s32 %s359, %s357
      %s361 = smul.addr %s360, 8
      %s362 = scalar_lea.vmem %s3, %s361
      %p363 = scmp.lt.s32.totalorder %s21, 1
      %s364 = scalar_select %p363, %s21, 1
      %p365 = scmp.lt.s32.totalorder %s22, 3
      %s366 = scalar_select %p365, %s22, 3
      %p367 = scmp.lt.s32.totalorder %s23, 0
      %s368 = scalar_select %p367, %s23, 0
      %s369 = sadd.s32 %s368, %s366
      %s370 = smul.addr %s364, 4
      %s371 = sadd.s32 %s369, %s370
      %s372 = smul.addr %s371, 4
      %s373 = scalar_lea.vmem %s4, %s372
      %p375 = scmp.eq.s32.totalorder %s24, 0
      // Predicated region
      $region37: #{transformer_forward.40} parent=35 // pred_check
        %p376 = pneg %p375
      $region38: #{transformer_forward.40} parent=35 // pred_check_branch
        %378 = sbr.rel (%p376) target = $region40
      $region39: #{transformer_forward.40} parent=35 // pred_region
        %vm379 = vcmask 7168
        %380 = vst.msk [vmem:[#allocation2] sm:$0xff] %vm379, -inf
        %381 = vst.msk [vmem:[#allocation3] sm:$0xff] %vm379, 0.0
        %vm382 = vcmask 64512
        %383 = vst.msk [vmem:[#allocation4] sm:$0xff] %vm382, 0.0
      $region40: #{transformer_forward.40} parent=35 // pred_fallthru
        _
      %v384 = vld [vmem:[%s333] sm:$0xf]
      %v385 = vld [vmem:[%s344] sm:$0xf]
      %vm386 = vcmask 64512
      %v388 = vsel %vm386, %v384, 0
      %v391 = vsel %vm386, %v385, 0
      %393 = vmatpush.bf16.xpose.msra.mxu0 0
      %394 = vmatpush.bf16.xpose.msra.mxu0 0
      %395 = vmatpush.bf16.xpose.msra.mxu0 0
      %396 = vmatpush.bf16.xpose.msra.mxu0 0
      %397 = vmatpush.bf16.xpose.msra.mxu0 0
      %398 = vmatpush.bf16.xpose.msra.mxu0 0
      %399 = vmatpush.bf16.xpose.msra.mxu0 0
      %400 = vmatpush.bf16.xpose.msra.mxu0 %v391
      %401 = vmatmul.bf16.gmra.mxu0 %v388
      %v402 = vpop.f32.mrf.mxu0
      %v403 = vadd.f32 0.0, %v402
      %v404 = vpop.f32.mrf.mxu0
      %405 = vdwg.mxu0
      %v406 = vld [vmem:[%s362] sm:$0xff]
      %vm407 = vcmp.gt.f32.partialorder %v406, 0.0
      %s408 = smul.u32 %s23, 8
      %v409 = vlaneseq
      %v410 = vshrl.u32 %v409, 7
      %v411 = vstv %s408
      %v412 = vadd.s32 %v411, %v410
      %s413 = smul.u32 %s24, 8
      %v414 = vlaneseq
      %v415 = vand.u32 %v414, 127
      %v416 = vstv %s413
      %v417 = vadd.s32 %v416, %v415
      %vm418 = vcmp.ge.s32.totalorder %v412, %v417
      %v419 = vsel %vm407, 1, 0
      %420 = vset.pattern.permute.xlu0 0
      %421 = vperm.xlu0 %420, %v419
      %v422 = vpop.permute.xlu0 %421
      %vm423 = vcmp.eq.s32.totalorder %v422, 1
      %vm424 = vmand %vm423, %vm418
      %v425 = vsel %vm424, %v403, -1e+09
      %v426 = vld [vmem:[#allocation2] sm:$0xff]
      %v427 = vsel %vm386, %v425, -inf
      %428 = vmax.xlane.f32.xlu0 %v427
      %v429 = vpop.xlane.xlu0 %428
      %v430 = vmax.f32 %v426, %v429
      %v431 = vsub.f32 %v426, %v430
      %v432 = vmul.f32 %v431, 1.442695
      %v433 = vpow.pop %v432
      %435 = vset.pattern.permute.xlu0 0
      %436 = vperm.xlu0 %435, %v430
      %v437 = vpop.permute.xlu0 %436
      %v439 = vsub.f32 %v425, %v437
      %v440 = vmul.f32 %v439, 1.442695
      %v441 = vpow.pop %v440
      %v442 = vld [vmem:[#allocation3] sm:$0xff]
      %v443 = vmul.f32 %v433, %v442
      %v444 = vsel %vm386, %v441, 0.0
      %445 = vadd.xlane.f32.xlu0 %v444
      %v446 = vpop.xlane.xlu0 %445
      %v447 = vadd.f32 %v443, %v446
      %vm448 = vcmask 7168
      %449 = vst.msk [vmem:[#allocation3] sm:$0xff] %vm448, %v447
      %v450 = vld [vmem:[#allocation4] sm:$0xff]
      %452 = vset.pattern.permute.xlu0 0
      %453 = vperm.xlu0 %452, %v433
      %v454 = vpop.permute.xlu0 %453
      %v456 = vmul.f32 %v454, %v450
      %v457 = vpack.c.bf16 %v441, %v441
      %v458 = vld [vmem:[%s355] sm:$0xf]
      %v460 = vsel %vm386, %v457, 0
      %vm462 = vcmask 1043456
      %v464 = vsel %vm462, %v458, 0
      %466 = vmatpush.bf16.msra.mxu0 0
      %467 = vmatpush.bf16.msra.mxu0 0
      %468 = vmatpush.bf16.msra.mxu0 0
      %469 = vmatpush.bf16.msra.mxu0 0
      %470 = vmatpush.bf16.msra.mxu0 0
      %471 = vmatpush.bf16.msra.mxu0 0
      %472 = vmatpush.bf16.msra.mxu0 0
      %473 = vmatpush.bf16.msra.mxu0 %v464
      %474 = vmatmul.bf16.gmra.mxu0 %v460
      %v475 = vpop.f32.mrf.mxu0
      %v476 = vadd.f32 0.0, %v475
      %v477 = vpop.f32.mrf.mxu0
      %478 = vdwg.mxu0
      %v479 = vadd.f32 %v456, %v476
      %480 = vst.msk [vmem:[#allocation4] sm:$0xff] %vm386, %v479
      %481 = vst.msk [vmem:[#allocation2] sm:$0xff] %vm448, %v430
      // Predicated region
      $region41: #{transformer_forward.40} parent=35 // pred_check
        %p482 = pneg %p375
      $region42: #{transformer_forward.40} parent=35 // pred_check_branch
        %484 = sbr.rel (%p482) target = $region44
      $region43: #{transformer_forward.40} parent=35 // pred_region
        %v485 = vld [vmem:[#allocation4] sm:$0xff]
        %v486 = vld [vmem:[#allocation3] sm:$0xff]
        %v487 = vrcp.pop %v486
        %489 = vset.pattern.permute.xlu0 0
        %490 = vperm.xlu0 %489, %v487
        %v491 = vpop.permute.xlu0 %490
        %v493 = vmul.f32 %v485, %v491
        %v494 = vpack.c.bf16 %v493, %v493
        %vm495 = vcmask 60416
        %496 = vst.msk [vmem:[%s373] sm:$0xf] %vm495, %v494
      $region44: #{transformer_forward.40} parent=35 // pred_fallthru
        _
      %p497 = scmp.lt.s32.totalorder %s21, 1
      %s498 = scalar_select %p497, %s21, 1
      %p499 = scmp.lt.s32.totalorder %s22, 3
      %s500 = scalar_select %p499, %s22, 3
      %p501 = scmp.lt.s32.totalorder %s23, 0
      %s502 = scalar_select %p501, %s23, 0
      %s503 = sadd.s32 %s502, %s500
      %s504 = smul.addr %s498, 4
      %s505 = sadd.s32 %s503, %s504
      %s506 = smul.addr %s505, 4
      %s507 = scalar_lea.vmem %s4, %s506
      // Predicated region
      $region45: #{transformer_forward.40} parent=35 // pred_check
        %p508 = pneg %p181
      $region46: #{transformer_forward.40} parent=35 // pred_check_branch
        %510 = sbr.rel (%p508) target = $region48
      $region47: #{transformer_forward.40} parent=35 // pred_region
        _
      $region48: #{transformer_forward.40} parent=35 // pred_fallthru
        _
    $region36: #{transformer_forward.40} parent=5 // pred_fallthru
      _
    %p511 = scmp.le.s32.totalorder 2, %s10
    // Predicated region
    $region49: #{transformer_forward.40} parent=5 // pred_check
      %p512 = pneg %p511
    $region50: #{transformer_forward.40} parent=5 // pred_check_branch
      %514 = sbr.rel (%p512) target = $region52
    $region51: #{transformer_forward.40} parent=5 // pred_region
      %s515 = ssub.s32 %s10, 2
      // Predicated region
      $region53: #{transformer_forward.40} parent=51 // pred_check
        %p516 = pneg %p187
      $region54: #{transformer_forward.40} parent=51 // pred_check_branch
        %518 = sbr.rel (%p516) target = $region56
      $region55: #{transformer_forward.40} parent=51 // pred_region
        %p519 = scmp.lt.s32.totalorder %s25, 1
        %s520 = scalar_select %p519, %s25, 1
        %p521 = scmp.lt.s32.totalorder %s26, 3
        %s522 = scalar_select %p521, %s26, 3
        %p523 = scmp.lt.s32.totalorder %s27, 0
        %s524 = scalar_select %p523, %s27, 0
        %s525 = sadd.s32 %s524, %s522
        %s526 = smul.addr %s520, 4
        %s527 = sadd.s32 %s525, %s526
        %s528 = smul.addr %s527, 4
        %s529 = scalar_lea.vmem %s4, %s528
      $region56: #{transformer_forward.40} parent=51 // pred_fallthru
        _
    $region52: #{transformer_forward.40} parent=5 // pred_fallthru
      _
  $region6: #{transformer_forward.40} parent=0 // loop_footer
    %s14 = sadd.s32 1, %s10
  $region7: #{transformer_forward.40} parent=0 // loop_footer_branch
    %9 = sbr.rel target = $region3
  $region8: #{transformer_forward.40} parent=0 // loop_exit
    _

// kernel: transformer_forward.41
$region0: #{transformer_forward.41}
  #allocation0 [shape = 'u32[]', space=smem, size = 0x4, offset = 0x4, fixed_abs, tag = 'smem constant byte address 0x4 - core index']
  #allocation1 [shape = 'u32[72,128]{1,0:T(1,128)}', space=vmem, size = 0x9000, scoped, tag = 'internal scratch']
  #allocation2 [shape = 'f32[16,32]{1,0:T(8,128)}', space=vmem, size = 0x2000, scoped, tag = 'scratch operand']
  %s0 = inlined_call_operand.vmem [shape: bf16[16,32], index: 0, kind: input, shape index: {}]
  %s1 = inlined_call_operand.vmem [shape: bf16[32,32], index: 1, kind: input, shape index: {}]
  %s2 = inlined_call_operand.vmem [shape: f32[1,32], index: 2, kind: input, shape index: {}]
  %s3 = inlined_call_operand.vmem [shape: bf16[16,32], index: 3, kind: input, shape index: {}]
  %s4 = inlined_call_operand.vmem [shape: f32[1,32], index: 4, kind: input, shape index: {}]
  %s5 = inlined_call_operand.vmem [shape: f32[1,32], index: 5, kind: input, shape index: {}]
  %s6 = inlined_call_operand.vmem [shape: bf16[16,32], index: 6, kind: output, shape index: {}]
  %s7 = sld [smem:[#allocation0]]
  $region42: #{transformer_forward.41} parent=0
    _
  %s9 = ssub.s32 1, %s7
  %s10 = scalar_select 0, %s9, %s7
  // Predicated region
  $region2: #{transformer_forward.41} parent=0 // pred_check
    _
  $region3: #{transformer_forward.41} parent=0 // pred_check_branch
    %12 = sbr.rel (0) target = $region5
  $region4: #{transformer_forward.41} parent=0 // pred_region
    _
  $region5: #{transformer_forward.41} parent=0 // pred_fallthru
    _
  // Predicated region
  $region6: #{transformer_forward.41} parent=0 // pred_check
    _
  $region7: #{transformer_forward.41} parent=0 // pred_check_branch
    %14 = sbr.rel (0) target = $region9
  $region8: #{transformer_forward.41} parent=0 // pred_region
    _
  $region9: #{transformer_forward.41} parent=0 // pred_fallthru
    _
  // Predicated region
  $region10: #{transformer_forward.41} parent=0 // pred_check
    _
  $region11: #{transformer_forward.41} parent=0 // pred_check_branch
    %16 = sbr.rel (0) target = $region13
  $region12: #{transformer_forward.41} parent=0 // pred_region
    _
  $region13: #{transformer_forward.41} parent=0 // pred_fallthru
    _
  // Predicated region
  $region14: #{transformer_forward.41} parent=0 // pred_check
    _
  $region15: #{transformer_forward.41} parent=0 // pred_check_branch
    %18 = sbr.rel (0) target = $region17
  $region16: #{transformer_forward.41} parent=0 // pred_region
    _
  $region17: #{transformer_forward.41} parent=0 // pred_fallthru
    _
  // Predicated region
  $region18: #{transformer_forward.41} parent=0 // pred_check
    _
  $region19: #{transformer_forward.41} parent=0 // pred_check_branch
    %20 = sbr.rel (0) target = $region21
  $region20: #{transformer_forward.41} parent=0 // pred_region
    _
  $region21: #{transformer_forward.41} parent=0 // pred_fallthru
    _
  // Predicated region
  $region22: #{transformer_forward.41} parent=0 // pred_check
    _
  $region23: #{transformer_forward.41} parent=0 // pred_check_branch
    %22 = sbr.rel (0) target = $region25
  $region24: #{transformer_forward.41} parent=0 // pred_region
    _
  $region25: #{transformer_forward.41} parent=0 // pred_fallthru
    _
  %p24 = scmp.eq.s32.totalorder 0, 0
  // Predicated region
  $region26: #{transformer_forward.41} parent=0 // pred_check
    %p25 = pneg %p24
  $region27: #{transformer_forward.41} parent=0 // pred_check_branch
    %27 = sbr.rel (%p25) target = $region29
  $region28: #{transformer_forward.41} parent=0 // pred_region
    %vm28 = vcmask 261120
    %29 = vst.msk [vmem:[#allocation2] sm:$0xff] %vm28, 0.0
    %30 = vst.msk [vmem:[#allocation2 + $0x8] sm:$0xff] %vm28, 0.0
  $region29: #{transformer_forward.41} parent=0 // pred_fallthru
    _
  %v31 = vld [vmem:[#allocation2] sm:$0xff]
  %v32 = vld [vmem:[#allocation2 + $0x8] sm:$0xff]
  %v33 = vld [vmem:[%s0] sm:$0xf]
  %v34 = vld [vmem:[%s0 + $0x4] sm:$0xf]
  %v35 = vld [vmem:[%s1] sm:$0xf]
  %v36 = vld [vmem:[%s1 + $0x4] sm:$0xf]
  %v37 = vld [vmem:[%s1 + $0x8] sm:$0xf]
  %v38 = vld [vmem:[%s1 + $0xc] sm:$0xf]
  %v41 = vunpack.c.l.b16 %v33
  %v42 = vunpack.c.l.b16 %v34
  %v43 = vpack.c.b16 %v42, %v41
  %v48 = vunpack.c.l.b16 %v35
  %v49 = vunpack.c.l.b16 %v36
  %v50 = vunpack.c.l.b16 %v37
  %v51 = vunpack.c.l.b16 %v38
  %v52 = vpack.c.b16 %v49, %v48
  %v53 = vpack.c.b16 %v51, %v50
  %vm56 = vcmask 261120
  %v58 = vsel %vm56, %v43, 0
  %60 = vmatpush.bf16.msra.mxu0 0
  %61 = vmatpush.bf16.msra.mxu0 0
  %62 = vmatpush.bf16.msra.mxu0 0
  %63 = vmatpush.bf16.msra.mxu0 0
  %64 = vmatpush.bf16.msra.mxu0 0
  %65 = vmatpush.bf16.msra.mxu0 0
  %66 = vmatpush.bf16.msra.mxu0 %v53
  %67 = vmatpush.bf16.msra.mxu0 %v52
  %68 = vmatmul.bf16.gmra.mxu0 %v58
  %v69 = vpop.f32.mrf.mxu0
  %v70 = vadd.f32 0.0, %v69
  %v71 = vpop.f32.mrf.mxu0
  %v72 = vadd.f32 0.0, %v71
  %73 = vdwg.mxu0
  %v74 = vadd.f32 %v31, %v70
  %v75 = vadd.f32 %v32, %v72
  %76 = vst.msk [vmem:[#allocation2] sm:$0xff] %vm56, %v74
  %77 = vst.msk [vmem:[#allocation2 + $0x8] sm:$0xff] %vm56, %v75
  // Predicated region
  $region30: #{transformer_forward.41} parent=0 // pred_check
    %p78 = pneg %p24
  $region31: #{transformer_forward.41} parent=0 // pred_check_branch
    %80 = sbr.rel (%p78) target = $region33
  $region32: #{transformer_forward.41} parent=0 // pred_region
    %v81 = vld [vmem:[#allocation2] sm:$0xff]
    %v82 = vld [vmem:[#allocation2 + $0x8] sm:$0xff]
    %v83 = vld [vmem:[%s2] sm:$0x1]
    %v85 = vperm.slane %v83, 0
    %v87 = vadd.f32 %v81, %v85
    %v88 = vadd.f32 %v82, %v85
    %v89 = vld [vmem:[%s3] sm:$0xf]
    %v90 = vld [vmem:[%s3 + $0x4] sm:$0xf]
    %v91 = vunpack.c.l.bf16 %v89
    %v92 = vunpack.c.l.bf16 %v90
    %v93 = vadd.f32 %v87, %v91
    %v94 = vadd.f32 %v88, %v92
    %v95 = vsel %vm56, %v93, 0.0
    %96 = vadd.xlane.f32.xlu0 %v95
    %v97 = vpop.xlane.xlu0 %96
    %v98 = vsel %vm56, %v94, 0.0
    %99 = vadd.xlane.f32.xlu0 %v98
    %v100 = vpop.xlane.xlu0 %99
    %v101 = vrcp.pop 32.0
    %v102 = vmul.f32 32.0, %v101
    %v103 = vsub.f32 1.0, %v102
    %v104 = vmul.f32 %v101, %v103
    %v105 = vadd.f32 %v101, %v104
    %vm106 = vweird.f32 %v101
    %v107 = vsel %vm106, %v101, %v105
    %v108 = vmul.f32 %v97, %v107
    %v109 = vmul.f32 %v100, %v107
    %v110 = vsub.f32 %v93, %v108
    %v111 = vsub.f32 %v94, %v109
    %v112 = vmul.f32 %v110, %v110
    %v113 = vmul.f32 %v111, %v111
    %v114 = vsel %vm56, %v112, 0.0
    %115 = vadd.xlane.f32.xlu0 %v114
    %v116 = vpop.xlane.xlu0 %115
    %v117 = vsel %vm56, %v113, 0.0
    %118 = vadd.xlane.f32.xlu0 %v117
    %v119 = vpop.xlane.xlu0 %118
    %v120 = vmul.f32 %v116, %v107
    %v121 = vmul.f32 %v119, %v107
    %v122 = vadd.f32 %v120, 1e-05
    %v123 = vadd.f32 %v121, 1e-05
    %v124 = vrsqrt.pop %v122
    %v125 = vmul.f32 %v124, %v122
    %v126 = vmul.f32 %v125, %v124
    %v127 = vmul.f32 0.5, %v126
    %v128 = vsub.f32 1.5, %v127
    %v129 = vmul.f32 %v124, %v128
    %vm130 = vweird.f32 %v122
    %vm131 = vweird.f32 %v124
    %vm132 = vmor %vm130, %vm131
    %v133 = vsel %vm132, %v124, %v129
    %v134 = vrsqrt.pop %v123
    %v135 = vmul.f32 %v134, %v123
    %v136 = vmul.f32 %v135, %v134
    %v137 = vmul.f32 0.5, %v136
    %v138 = vsub.f32 1.5, %v137
    %v139 = vmul.f32 %v134, %v138
    %vm140 = vweird.f32 %v123
    %vm141 = vweird.f32 %v134
    %vm142 = vmor %vm140, %vm141
    %v143 = vsel %vm142, %v134, %v139
    %v144 = vmul.f32 %v110, %v133
    %v145 = vmul.f32 %v111, %v143
    %v146 = vld [vmem:[%s4] sm:$0x1]
    %v148 = vperm.slane %v146, 0
    %v150 = vmul.f32 %v144, %v148
    %v151 = vmul.f32 %v145, %v148
    %v152 = vld [vmem:[%s5] sm:$0x1]
    %v154 = vperm.slane %v152, 0
    %v156 = vadd.f32 %v150, %v154
    %v157 = vadd.f32 %v151, %v154
    %v158 = vpack.c.bf16 %v156, %v156
    %v159 = vpack.c.bf16 %v157, %v157
    %vm160 = vcmask 257024
    %161 = vst.msk [vmem:[%s6] sm:$0xf] %vm160, %v158
    %162 = vst.msk [vmem:[%s6 + $0x4] sm:$0xf] %vm160, %v159
  $region33: #{transformer_forward.41} parent=0 // pred_fallthru
    _
  // Predicated region
  $region34: #{transformer_forward.41} parent=0 // pred_check
    _
  $region35: #{transformer_forward.41} parent=0 // pred_check_branch
    %164 = sbr.rel (0) target = $region37
  $region36: #{transformer_forward.41} parent=0 // pred_region
    _
  $region37: #{transformer_forward.41} parent=0 // pred_fallthru
    _
  // Predicated region
  $region38: #{transformer_forward.41} parent=0 // pred_check
    _
  $region39: #{transformer_forward.41} parent=0 // pred_check_branch
    %166 = sbr.rel (0) target = $region41
  $region40: #{transformer_forward.41} parent=0 // pred_region
    _
  $region41: #{transformer_forward.41} parent=0 // pred_fallthru
    _

// kernel: transformer_forward.42
$region0: #{transformer_forward.42}
  #allocation0 [shape = 'u32[]', space=smem, size = 0x4, offset = 0x4, fixed_abs, tag = 'smem constant byte address 0x4 - core index']
  #allocation1 [shape = 'u32[72,128]{1,0:T(1,128)}', space=vmem, size = 0x9000, scoped, tag = 'internal scratch']
  #allocation2 [shape = 'f32[16,32]{1,0:T(8,128)}', space=vmem, size = 0x2000, scoped, tag = 'scratch operand']
  %s0 = inlined_call_operand.vmem [shape: bf16[16,32], index: 0, kind: input, shape index: {}]
  %s1 = inlined_call_operand.vmem [shape: bf16[32,32], index: 1, kind: input, shape index: {}]
  %s2 = inlined_call_operand.vmem [shape: f32[1,32], index: 2, kind: input, shape index: {}]
  %s3 = inlined_call_operand.vmem [shape: bf16[16,32], index: 3, kind: output, shape index: {}]
  %s4 = sld [smem:[#allocation0]]
  $region30: #{transformer_forward.42} parent=0
    _
  %s6 = ssub.s32 1, %s4
  %s7 = scalar_select 0, %s6, %s4
  // Predicated region
  $region2: #{transformer_forward.42} parent=0 // pred_check
    _
  $region3: #{transformer_forward.42} parent=0 // pred_check_branch
    %9 = sbr.rel (0) target = $region5
  $region4: #{transformer_forward.42} parent=0 // pred_region
    _
  $region5: #{transformer_forward.42} parent=0 // pred_fallthru
    _
  // Predicated region
  $region6: #{transformer_forward.42} parent=0 // pred_check
    _
  $region7: #{transformer_forward.42} parent=0 // pred_check_branch
    %11 = sbr.rel (0) target = $region9
  $region8: #{transformer_forward.42} parent=0 // pred_region
    _
  $region9: #{transformer_forward.42} parent=0 // pred_fallthru
    _
  // Predicated region
  $region10: #{transformer_forward.42} parent=0 // pred_check
    _
  $region11: #{transformer_forward.42} parent=0 // pred_check_branch
    %13 = sbr.rel (0) target = $region13
  $region12: #{transformer_forward.42} parent=0 // pred_region
    _
  $region13: #{transformer_forward.42} parent=0 // pred_fallthru
    _
  %p15 = scmp.eq.s32.totalorder 0, 0
  // Predicated region
  $region14: #{transformer_forward.42} parent=0 // pred_check
    %p16 = pneg %p15
  $region15: #{transformer_forward.42} parent=0 // pred_check_branch
    %18 = sbr.rel (%p16) target = $region17
  $region16: #{transformer_forward.42} parent=0 // pred_region
    %vm19 = vcmask 261120
    %20 = vst.msk [vmem:[#allocation2] sm:$0xff] %vm19, 0.0
    %21 = vst.msk [vmem:[#allocation2 + $0x8] sm:$0xff] %vm19, 0.0
  $region17: #{transformer_forward.42} parent=0 // pred_fallthru
    _
  %v22 = vld [vmem:[#allocation2] sm:$0xff]
  %v23 = vld [vmem:[#allocation2 + $0x8] sm:$0xff]
  %v24 = vld [vmem:[%s0] sm:$0xf]
  %v25 = vld [vmem:[%s0 + $0x4] sm:$0xf]
  %v26 = vld [vmem:[%s1] sm:$0xf]
  %v27 = vld [vmem:[%s1 + $0x4] sm:$0xf]
  %v28 = vld [vmem:[%s1 + $0x8] sm:$0xf]
  %v29 = vld [vmem:[%s1 + $0xc] sm:$0xf]
  %v32 = vunpack.c.l.b16 %v24
  %v33 = vunpack.c.l.b16 %v25
  %v34 = vpack.c.b16 %v33, %v32
  %v39 = vunpack.c.l.b16 %v26
  %v40 = vunpack.c.l.b16 %v27
  %v41 = vunpack.c.l.b16 %v28
  %v42 = vunpack.c.l.b16 %v29
  %v43 = vpack.c.b16 %v40, %v39
  %v44 = vpack.c.b16 %v42, %v41
  %vm47 = vcmask 261120
  %v49 = vsel %vm47, %v34, 0
  %51 = vmatpush.bf16.msra.mxu0 0
  %52 = vmatpush.bf16.msra.mxu0 0
  %53 = vmatpush.bf16.msra.mxu0 0
  %54 = vmatpush.bf16.msra.mxu0 0
  %55 = vmatpush.bf16.msra.mxu0 0
  %56 = vmatpush.bf16.msra.mxu0 0
  %57 = vmatpush.bf16.msra.mxu0 %v44
  %58 = vmatpush.bf16.msra.mxu0 %v43
  %59 = vmatmul.bf16.gmra.mxu0 %v49
  %v60 = vpop.f32.mrf.mxu0
  %v61 = vadd.f32 0.0, %v60
  %v62 = vpop.f32.mrf.mxu0
  %v63 = vadd.f32 0.0, %v62
  %64 = vdwg.mxu0
  %v65 = vadd.f32 %v22, %v61
  %v66 = vadd.f32 %v23, %v63
  %67 = vst.msk [vmem:[#allocation2] sm:$0xff] %vm47, %v65
  %68 = vst.msk [vmem:[#allocation2 + $0x8] sm:$0xff] %vm47, %v66
  // Predicated region
  $region18: #{transformer_forward.42} parent=0 // pred_check
    %p69 = pneg %p15
  $region19: #{transformer_forward.42} parent=0 // pred_check_branch
    %71 = sbr.rel (%p69) target = $region21
  $region20: #{transformer_forward.42} parent=0 // pred_region
    %v72 = vld [vmem:[#allocation2] sm:$0xff]
    %v73 = vld [vmem:[#allocation2 + $0x8] sm:$0xff]
    %v74 = vld [vmem:[%s2] sm:$0x1]
    %v76 = vperm.slane %v74, 0
    %v78 = vadd.f32 %v72, %v76
    %v79 = vadd.f32 %v73, %v76
    %v80 = vpack.c.bf16 %v78, %v78
    %v81 = vpack.c.bf16 %v79, %v79
    %vm82 = vcmask 257024
    %83 = vst.msk [vmem:[%s3] sm:$0xf] %vm82, %v80
    %84 = vst.msk [vmem:[%s3 + $0x4] sm:$0xf] %vm82, %v81
  $region21: #{transformer_forward.42} parent=0 // pred_fallthru
    _
  // Predicated region
  $region22: #{transformer_forward.42} parent=0 // pred_check
    _
  $region23: #{transformer_forward.42} parent=0 // pred_check_branch
    %86 = sbr.rel (0) target = $region25
  $region24: #{transformer_forward.42} parent=0 // pred_region
    _
  $region25: #{transformer_forward.42} parent=0 // pred_fallthru
    _
  // Predicated region
  $region26: #{transformer_forward.42} parent=0 // pred_check
    _
  $region27: #{transformer_forward.42} parent=0 // pred_check_branch
    %88 = sbr.rel (0) target = $region29
  $region28: #{transformer_forward.42} parent=0 // pred_region
    _
  $region29: #{transformer_forward.42} parent=0 // pred_fallthru
    _

// kernel: transformer_forward.30
$region0: #{transformer_forward.30}
  #allocation0 [shape = 'u32[]', space=smem, size = 0x4, offset = 0x4, fixed_abs, tag = 'smem constant byte address 0x4 - core index']
  #allocation1 [shape = 'u32[72,128]{1,0:T(1,128)}', space=vmem, size = 0x9000, scoped, tag = 'internal scratch']
  #allocation2 [shape = 'f32[8,1]{1,0:T(8,128)}', space=vmem, size = 0x1000, scoped, tag = 'scratch operand']
  #allocation3 [shape = 'f32[8,1]{1,0:T(8,128)}', space=vmem, size = 0x1000, scoped, tag = 'scratch operand']
  #allocation4 [shape = 'f32[8,8]{1,0:T(8,128)}', space=vmem, size = 0x1000, scoped, tag = 'scratch operand']
  %s0 = inlined_call_operand.vmem [shape: bf16[2,4,8,8], index: 0, kind: input, shape index: {}]
  %s1 = inlined_call_operand.vmem [shape: bf16[2,4,8,8], index: 1, kind: input, shape index: {}]
  %s2 = inlined_call_operand.vmem [shape: bf16[2,4,8,8], index: 2, kind: input, shape index: {}]
  %s3 = inlined_call_operand.vmem [shape: f32[2,1,8], index: 3, kind: input, shape index: {}]
  %s4 = inlined_call_operand.vmem [shape: bf16[2,4,8,8], index: 4, kind: output, shape index: {}]
  %s5 = sld [smem:[#allocation0]]
  $region57: #{transformer_forward.30} parent=0
    _
  %s7 = ssub.s32 1, %s5
  %s8 = scalar_select 0, %s7, %s5
  loop: start=0, step=1, limit=10
  $region2: #{transformer_forward.30} parent=0 // loop_pre_header
    _
  $region3: #{transformer_forward.30} parent=0 // loop_header
    %s10 = sphi 0, %s14
    %p11 = scmp.ge.s32.totalorder %s10, 10
    %s17 = sphi 0, %s43
    %s18 = sphi 0, %s39
    %s19 = sphi 0, %s35
    %s20 = sphi 0, %s31
    %s21 = sphi 0, %s17
    %s22 = sphi 0, %s18
    %s23 = sphi 0, %s19
    %s24 = sphi 0, %s20
    %s25 = sphi 0, %s21
    %s26 = sphi 0, %s22
    %s27 = sphi 0, %s23
    %s28 = sphi 0, %s24
    %s50 = sphi 0, %s52
    %s53 = sphi 0, %s50
    %s54 = sphi 0, %s53
    %s70 = sphi 0, %s54
    %s80 = sphi 0, %s82
    %s83 = sphi 0, %s80
    %s84 = sphi 0, %s83
    %s100 = sphi 0, %s84
    %s110 = sphi 0, %s112
    %s113 = sphi 0, %s110
    %s114 = sphi 0, %s113
    %s130 = sphi 0, %s114
    %s138 = sphi 0, %s140
    %s141 = sphi 0, %s138
    %s142 = sphi 0, %s141
    %s158 = sphi 0, %s142
    %s168 = sphi 0, %s170
    %s171 = sphi 0, %s168
    %s172 = sphi 0, %s171
    %s188 = sphi 0, %s172
  $region4: #{transformer_forward.30} parent=0 // loop_header_branch
    %13 = sbr.rel (%p11) target = $region8
  $region5: #{transformer_forward.30} parent=0 // loop_body
    %s15 = ssub.s32 %s10, 1
    %s16 = ssub.s32 %s10, 2
    %s29 = sadd.s32 1, %s20
    %p30 = scmp.ge.s32.totalorder %s29, 1
    %s31 = scalar_select %p30, 0, %s29
    %s32 = sadd.s32 1, %s19
    %s33 = scalar_select %p30, %s32, %s19
    %p34 = scmp.ge.s32.totalorder %s33, 1
    %s35 = scalar_select %p34, 0, %s33
    %s36 = sadd.s32 1, %s18
    %s37 = scalar_select %p34, %s36, %s18
    %p38 = scmp.ge.s32.totalorder %s37, 4
    %s39 = scalar_select %p38, 0, %s37
    %s40 = sadd.s32 1, %s17
    %s41 = scalar_select %p38, %s40, %s17
    %p42 = scmp.ge.s32.totalorder %s41, 2
    %s43 = scalar_select %p42, 0, %s41
    %s44 = ssub.s32 %s17, %s43
    %s45 = ssub.s32 %s18, %s39
    %s46 = sor.u32 %s44, %s45
    %s47 = ssub.s32 %s19, %s35
    %s48 = sor.u32 %s46, %s47
    %p49 = scmp.eq.s32.totalorder %s48, 0
    %s51 = sadd.s32 %s50, 1
    %s52 = scalar_select %p49, %s50, %s51
    %p55 = pneg %p49
    %p56 = scmp.eq.s32.totalorder %s10, 7
    %p57 = por %p55, %p56
    %p58 = scmp.ne.s32.totalorder %s50, %s53
    %p59 = scmp.eq.s32.totalorder %s10, 0
    %p60 = por %p58, %p59
    %p61 = scmp.ne.s32.totalorder %s50, %s53
    %p62 = scmp.eq.s32.totalorder %s15, 7
    %p63 = por %p61, %p62
    %p64 = scmp.ne.s32.totalorder %s53, %s54
    %p65 = scmp.eq.s32.totalorder %s15, 0
    %p66 = por %p64, %p65
    %p67 = scmp.ne.s32.totalorder %s53, %s54
    %p68 = scmp.eq.s32.totalorder %s16, 7
    %p69 = por %p67, %p68
    %p71 = scmp.ne.s32.totalorder %s54, %s70
    %p72 = scmp.eq.s32.totalorder %s16, 0
    %p73 = por %p71, %p72
    %s74 = ssub.s32 %s17, %s43
    %s75 = ssub.s32 %s18, %s39
    %s76 = sor.u32 %s74, %s75
    %s77 = ssub.s32 %s20, %s31
    %s78 = sor.u32 %s76, %s77
    %p79 = scmp.eq.s32.totalorder %s78, 0
    %s81 = sadd.s32 %s80, 1
    %s82 = scalar_select %p79, %s80, %s81
    %p85 = pneg %p79
    %p86 = scmp.eq.s32.totalorder %s10, 7
    %p87 = por %p85, %p86
    %p88 = scmp.ne.s32.totalorder %s80, %s83
    %p89 = scmp.eq.s32.totalorder %s10, 0
    %p90 = por %p88, %p89
    %p91 = scmp.ne.s32.totalorder %s80, %s83
    %p92 = scmp.eq.s32.totalorder %s15, 7
    %p93 = por %p91, %p92
    %p94 = scmp.ne.s32.totalorder %s83, %s84
    %p95 = scmp.eq.s32.totalorder %s15, 0
    %p96 = por %p94, %p95
    %p97 = scmp.ne.s32.totalorder %s83, %s84
    %p98 = scmp.eq.s32.totalorder %s16, 7
    %p99 = por %p97, %p98
    %p101 = scmp.ne.s32.totalorder %s84, %s100
    %p102 = scmp.eq.s32.totalorder %s16, 0
    %p103 = por %p101, %p102
    %s104 = ssub.s32 %s17, %s43
    %s105 = ssub.s32 %s18, %s39
    %s106 = sor.u32 %s104, %s105
    %s107 = ssub.s32 %s20, %s31
    %s108 = sor.u32 %s106, %s107
    %p109 = scmp.eq.s32.totalorder %s108, 0
    %s111 = sadd.s32 %s110, 1
    %s112 = scalar_select %p109, %s110, %s111
    %p115 = pneg %p109
    %p116 = scmp.eq.s32.totalorder %s10, 7
    %p117 = por %p115, %p116
    %p118 = scmp.ne.s32.totalorder %s110, %s113
    %p119 = scmp.eq.s32.totalorder %s10, 0
    %p120 = por %p118, %p119
    %p121 = scmp.ne.s32.totalorder %s110, %s113
    %p122 = scmp.eq.s32.totalorder %s15, 7
    %p123 = por %p121, %p122
    %p124 = scmp.ne.s32.totalorder %s113, %s114
    %p125 = scmp.eq.s32.totalorder %s15, 0
    %p126 = por %p124, %p125
    %p127 = scmp.ne.s32.totalorder %s113, %s114
    %p128 = scmp.eq.s32.totalorder %s16, 7
    %p129 = por %p127, %p128
    %p131 = scmp.ne.s32.totalorder %s114, %s130
    %p132 = scmp.eq.s32.totalorder %s16, 0
    %p133 = por %p131, %p132
    %s134 = ssub.s32 %s17, %s43
    %s135 = ssub.s32 %s20, %s31
    %s136 = sor.u32 %s134, %s135
    %p137 = scmp.eq.s32.totalorder %s136, 0
    %s139 = sadd.s32 %s138, 1
    %s140 = scalar_select %p137, %s138, %s139
    %p143 = pneg %p137
    %p144 = scmp.eq.s32.totalorder %s10, 7
    %p145 = por %p143, %p144
    %p146 = scmp.ne.s32.totalorder %s138, %s141
    %p147 = scmp.eq.s32.totalorder %s10, 0
    %p148 = por %p146, %p147
    %p149 = scmp.ne.s32.totalorder %s138, %s141
    %p150 = scmp.eq.s32.totalorder %s15, 7
    %p151 = por %p149, %p150
    %p152 = scmp.ne.s32.totalorder %s141, %s142
    %p153 = scmp.eq.s32.totalorder %s15, 0
    %p154 = por %p152, %p153
    %p155 = scmp.ne.s32.totalorder %s141, %s142
    %p156 = scmp.eq.s32.totalorder %s16, 7
    %p157 = por %p155, %p156
    %p159 = scmp.ne.s32.totalorder %s142, %s158
    %p160 = scmp.eq.s32.totalorder %s16, 0
    %p161 = por %p159, %p160
    %s162 = ssub.s32 %s17, %s43
    %s163 = ssub.s32 %s18, %s39
    %s164 = sor.u32 %s162, %s163
    %s165 = ssub.s32 %s19, %s35
    %s166 = sor.u32 %s164, %s165
    %p167 = scmp.eq.s32.totalorder %s166, 0
    %s169 = sadd.s32 %s168, 1
    %s170 = scalar_select %p167, %s168, %s169
    %p173 = pneg %p167
    %p174 = scmp.eq.s32.totalorder %s10, 7
    %p175 = por %p173, %p174
    %p176 = scmp.ne.s32.totalorder %s168, %s171
    %p177 = scmp.eq.s32.totalorder %s10, 0
    %p178 = por %p176, %p177
    %p179 = scmp.ne.s32.totalorder %s168, %s171
    %p180 = scmp.eq.s32.totalorder %s15, 7
    %p181 = por %p179, %p180
    %p182 = scmp.ne.s32.totalorder %s171, %s172
    %p183 = scmp.eq.s32.totalorder %s15, 0
    %p184 = por %p182, %p183
    %p185 = scmp.ne.s32.totalorder %s171, %s172
    %p186 = scmp.eq.s32.totalorder %s16, 7
    %p187 = por %p185, %p186
    %p189 = scmp.ne.s32.totalorder %s172, %s188
    %p190 = scmp.eq.s32.totalorder %s16, 0
    %p191 = por %p189, %p190
    %p192 = scmp.le.s32.totalorder 1, %s10
    %p193 = scmp.lt.s32.totalorder %s10, 9
    %p194 = pnand %p192, %p193
    %p195 = pneg %p194
    // Predicated region
    $region9: #{transformer_forward.30} parent=5 // pred_check
      _
    $region10: #{transformer_forward.30} parent=5 // pred_check_branch
      %197 = sbr.rel (%p194) target = $region12
    $region11: #{transformer_forward.30} parent=5 // pred_region
      %s198 = ssub.s32 %s10, 1
    $region12: #{transformer_forward.30} parent=5 // pred_fallthru
      _
    %p199 = scmp.lt.s32.totalorder %s10, 8
    // Predicated region
    $region13: #{transformer_forward.30} parent=5 // pred_check
      %p200 = pneg %p199
    $region14: #{transformer_forward.30} parent=5 // pred_check_branch
      %202 = sbr.rel (%p200) target = $region16
    $region15: #{transformer_forward.30} parent=5 // pred_region
      // Predicated region
      $region17: #{transformer_forward.30} parent=15 // pred_check
        %p203 = pneg %p60
      $region18: #{transformer_forward.30} parent=15 // pred_check_branch
        %205 = sbr.rel (%p203) target = $region20
      $region19: #{transformer_forward.30} parent=15 // pred_region
        %p206 = scmp.lt.s32.totalorder %s17, 1
        %s207 = scalar_select %p206, %s17, 1
        %p208 = scmp.lt.s32.totalorder %s18, 3
        %s209 = scalar_select %p208, %s18, 3
        %p210 = scmp.lt.s32.totalorder %s19, 0
        %s211 = scalar_select %p210, %s19, 0
        %s212 = sadd.s32 %s211, %s209
        %s213 = smul.addr %s207, 4
        %s214 = sadd.s32 %s212, %s213
        %s215 = smul.addr %s214, 4
        %s216 = scalar_lea.vmem %s0, %s215
      $region20: #{transformer_forward.30} parent=15 // pred_fallthru
        _
      // Predicated region
      $region21: #{transformer_forward.30} parent=15 // pred_check
        %p217 = pneg %p90
      $region22: #{transformer_forward.30} parent=15 // pred_check_branch
        %219 = sbr.rel (%p217) target = $region24
      $region23: #{transformer_forward.30} parent=15 // pred_region
        %p220 = scmp.lt.s32.totalorder %s17, 1
        %s221 = scalar_select %p220, %s17, 1
        %p222 = scmp.lt.s32.totalorder %s18, 3
        %s223 = scalar_select %p222, %s18, 3
        %p224 = scmp.lt.s32.totalorder %s20, 0
        %s225 = scalar_select %p224, %s20, 0
        %s226 = sadd.s32 %s225, %s223
        %s227 = smul.addr %s221, 4
        %s228 = sadd.s32 %s226, %s227
        %s229 = smul.addr %s228, 4
        %s230 = scalar_lea.vmem %s1, %s229
      $region24: #{transformer_forward.30} parent=15 // pred_fallthru
        _
      // Predicated region
      $region25: #{transformer_forward.30} parent=15 // pred_check
        %p231 = pneg %p120
      $region26: #{transformer_forward.30} parent=15 // pred_check_branch
        %233 = sbr.rel (%p231) target = $region28
      $region27: #{transformer_forward.30} parent=15 // pred_region
        %p234 = scmp.lt.s32.totalorder %s17, 1
        %s235 = scalar_select %p234, %s17, 1
        %p236 = scmp.lt.s32.totalorder %s18, 3
        %s237 = scalar_select %p236, %s18, 3
        %p238 = scmp.lt.s32.totalorder %s20, 0
        %s239 = scalar_select %p238, %s20, 0
        %s240 = sadd.s32 %s239, %s237
        %s241 = smul.addr %s235, 4
        %s242 = sadd.s32 %s240, %s241
        %s243 = smul.addr %s242, 4
        %s244 = scalar_lea.vmem %s2, %s243
      $region28: #{transformer_forward.30} parent=15 // pred_fallthru
        _
      // Predicated region
      $region29: #{transformer_forward.30} parent=15 // pred_check
        %p245 = pneg %p148
      $region30: #{transformer_forward.30} parent=15 // pred_check_branch
        %247 = sbr.rel (%p245) target = $region32
      $region31: #{transformer_forward.30} parent=15 // pred_region
        %p248 = scmp.lt.s32.totalorder %s17, 1
        %s249 = scalar_select %p248, %s17, 1
        %p250 = scmp.lt.s32.totalorder %s20, 0
        %s251 = scalar_select %p250, %s20, 0
        %s252 = sadd.s32 %s251, %s249
        %s253 = scalar_lea.vmem %s3, %s252
      $region32: #{transformer_forward.30} parent=15 // pred_fallthru
        _
    $region16: #{transformer_forward.30} parent=5 // pred_fallthru
      _
    %p254 = scmp.le.s32.totalorder 1, %s10
    %p255 = scmp.lt.s32.totalorder %s10, 9
    %p256 = pnand %p254, %p255
    %p257 = pneg %p256
    // Predicated region
    $region33: #{transformer_forward.30} parent=5 // pred_check
      _
    $region34: #{transformer_forward.30} parent=5 // pred_check_branch
      %259 = sbr.rel (%p256) target = $region36
    $region35: #{transformer_forward.30} parent=5 // pred_region
      %s260 = ssub.s32 %s10, 1
      %p261 = scmp.lt.s32.totalorder %s21, 1
      %s262 = scalar_select %p261, %s21, 1
      %p263 = scmp.lt.s32.totalorder %s22, 3
      %s264 = scalar_select %p263, %s22, 3
      %p265 = scmp.lt.s32.totalorder %s23, 0
      %s266 = scalar_select %p265, %s23, 0
      %s267 = sadd.s32 %s266, %s264
      %s268 = smul.addr %s262, 4
      %s269 = sadd.s32 %s267, %s268
      %s270 = smul.addr %s269, 4
      %s271 = scalar_lea.vmem %s0, %s270
      %p272 = pneg %p66
      %p273 = pneg %p63
      %p274 = scmp.lt.s32.totalorder %s21, 1
      %s275 = scalar_select %p274, %s21, 1
      %p276 = scmp.lt.s32.totalorder %s22, 3
      %s277 = scalar_select %p276, %s22, 3
      %p278 = scmp.lt.s32.totalorder %s24, 0
      %s279 = scalar_select %p278, %s24, 0
      %s280 = sadd.s32 %s279, %s277
      %s281 = smul.addr %s275, 4
      %s282 = sadd.s32 %s280, %s281
      %s283 = smul.addr %s282, 4
      %s284 = scalar_lea.vmem %s1, %s283
      %p285 = pneg %p96
      %p286 = pneg %p93
      %p287 = scmp.lt.s32.totalorder %s21, 1
      %s288 = scalar_select %p287, %s21, 1
      %p289 = scmp.lt.s32.totalorder %s22, 3
      %s290 = scalar_select %p289, %s22, 3
      %p291 = scmp.lt.s32.totalorder %s24, 0
      %s292 = scalar_select %p291, %s24, 0
      %s293 = sadd.s32 %s292, %s290
      %s294 = smul.addr %s288, 4
      %s295 = sadd.s32 %s293, %s294
      %s296 = smul.addr %s295, 4
      %s297 = scalar_lea.vmem %s2, %s296
      %p298 = pneg %p126
      %p299 = pneg %p123
      %p300 = scmp.lt.s32.totalorder %s21, 1
      %s301 = scalar_select %p300, %s21, 1
      %p302 = scmp.lt.s32.totalorder %s24, 0
      %s303 = scalar_select %p302, %s24, 0
      %s304 = sadd.s32 %s303, %s301
      %s305 = scalar_lea.vmem %s3, %s304
      %p306 = pneg %p154
      %p307 = pneg %p151
      %p308 = pneg %p184
      %p309 = pneg %p181
      %p310 = scmp.lt.s32.totalorder %s21, 1
      %s311 = scalar_select %p310, %s21, 1
      %p312 = scmp.lt.s32.totalorder %s22, 3
      %s313 = scalar_select %p312, %s22, 3
      %p314 = scmp.lt.s32.totalorder %s23, 0
      %s315 = scalar_select %p314, %s23, 0
      %s316 = sadd.s32 %s315, %s313
      %s317 = smul.addr %s311, 4
      %s318 = sadd.s32 %s316, %s317
      %s319 = smul.addr %s318, 4
      %s320 = scalar_lea.vmem %s4, %s319
      %p321 = scmp.lt.s32.totalorder %s21, 1
      %s322 = scalar_select %p321, %s21, 1
      %p323 = scmp.lt.s32.totalorder %s22, 3
      %s324 = scalar_select %p323, %s22, 3
      %p325 = scmp.lt.s32.totalorder %s23, 0
      %s326 = scalar_select %p325, %s23, 0
      %s327 = sadd.s32 %s326, %s324
      %s328 = smul.addr %s322, 4
      %s329 = sadd.s32 %s327, %s328
      %s330 = smul.addr %s329, 4
      %s331 = scalar_lea.vmem %s0, %s330
      %p332 = scmp.lt.s32.totalorder %s21, 1
      %s333 = scalar_select %p332, %s21, 1
      %p334 = scmp.lt.s32.totalorder %s22, 3
      %s335 = scalar_select %p334, %s22, 3
      %p336 = scmp.lt.s32.totalorder %s24, 0
      %s337 = scalar_select %p336, %s24, 0
      %s338 = sadd.s32 %s337, %s335
      %s339 = smul.addr %s333, 4
      %s340 = sadd.s32 %s338, %s339
      %s341 = smul.addr %s340, 4
      %s342 = scalar_lea.vmem %s1, %s341
      %p343 = scmp.lt.s32.totalorder %s21, 1
      %s344 = scalar_select %p343, %s21, 1
      %p345 = scmp.lt.s32.totalorder %s22, 3
      %s346 = scalar_select %p345, %s22, 3
      %p347 = scmp.lt.s32.totalorder %s24, 0
      %s348 = scalar_select %p347, %s24, 0
      %s349 = sadd.s32 %s348, %s346
      %s350 = smul.addr %s344, 4
      %s351 = sadd.s32 %s349, %s350
      %s352 = smul.addr %s351, 4
      %s353 = scalar_lea.vmem %s2, %s352
      %p354 = scmp.lt.s32.totalorder %s21, 1
      %s355 = scalar_select %p354, %s21, 1
      %p356 = scmp.lt.s32.totalorder %s24, 0
      %s357 = scalar_select %p356, %s24, 0
      %s358 = sadd.s32 %s357, %s355
      %s359 = scalar_lea.vmem %s3, %s358
      %p360 = scmp.lt.s32.totalorder %s21, 1
      %s361 = scalar_select %p360, %s21, 1
      %p362 = scmp.lt.s32.totalorder %s22, 3
      %s363 = scalar_select %p362, %s22, 3
      %p364 = scmp.lt.s32.totalorder %s23, 0
      %s365 = scalar_select %p364, %s23, 0
      %s366 = sadd.s32 %s365, %s363
      %s367 = smul.addr %s361, 4
      %s368 = sadd.s32 %s366, %s367
      %s369 = smul.addr %s368, 4
      %s370 = scalar_lea.vmem %s4, %s369
      %p372 = scmp.eq.s32.totalorder %s24, 0
      // Predicated region
      $region37: #{transformer_forward.30} parent=35 // pred_check
        %p373 = pneg %p372
      $region38: #{transformer_forward.30} parent=35 // pred_check_branch
        %375 = sbr.rel (%p373) target = $region40
      $region39: #{transformer_forward.30} parent=35 // pred_region
        %vm376 = vcmask 7168
        %377 = vst.msk [vmem:[#allocation2] sm:$0xff] %vm376, -inf
        %378 = vst.msk [vmem:[#allocation3] sm:$0xff] %vm376, 0.0
        %vm379 = vcmask 64512
        %380 = vst.msk [vmem:[#allocation4] sm:$0xff] %vm379, 0.0
      $region40: #{transformer_forward.30} parent=35 // pred_fallthru
        _
      %v381 = vld [vmem:[%s331] sm:$0xf]
      %v382 = vld [vmem:[%s342] sm:$0xf]
      %vm383 = vcmask 64512
      %v385 = vsel %vm383, %v381, 0
      %v388 = vsel %vm383, %v382, 0
      %390 = vmatpush.bf16.xpose.msra.mxu0 0
      %391 = vmatpush.bf16.xpose.msra.mxu0 0
      %392 = vmatpush.bf16.xpose.msra.mxu0 0
      %393 = vmatpush.bf16.xpose.msra.mxu0 0
      %394 = vmatpush.bf16.xpose.msra.mxu0 0
      %395 = vmatpush.bf16.xpose.msra.mxu0 0
      %396 = vmatpush.bf16.xpose.msra.mxu0 0
      %397 = vmatpush.bf16.xpose.msra.mxu0 %v388
      %398 = vmatmul.bf16.gmra.mxu0 %v385
      %v399 = vpop.f32.mrf.mxu0
      %v400 = vadd.f32 0.0, %v399
      %v401 = vpop.f32.mrf.mxu0
      %402 = vdwg.mxu0
      %v403 = vld [vmem:[%s359] sm:$0x1]
      %vm404 = vcmp.gt.f32.partialorder %v403, 0.0
      %v405 = vsel %vm404, 1, 0
      %v406 = vperm.slane %v405, 0
      %vm407 = vcmp.eq.s32.totalorder %v406, 1
      %v408 = vsel %vm407, %v400, -1e+09
      %v409 = vld [vmem:[#allocation2] sm:$0xff]
      %v410 = vsel %vm383, %v408, -inf
      %411 = vmax.xlane.f32.xlu0 %v410
      %v412 = vpop.xlane.xlu0 %411
      %v413 = vmax.f32 %v409, %v412
      %v414 = vsub.f32 %v409, %v413
      %v415 = vmul.f32 %v414, 1.442695
      %v416 = vpow.pop %v415
      %418 = vset.pattern.permute.xlu0 0
      %419 = vperm.xlu0 %418, %v413
      %v420 = vpop.permute.xlu0 %419
      %v422 = vsub.f32 %v408, %v420
      %v423 = vmul.f32 %v422, 1.442695
      %v424 = vpow.pop %v423
      %v425 = vld [vmem:[#allocation3] sm:$0xff]
      %v426 = vmul.f32 %v416, %v425
      %v427 = vsel %vm383, %v424, 0.0
      %428 = vadd.xlane.f32.xlu0 %v427
      %v429 = vpop.xlane.xlu0 %428
      %v430 = vadd.f32 %v426, %v429
      %vm431 = vcmask 7168
      %432 = vst.msk [vmem:[#allocation3] sm:$0xff] %vm431, %v430
      %v433 = vld [vmem:[#allocation4] sm:$0xff]
      %435 = vset.pattern.permute.xlu0 0
      %436 = vperm.xlu0 %435, %v416
      %v437 = vpop.permute.xlu0 %436
      %v439 = vmul.f32 %v437, %v433
      %v440 = vpack.c.bf16 %v424, %v424
      %v441 = vld [vmem:[%s353] sm:$0xf]
      %v443 = vsel %vm383, %v440, 0
      %vm445 = vcmask 1043456
      %v447 = vsel %vm445, %v441, 0
      %449 = vmatpush.bf16.msra.mxu0 0
      %450 = vmatpush.bf16.msra.mxu0 0
      %451 = vmatpush.bf16.msra.mxu0 0
      %452 = vmatpush.bf16.msra.mxu0 0
      %453 = vmatpush.bf16.msra.mxu0 0
      %454 = vmatpush.bf16.msra.mxu0 0
      %455 = vmatpush.bf16.msra.mxu0 0
      %456 = vmatpush.bf16.msra.mxu0 %v447
      %457 = vmatmul.bf16.gmra.mxu0 %v443
      %v458 = vpop.f32.mrf.mxu0
      %v459 = vadd.f32 0.0, %v458
      %v460 = vpop.f32.mrf.mxu0
      %461 = vdwg.mxu0
      %v462 = vadd.f32 %v439, %v459
      %463 = vst.msk [vmem:[#allocation4] sm:$0xff] %vm383, %v462
      %464 = vst.msk [vmem:[#allocation2] sm:$0xff] %vm431, %v413
      // Predicated region
      $region41: #{transformer_forward.30} parent=35 // pred_check
        %p465 = pneg %p372
      $region42: #{transformer_forward.30} parent=35 // pred_check_branch
        %467 = sbr.rel (%p465) target = $region44
      $region43: #{transformer_forward.30} parent=35 // pred_region
        %v468 = vld [vmem:[#allocation4] sm:$0xff]
        %v469 = vld [vmem:[#allocation3] sm:$0xff]
        %v470 = vrcp.pop %v469
        %472 = vset.pattern.permute.xlu0 0
        %473 = vperm.xlu0 %472, %v470
        %v474 = vpop.permute.xlu0 %473
        %v476 = vmul.f32 %v468, %v474
        %v477 = vpack.c.bf16 %v476, %v476
        %vm478 = vcmask 60416
        %479 = vst.msk [vmem:[%s370] sm:$0xf] %vm478, %v477
      $region44: #{transformer_forward.30} parent=35 // pred_fallthru
        _
      %p480 = scmp.lt.s32.totalorder %s21, 1
      %s481 = scalar_select %p480, %s21, 1
      %p482 = scmp.lt.s32.totalorder %s22, 3
      %s483 = scalar_select %p482, %s22, 3
      %p484 = scmp.lt.s32.totalorder %s23, 0
      %s485 = scalar_select %p484, %s23, 0
      %s486 = sadd.s32 %s485, %s483
      %s487 = smul.addr %s481, 4
      %s488 = sadd.s32 %s486, %s487
      %s489 = smul.addr %s488, 4
      %s490 = scalar_lea.vmem %s4, %s489
      // Predicated region
      $region45: #{transformer_forward.30} parent=35 // pred_check
        %p491 = pneg %p181
      $region46: #{transformer_forward.30} parent=35 // pred_check_branch
        %493 = sbr.rel (%p491) target = $region48
      $region47: #{transformer_forward.30} parent=35 // pred_region
        _
      $region48: #{transformer_forward.30} parent=35 // pred_fallthru
        _
    $region36: #{transformer_forward.30} parent=5 // pred_fallthru
      _
    %p494 = scmp.le.s32.totalorder 2, %s10
    // Predicated region
    $region49: #{transformer_forward.30} parent=5 // pred_check
      %p495 = pneg %p494
    $region50: #{transformer_forward.30} parent=5 // pred_check_branch
      %497 = sbr.rel (%p495) target = $region52
    $region51: #{transformer_forward.30} parent=5 // pred_region
      %s498 = ssub.s32 %s10, 2
      // Predicated region
      $region53: #{transformer_forward.30} parent=51 // pred_check
        %p499 = pneg %p187
      $region54: #{transformer_forward.30} parent=51 // pred_check_branch
        %501 = sbr.rel (%p499) target = $region56
      $region55: #{transformer_forward.30} parent=51 // pred_region
        %p502 = scmp.lt.s32.totalorder %s25, 1
        %s503 = scalar_select %p502, %s25, 1
        %p504 = scmp.lt.s32.totalorder %s26, 3
        %s505 = scalar_select %p504, %s26, 3
        %p506 = scmp.lt.s32.totalorder %s27, 0
        %s507 = scalar_select %p506, %s27, 0
        %s508 = sadd.s32 %s507, %s505
        %s509 = smul.addr %s503, 4
        %s510 = sadd.s32 %s508, %s509
        %s511 = smul.addr %s510, 4
        %s512 = scalar_lea.vmem %s4, %s511
      $region56: #{transformer_forward.30} parent=51 // pred_fallthru
        _
    $region52: #{transformer_forward.30} parent=5 // pred_fallthru
      _
  $region6: #{transformer_forward.30} parent=0 // loop_footer
    %s14 = sadd.s32 1, %s10
  $region7: #{transformer_forward.30} parent=0 // loop_footer_branch
    %9 = sbr.rel target = $region3
  $region8: #{transformer_forward.30} parent=0 // loop_exit
    _

// kernel: transformer_forward.32
$region0: #{transformer_forward.32}
  #allocation0 [shape = 'u32[]', space=smem, size = 0x4, offset = 0x4, fixed_abs, tag = 'smem constant byte address 0x4 - core index']
  #allocation1 [shape = 'u32[72,128]{1,0:T(1,128)}', space=vmem, size = 0x9000, scoped, tag = 'internal scratch']
  #allocation2 [shape = 'f32[16,64]{1,0:T(8,128)}', space=vmem, size = 0x2000, scoped, tag = 'scratch operand']
  %s0 = inlined_call_operand.vmem [shape: bf16[16,32], index: 0, kind: input, shape index: {}]
  %s1 = inlined_call_operand.vmem [shape: bf16[32,64], index: 1, kind: input, shape index: {}]
  %s2 = inlined_call_operand.vmem [shape: f32[1,64], index: 2, kind: input, shape index: {}]
  %s3 = inlined_call_operand.vmem [shape: bf16[16,64], index: 3, kind: output, shape index: {}]
  %s4 = sld [smem:[#allocation0]]
  $region30: #{transformer_forward.32} parent=0
    _
  %s6 = ssub.s32 1, %s4
  %s7 = scalar_select 0, %s6, %s4
  // Predicated region
  $region2: #{transformer_forward.32} parent=0 // pred_check
    _
  $region3: #{transformer_forward.32} parent=0 // pred_check_branch
    %9 = sbr.rel (0) target = $region5
  $region4: #{transformer_forward.32} parent=0 // pred_region
    _
  $region5: #{transformer_forward.32} parent=0 // pred_fallthru
    _
  // Predicated region
  $region6: #{transformer_forward.32} parent=0 // pred_check
    _
  $region7: #{transformer_forward.32} parent=0 // pred_check_branch
    %11 = sbr.rel (0) target = $region9
  $region8: #{transformer_forward.32} parent=0 // pred_region
    _
  $region9: #{transformer_forward.32} parent=0 // pred_fallthru
    _
  // Predicated region
  $region10: #{transformer_forward.32} parent=0 // pred_check
    _
  $region11: #{transformer_forward.32} parent=0 // pred_check_branch
    %13 = sbr.rel (0) target = $region13
  $region12: #{transformer_forward.32} parent=0 // pred_region
    _
  $region13: #{transformer_forward.32} parent=0 // pred_fallthru
    _
  %p15 = scmp.eq.s32.totalorder 0, 0
  // Predicated region
  $region14: #{transformer_forward.32} parent=0 // pred_check
    %p16 = pneg %p15
  $region15: #{transformer_forward.32} parent=0 // pred_check_branch
    %18 = sbr.rel (%p16) target = $region17
  $region16: #{transformer_forward.32} parent=0 // pred_region
    %vm19 = vcmask 523264
    %20 = vst.msk [vmem:[#allocation2] sm:$0xff] %vm19, 0.0
    %21 = vst.msk [vmem:[#allocation2 + $0x8] sm:$0xff] %vm19, 0.0
  $region17: #{transformer_forward.32} parent=0 // pred_fallthru
    _
  %v22 = vld [vmem:[#allocation2] sm:$0xff]
  %v23 = vld [vmem:[#allocation2 + $0x8] sm:$0xff]
  %v24 = vld [vmem:[%s0] sm:$0xf]
  %v25 = vld [vmem:[%s0 + $0x4] sm:$0xf]
  %v26 = vld [vmem:[%s1] sm:$0xf]
  %v27 = vld [vmem:[%s1 + $0x4] sm:$0xf]
  %v28 = vld [vmem:[%s1 + $0x8] sm:$0xf]
  %v29 = vld [vmem:[%s1 + $0xc] sm:$0xf]
  %v32 = vunpack.c.l.b16 %v24
  %v33 = vunpack.c.l.b16 %v25
  %v34 = vpack.c.b16 %v33, %v32
  %v39 = vunpack.c.l.b16 %v26
  %v40 = vunpack.c.l.b16 %v27
  %v41 = vunpack.c.l.b16 %v28
  %v42 = vunpack.c.l.b16 %v29
  %v43 = vpack.c.b16 %v40, %v39
  %v44 = vpack.c.b16 %v42, %v41
  %vm47 = vcmask 261120
  %v49 = vsel %vm47, %v34, 0
  %51 = vmatpush.bf16.msra.mxu0 0
  %52 = vmatpush.bf16.msra.mxu0 0
  %53 = vmatpush.bf16.msra.mxu0 0
  %54 = vmatpush.bf16.msra.mxu0 0
  %55 = vmatpush.bf16.msra.mxu0 0
  %56 = vmatpush.bf16.msra.mxu0 0
  %57 = vmatpush.bf16.msra.mxu0 %v44
  %58 = vmatpush.bf16.msra.mxu0 %v43
  %59 = vmatmul.bf16.gmra.mxu0 %v49
  %v60 = vpop.f32.mrf.mxu0
  %v61 = vadd.f32 0.0, %v60
  %v62 = vpop.f32.mrf.mxu0
  %v63 = vadd.f32 0.0, %v62
  %64 = vdwg.mxu0
  %v65 = vadd.f32 %v22, %v61
  %v66 = vadd.f32 %v23, %v63
  %vm67 = vcmask 523264
  %68 = vst.msk [vmem:[#allocation2] sm:$0xff] %vm67, %v65
  %69 = vst.msk [vmem:[#allocation2 + $0x8] sm:$0xff] %vm67, %v66
  // Predicated region
  $region18: #{transformer_forward.32} parent=0 // pred_check
    %p70 = pneg %p15
  $region19: #{transformer_forward.32} parent=0 // pred_check_branch
    %72 = sbr.rel (%p70) target = $region21
  $region20: #{transformer_forward.32} parent=0 // pred_region
    %v73 = vld [vmem:[#allocation2] sm:$0xff]
    %v74 = vld [vmem:[#allocation2 + $0x8] sm:$0xff]
    %v75 = vld [vmem:[%s2] sm:$0x1]
    %v77 = vperm.slane %v75, 0
    %v79 = vadd.f32 %v73, %v77
    %v80 = vadd.f32 %v74, %v77
    %v81 = vmax.f32 %v79, 0.0
    %v82 = vmax.f32 %v80, 0.0
    %v83 = vpack.c.bf16 %v81, %v81
    %v84 = vpack.c.bf16 %v82, %v82
    %vm85 = vcmask 519168
    %86 = vst.msk [vmem:[%s3] sm:$0xf] %vm85, %v83
    %87 = vst.msk [vmem:[%s3 + $0x4] sm:$0xf] %vm85, %v84
  $region21: #{transformer_forward.32} parent=0 // pred_fallthru
    _
  // Predicated region
  $region22: #{transformer_forward.32} parent=0 // pred_check
    _
  $region23: #{transformer_forward.32} parent=0 // pred_check_branch
    %89 = sbr.rel (0) target = $region25
  $region24: #{transformer_forward.32} parent=0 // pred_region
    _
  $region25: #{transformer_forward.32} parent=0 // pred_fallthru
    _
  // Predicated region
  $region26: #{transformer_forward.32} parent=0 // pred_check
    _
  $region27: #{transformer_forward.32} parent=0 // pred_check_branch
    %91 = sbr.rel (0) target = $region29
  $region28: #{transformer_forward.32} parent=0 // pred_region
    _
  $region29: #{transformer_forward.32} parent=0 // pred_fallthru
    _

// kernel: transformer_forward.33
$region0: #{transformer_forward.33}
  #allocation0 [shape = 'u32[]', space=smem, size = 0x4, offset = 0x4, fixed_abs, tag = 'smem constant byte address 0x4 - core index']
  #allocation1 [shape = 'u32[72,128]{1,0:T(1,128)}', space=vmem, size = 0x9000, scoped, tag = 'internal scratch']
  #allocation2 [shape = 'f32[16,32]{1,0:T(8,128)}', space=vmem, size = 0x2000, scoped, tag = 'scratch operand']
  %s0 = inlined_call_operand.vmem [shape: bf16[16,64], index: 0, kind: input, shape index: {}]
  %s1 = inlined_call_operand.vmem [shape: bf16[64,32], index: 1, kind: input, shape index: {}]
  %s2 = inlined_call_operand.vmem [shape: f32[1,32], index: 2, kind: input, shape index: {}]
  %s3 = inlined_call_operand.vmem [shape: bf16[16,32], index: 3, kind: input, shape index: {}]
  %s4 = inlined_call_operand.vmem [shape: f32[1,32], index: 4, kind: input, shape index: {}]
  %s5 = inlined_call_operand.vmem [shape: f32[1,32], index: 5, kind: input, shape index: {}]
  %s6 = inlined_call_operand.vmem [shape: bf16[16,32], index: 6, kind: output, shape index: {}]
  %s7 = sld [smem:[#allocation0]]
  $region42: #{transformer_forward.33} parent=0
    _
  %s9 = ssub.s32 1, %s7
  %s10 = scalar_select 0, %s9, %s7
  // Predicated region
  $region2: #{transformer_forward.33} parent=0 // pred_check
    _
  $region3: #{transformer_forward.33} parent=0 // pred_check_branch
    %12 = sbr.rel (0) target = $region5
  $region4: #{transformer_forward.33} parent=0 // pred_region
    _
  $region5: #{transformer_forward.33} parent=0 // pred_fallthru
    _
  // Predicated region
  $region6: #{transformer_forward.33} parent=0 // pred_check
    _
  $region7: #{transformer_forward.33} parent=0 // pred_check_branch
    %14 = sbr.rel (0) target = $region9
  $region8: #{transformer_forward.33} parent=0 // pred_region
    _
  $region9: #{transformer_forward.33} parent=0 // pred_fallthru
    _
  // Predicated region
  $region10: #{transformer_forward.33} parent=0 // pred_check
    _
  $region11: #{transformer_forward.33} parent=0 // pred_check_branch
    %16 = sbr.rel (0) target = $region13
  $region12: #{transformer_forward.33} parent=0 // pred_region
    _
  $region13: #{transformer_forward.33} parent=0 // pred_fallthru
    _
  // Predicated region
  $region14: #{transformer_forward.33} parent=0 // pred_check
    _
  $region15: #{transformer_forward.33} parent=0 // pred_check_branch
    %18 = sbr.rel (0) target = $region17
  $region16: #{transformer_forward.33} parent=0 // pred_region
    _
  $region17: #{transformer_forward.33} parent=0 // pred_fallthru
    _
  // Predicated region
  $region18: #{transformer_forward.33} parent=0 // pred_check
    _
  $region19: #{transformer_forward.33} parent=0 // pred_check_branch
    %20 = sbr.rel (0) target = $region21
  $region20: #{transformer_forward.33} parent=0 // pred_region
    _
  $region21: #{transformer_forward.33} parent=0 // pred_fallthru
    _
  // Predicated region
  $region22: #{transformer_forward.33} parent=0 // pred_check
    _
  $region23: #{transformer_forward.33} parent=0 // pred_check_branch
    %22 = sbr.rel (0) target = $region25
  $region24: #{transformer_forward.33} parent=0 // pred_region
    _
  $region25: #{transformer_forward.33} parent=0 // pred_fallthru
    _
  %p24 = scmp.eq.s32.totalorder 0, 0
  // Predicated region
  $region26: #{transformer_forward.33} parent=0 // pred_check
    %p25 = pneg %p24
  $region27: #{transformer_forward.33} parent=0 // pred_check_branch
    %27 = sbr.rel (%p25) target = $region29
  $region28: #{transformer_forward.33} parent=0 // pred_region
    %vm28 = vcmask 261120
    %29 = vst.msk [vmem:[#allocation2] sm:$0xff] %vm28, 0.0
    %30 = vst.msk [vmem:[#allocation2 + $0x8] sm:$0xff] %vm28, 0.0
  $region29: #{transformer_forward.33} parent=0 // pred_fallthru
    _
  %v31 = vld [vmem:[#allocation2] sm:$0xff]
  %v32 = vld [vmem:[#allocation2 + $0x8] sm:$0xff]
  %v33 = vld [vmem:[%s0] sm:$0xf]
  %v34 = vld [vmem:[%s0 + $0x4] sm:$0xf]
  %v35 = vld [vmem:[%s1] sm:$0xf]
  %v36 = vld [vmem:[%s1 + $0x4] sm:$0xf]
  %v37 = vld [vmem:[%s1 + $0x8] sm:$0xf]
  %v38 = vld [vmem:[%s1 + $0xc] sm:$0xf]
  %v39 = vld [vmem:[%s1 + $0x10] sm:$0xf]
  %v40 = vld [vmem:[%s1 + $0x14] sm:$0xf]
  %v41 = vld [vmem:[%s1 + $0x18] sm:$0xf]
  %v42 = vld [vmem:[%s1 + $0x1c] sm:$0xf]
  %v45 = vunpack.c.l.b16 %v33
  %v46 = vunpack.c.l.b16 %v34
  %v47 = vpack.c.b16 %v46, %v45
  %v56 = vunpack.c.l.b16 %v35
  %v57 = vunpack.c.l.b16 %v36
  %v58 = vunpack.c.l.b16 %v37
  %v59 = vunpack.c.l.b16 %v38
  %v60 = vunpack.c.l.b16 %v39
  %v61 = vunpack.c.l.b16 %v40
  %v62 = vunpack.c.l.b16 %v41
  %v63 = vunpack.c.l.b16 %v42
  %v64 = vpack.c.b16 %v57, %v56
  %v65 = vpack.c.b16 %v59, %v58
  %v66 = vpack.c.b16 %v61, %v60
  %v67 = vpack.c.b16 %v63, %v62
  %vm72 = vcmask 523264
  %v74 = vsel %vm72, %v47, 0
  %76 = vmatpush.bf16.msra.mxu0 0
  %77 = vmatpush.bf16.msra.mxu0 0
  %78 = vmatpush.bf16.msra.mxu0 0
  %79 = vmatpush.bf16.msra.mxu0 0
  %80 = vmatpush.bf16.msra.mxu0 %v67
  %81 = vmatpush.bf16.msra.mxu0 %v66
  %82 = vmatpush.bf16.msra.mxu0 %v65
  %83 = vmatpush.bf16.msra.mxu0 %v64
  %84 = vmatmul.bf16.gmra.mxu0 %v74
  %v85 = vpop.f32.mrf.mxu0
  %v86 = vadd.f32 0.0, %v85
  %v87 = vpop.f32.mrf.mxu0
  %v88 = vadd.f32 0.0, %v87
  %89 = vdwg.mxu0
  %v90 = vadd.f32 %v31, %v86
  %v91 = vadd.f32 %v32, %v88
  %vm92 = vcmask 261120
  %93 = vst.msk [vmem:[#allocation2] sm:$0xff] %vm92, %v90
  %94 = vst.msk [vmem:[#allocation2 + $0x8] sm:$0xff] %vm92, %v91
  // Predicated region
  $region30: #{transformer_forward.33} parent=0 // pred_check
    %p95 = pneg %p24
  $region31: #{transformer_forward.33} parent=0 // pred_check_branch
    %97 = sbr.rel (%p95) target = $region33
  $region32: #{transformer_forward.33} parent=0 // pred_region
    %v98 = vld [vmem:[#allocation2] sm:$0xff]
    %v99 = vld [vmem:[#allocation2 + $0x8] sm:$0xff]
    %v100 = vld [vmem:[%s2] sm:$0x1]
    %v102 = vperm.slane %v100, 0
    %v104 = vadd.f32 %v98, %v102
    %v105 = vadd.f32 %v99, %v102
    %v106 = vld [vmem:[%s3] sm:$0xf]
    %v107 = vld [vmem:[%s3 + $0x4] sm:$0xf]
    %v108 = vunpack.c.l.bf16 %v106
    %v109 = vunpack.c.l.bf16 %v107
    %v110 = vadd.f32 %v104, %v108
    %v111 = vadd.f32 %v105, %v109
    %v112 = vsel %vm92, %v110, 0.0
    %113 = vadd.xlane.f32.xlu0 %v112
    %v114 = vpop.xlane.xlu0 %113
    %v115 = vsel %vm92, %v111, 0.0
    %116 = vadd.xlane.f32.xlu0 %v115
    %v117 = vpop.xlane.xlu0 %116
    %v118 = vrcp.pop 32.0
    %v119 = vmul.f32 32.0, %v118
    %v120 = vsub.f32 1.0, %v119
    %v121 = vmul.f32 %v118, %v120
    %v122 = vadd.f32 %v118, %v121
    %vm123 = vweird.f32 %v118
    %v124 = vsel %vm123, %v118, %v122
    %v125 = vmul.f32 %v114, %v124
    %v126 = vmul.f32 %v117, %v124
    %v127 = vsub.f32 %v110, %v125
    %v128 = vsub.f32 %v111, %v126
    %v129 = vmul.f32 %v127, %v127
    %v130 = vmul.f32 %v128, %v128
    %v131 = vsel %vm92, %v129, 0.0
    %132 = vadd.xlane.f32.xlu0 %v131
    %v133 = vpop.xlane.xlu0 %132
    %v134 = vsel %vm92, %v130, 0.0
    %135 = vadd.xlane.f32.xlu0 %v134
    %v136 = vpop.xlane.xlu0 %135
    %v137 = vmul.f32 %v133, %v124
    %v138 = vmul.f32 %v136, %v124
    %v139 = vadd.f32 %v137, 1e-05
    %v140 = vadd.f32 %v138, 1e-05
    %v141 = vrsqrt.pop %v139
    %v142 = vmul.f32 %v141, %v139
    %v143 = vmul.f32 %v142, %v141
    %v144 = vmul.f32 0.5, %v143
    %v145 = vsub.f32 1.5, %v144
    %v146 = vmul.f32 %v141, %v145
    %vm147 = vweird.f32 %v139
    %vm148 = vweird.f32 %v141
    %vm149 = vmor %vm147, %vm148
    %v150 = vsel %vm149, %v141, %v146
    %v151 = vrsqrt.pop %v140
    %v152 = vmul.f32 %v151, %v140
    %v153 = vmul.f32 %v152, %v151
    %v154 = vmul.f32 0.5, %v153
    %v155 = vsub.f32 1.5, %v154
    %v156 = vmul.f32 %v151, %v155
    %vm157 = vweird.f32 %v140
    %vm158 = vweird.f32 %v151
    %vm159 = vmor %vm157, %vm158
    %v160 = vsel %vm159, %v151, %v156
    %v161 = vmul.f32 %v127, %v150
    %v162 = vmul.f32 %v128, %v160
    %v163 = vld [vmem:[%s4] sm:$0x1]
    %v165 = vperm.slane %v163, 0
    %v167 = vmul.f32 %v161, %v165
    %v168 = vmul.f32 %v162, %v165
    %v169 = vld [vmem:[%s5] sm:$0x1]
    %v171 = vperm.slane %v169, 0
    %v173 = vadd.f32 %v167, %v171
    %v174 = vadd.f32 %v168, %v171
    %v175 = vpack.c.bf16 %v173, %v173
    %v176 = vpack.c.bf16 %v174, %v174
    %vm177 = vcmask 257024
    %178 = vst.msk [vmem:[%s6] sm:$0xf] %vm177, %v175
    %179 = vst.msk [vmem:[%s6 + $0x4] sm:$0xf] %vm177, %v176
  $region33: #{transformer_forward.33} parent=0 // pred_fallthru
    _
  // Predicated region
  $region34: #{transformer_forward.33} parent=0 // pred_check
    _
  $region35: #{transformer_forward.33} parent=0 // pred_check_branch
    %181 = sbr.rel (0) target = $region37
  $region36: #{transformer_forward.33} parent=0 // pred_region
    _
  $region37: #{transformer_forward.33} parent=0 // pred_fallthru
    _
  // Predicated region
  $region38: #{transformer_forward.33} parent=0 // pred_check
    _
  $region39: #{transformer_forward.33} parent=0 // pred_check_branch
    %183 = sbr.rel (0) target = $region41
  $region40: #{transformer_forward.33} parent=0 // pred_region
    _
  $region41: #{transformer_forward.33} parent=0 // pred_fallthru
    _

// kernel: transformer_forward.43
$region0: #{transformer_forward.43}
  #allocation0 [shape = 'u32[]', space=smem, size = 0x4, offset = 0x4, fixed_abs, tag = 'smem constant byte address 0x4 - core index']
  #allocation1 [shape = 'u32[72,128]{1,0:T(1,128)}', space=vmem, size = 0x9000, scoped, tag = 'internal scratch']
  #allocation2 [shape = 'f32[16,64]{1,0:T(8,128)}', space=vmem, size = 0x2000, scoped, tag = 'scratch operand']
  %s0 = inlined_call_operand.vmem [shape: bf16[16,32], index: 0, kind: input, shape index: {}]
  %s1 = inlined_call_operand.vmem [shape: bf16[32,64], index: 1, kind: input, shape index: {}]
  %s2 = inlined_call_operand.vmem [shape: f32[1,64], index: 2, kind: input, shape index: {}]
  %s3 = inlined_call_operand.vmem [shape: bf16[16,64], index: 3, kind: output, shape index: {}]
  %s4 = sld [smem:[#allocation0]]
  $region30: #{transformer_forward.43} parent=0
    _
  %s6 = ssub.s32 1, %s4
  %s7 = scalar_select 0, %s6, %s4
  // Predicated region
  $region2: #{transformer_forward.43} parent=0 // pred_check
    _
  $region3: #{transformer_forward.43} parent=0 // pred_check_branch
    %9 = sbr.rel (0) target = $region5
  $region4: #{transformer_forward.43} parent=0 // pred_region
    _
  $region5: #{transformer_forward.43} parent=0 // pred_fallthru
    _
  // Predicated region
  $region6: #{transformer_forward.43} parent=0 // pred_check
    _
  $region7: #{transformer_forward.43} parent=0 // pred_check_branch
    %11 = sbr.rel (0) target = $region9
  $region8: #{transformer_forward.43} parent=0 // pred_region
    _
  $region9: #{transformer_forward.43} parent=0 // pred_fallthru
    _
  // Predicated region
  $region10: #{transformer_forward.43} parent=0 // pred_check
    _
  $region11: #{transformer_forward.43} parent=0 // pred_check_branch
    %13 = sbr.rel (0) target = $region13
  $region12: #{transformer_forward.43} parent=0 // pred_region
    _
  $region13: #{transformer_forward.43} parent=0 // pred_fallthru
    _
  %p15 = scmp.eq.s32.totalorder 0, 0
  // Predicated region
  $region14: #{transformer_forward.43} parent=0 // pred_check
    %p16 = pneg %p15
  $region15: #{transformer_forward.43} parent=0 // pred_check_branch
    %18 = sbr.rel (%p16) target = $region17
  $region16: #{transformer_forward.43} parent=0 // pred_region
    %vm19 = vcmask 523264
    %20 = vst.msk [vmem:[#allocation2] sm:$0xff] %vm19, 0.0
    %21 = vst.msk [vmem:[#allocation2 + $0x8] sm:$0xff] %vm19, 0.0
  $region17: #{transformer_forward.43} parent=0 // pred_fallthru
    _
  %v22 = vld [vmem:[#allocation2] sm:$0xff]
  %v23 = vld [vmem:[#allocation2 + $0x8] sm:$0xff]
  %v24 = vld [vmem:[%s0] sm:$0xf]
  %v25 = vld [vmem:[%s0 + $0x4] sm:$0xf]
  %v26 = vld [vmem:[%s1] sm:$0xf]
  %v27 = vld [vmem:[%s1 + $0x4] sm:$0xf]
  %v28 = vld [vmem:[%s1 + $0x8] sm:$0xf]
  %v29 = vld [vmem:[%s1 + $0xc] sm:$0xf]
  %v32 = vunpack.c.l.b16 %v24
  %v33 = vunpack.c.l.b16 %v25
  %v34 = vpack.c.b16 %v33, %v32
  %v39 = vunpack.c.l.b16 %v26
  %v40 = vunpack.c.l.b16 %v27
  %v41 = vunpack.c.l.b16 %v28
  %v42 = vunpack.c.l.b16 %v29
  %v43 = vpack.c.b16 %v40, %v39
  %v44 = vpack.c.b16 %v42, %v41
  %vm47 = vcmask 261120
  %v49 = vsel %vm47, %v34, 0
  %51 = vmatpush.bf16.msra.mxu0 0
  %52 = vmatpush.bf16.msra.mxu0 0
  %53 = vmatpush.bf16.msra.mxu0 0
  %54 = vmatpush.bf16.msra.mxu0 0
  %55 = vmatpush.bf16.msra.mxu0 0
  %56 = vmatpush.bf16.msra.mxu0 0
  %57 = vmatpush.bf16.msra.mxu0 %v44
  %58 = vmatpush.bf16.msra.mxu0 %v43
  %59 = vmatmul.bf16.gmra.mxu0 %v49
  %v60 = vpop.f32.mrf.mxu0
  %v61 = vadd.f32 0.0, %v60
  %v62 = vpop.f32.mrf.mxu0
  %v63 = vadd.f32 0.0, %v62
  %64 = vdwg.mxu0
  %v65 = vadd.f32 %v22, %v61
  %v66 = vadd.f32 %v23, %v63
  %vm67 = vcmask 523264
  %68 = vst.msk [vmem:[#allocation2] sm:$0xff] %vm67, %v65
  %69 = vst.msk [vmem:[#allocation2 + $0x8] sm:$0xff] %vm67, %v66
  // Predicated region
  $region18: #{transformer_forward.43} parent=0 // pred_check
    %p70 = pneg %p15
  $region19: #{transformer_forward.43} parent=0 // pred_check_branch
    %72 = sbr.rel (%p70) target = $region21
  $region20: #{transformer_forward.43} parent=0 // pred_region
    %v73 = vld [vmem:[#allocation2] sm:$0xff]
    %v74 = vld [vmem:[#allocation2 + $0x8] sm:$0xff]
    %v75 = vld [vmem:[%s2] sm:$0x1]
    %v77 = vperm.slane %v75, 0
    %v79 = vadd.f32 %v73, %v77
    %v80 = vadd.f32 %v74, %v77
    %v81 = vpack.c.bf16 %v79, %v79
    %v82 = vpack.c.bf16 %v80, %v80
    %vm83 = vcmask 519168
    %84 = vst.msk [vmem:[%s3] sm:$0xf] %vm83, %v81
    %85 = vst.msk [vmem:[%s3 + $0x4] sm:$0xf] %vm83, %v82
  $region21: #{transformer_forward.43} parent=0 // pred_fallthru
    _
  // Predicated region
  $region22: #{transformer_forward.43} parent=0 // pred_check
    _
  $region23: #{transformer_forward.43} parent=0 // pred_check_branch
    %87 = sbr.rel (0) target = $region25
  $region24: #{transformer_forward.43} parent=0 // pred_region
    _
  $region25: #{transformer_forward.43} parent=0 // pred_fallthru
    _
  // Predicated region
  $region26: #{transformer_forward.43} parent=0 // pred_check
    _
  $region27: #{transformer_forward.43} parent=0 // pred_check_branch
    %89 = sbr.rel (0) target = $region29
  $region28: #{transformer_forward.43} parent=0 // pred_region
    _
  $region29: #{transformer_forward.43} parent=0 // pred_fallthru
    _

// kernel: transformer_forward.57
$region0: #{transformer_forward.57}
  #allocation0 [shape = 'u32[]', space=smem, size = 0x4, offset = 0x4, fixed_abs, tag = 'smem constant byte address 0x4 - core index']
  #allocation1 [shape = 'u32[72,128]{1,0:T(1,128)}', space=vmem, size = 0x9000, scoped, tag = 'internal scratch']
  #allocation2 [shape = 'f32[16,128]{1,0:T(8,128)}', space=vmem, size = 0x2000, scoped, tag = 'scratch operand']
  %s0 = inlined_call_operand.vmem [shape: bf16[16,32], index: 0, kind: input, shape index: {}]
  %s1 = inlined_call_operand.vmem [shape: bf16[32,128], index: 1, kind: input, shape index: {}]
  %s2 = inlined_call_operand.vmem [shape: f32[1,128], index: 2, kind: input, shape index: {}]
  %s3 = inlined_call_operand.hbm [shape: f32[16,128], index: 3, kind: output, shape index: {}]
  %s4 = sld [smem:[#allocation0]]
  $region30: #{transformer_forward.57} parent=0
    _
  %s6 = ssub.s32 1, %s4
  %s7 = scalar_select 0, %s6, %s4
  $region1: #{transformer_forward.57} parent=0
    #allocation3 [shape = 'u8[8192]{0}', space=vmem, size = 0x2000, scoped, tag = 'output window, operand 0, single buffered']
    #allocation4 [shape = 's32[1]{0}', space=sflag, size = 0x4, scoped, tag = 'scoped memory for transformer_forward.57']
    %8 = vsyncpa [#allocation4], 0
    // Predicated region
    $region2: #{transformer_forward.57} parent=1 // pred_check
      _
    $region3: #{transformer_forward.57} parent=1 // pred_check_branch
      %10 = sbr.rel (0) target = $region5
    $region4: #{transformer_forward.57} parent=1 // pred_region
      _
    $region5: #{transformer_forward.57} parent=1 // pred_fallthru
      _
    // Predicated region
    $region6: #{transformer_forward.57} parent=1 // pred_check
      _
    $region7: #{transformer_forward.57} parent=1 // pred_check_branch
      %12 = sbr.rel (0) target = $region9
    $region8: #{transformer_forward.57} parent=1 // pred_region
      _
    $region9: #{transformer_forward.57} parent=1 // pred_fallthru
      _
    // Predicated region
    $region10: #{transformer_forward.57} parent=1 // pred_check
      _
    $region11: #{transformer_forward.57} parent=1 // pred_check_branch
      %14 = sbr.rel (0) target = $region13
    $region12: #{transformer_forward.57} parent=1 // pred_region
      _
    $region13: #{transformer_forward.57} parent=1 // pred_fallthru
      _
    %p16 = scmp.eq.s32.totalorder 0, 0
    // Predicated region
    $region14: #{transformer_forward.57} parent=1 // pred_check
      %p17 = pneg %p16
    $region15: #{transformer_forward.57} parent=1 // pred_check_branch
      %19 = sbr.rel (%p17) target = $region17
    $region16: #{transformer_forward.57} parent=1 // pred_region
      %20 = vst [vmem:[#allocation2] sm:$0xff] 0.0
      %21 = vst [vmem:[#allocation2 + $0x8] sm:$0xff] 0.0
    $region17: #{transformer_forward.57} parent=1 // pred_fallthru
      _
    %v22 = vld [vmem:[#allocation2] sm:$0xff]
    %v23 = vld [vmem:[#allocation2 + $0x8] sm:$0xff]
    %v24 = vld [vmem:[%s0] sm:$0xf]
    %v25 = vld [vmem:[%s0 + $0x4] sm:$0xf]
    %v26 = vld [vmem:[%s1] sm:$0xf]
    %v27 = vld [vmem:[%s1 + $0x4] sm:$0xf]
    %v28 = vld [vmem:[%s1 + $0x8] sm:$0xf]
    %v29 = vld [vmem:[%s1 + $0xc] sm:$0xf]
    %v32 = vunpack.c.l.b16 %v24
    %v33 = vunpack.c.l.b16 %v25
    %v34 = vpack.c.b16 %v33, %v32
    %v39 = vunpack.c.l.b16 %v26
    %v40 = vunpack.c.l.b16 %v27
    %v41 = vunpack.c.l.b16 %v28
    %v42 = vunpack.c.l.b16 %v29
    %v43 = vpack.c.b16 %v40, %v39
    %v44 = vpack.c.b16 %v42, %v41
    %vm47 = vcmask 261120
    %v49 = vsel %vm47, %v34, 0
    %51 = vmatpush.bf16.msra.mxu0 0
    %52 = vmatpush.bf16.msra.mxu0 0
    %53 = vmatpush.bf16.msra.mxu0 0
    %54 = vmatpush.bf16.msra.mxu0 0
    %55 = vmatpush.bf16.msra.mxu0 0
    %56 = vmatpush.bf16.msra.mxu0 0
    %57 = vmatpush.bf16.msra.mxu0 %v44
    %58 = vmatpush.bf16.msra.mxu0 %v43
    %59 = vmatmul.bf16.gmra.mxu0 %v49
    %v60 = vpop.f32.mrf.mxu0
    %v61 = vadd.f32 0.0, %v60
    %v62 = vpop.f32.mrf.mxu0
    %v63 = vadd.f32 0.0, %v62
    %64 = vdwg.mxu0
    %v65 = vadd.f32 %v22, %v61
    %v66 = vadd.f32 %v23, %v63
    %67 = vst [vmem:[#allocation2] sm:$0xff] %v65
    %68 = vst [vmem:[#allocation2 + $0x8] sm:$0xff] %v66
    // Predicated region
    $region18: #{transformer_forward.57} parent=1 // pred_check
      %p69 = pneg %p16
    $region19: #{transformer_forward.57} parent=1 // pred_check_branch
      %71 = sbr.rel (%p69) target = $region21
    $region20: #{transformer_forward.57} parent=1 // pred_region
      %v72 = vld [vmem:[#allocation2] sm:$0xff]
      %v73 = vld [vmem:[#allocation2 + $0x8] sm:$0xff]
      %v74 = vld [vmem:[%s2] sm:$0x1]
      %v76 = vperm.slane %v74, 0
      %v78 = vadd.f32 %v72, %v76
      %v79 = vadd.f32 %v73, %v76
      %80 = vst [vmem:[#allocation3] sm:$0xff] %v78
      %81 = vst [vmem:[#allocation3 + $0x8] sm:$0xff] %v79
    $region21: #{transformer_forward.57} parent=1 // pred_fallthru
      _
    // Predicated region
    $region22: #{transformer_forward.57} parent=1 // pred_check
      _
    $region23: #{transformer_forward.57} parent=1 // pred_check_branch
      %83 = sbr.rel (0) target = $region25
    $region24: #{transformer_forward.57} parent=1 // pred_region
      %85 = vsyncadd [#allocation4], 0
      %s86 = sshll.u32 [#allocation3], 4
      %s87 = int_to_ptr.vmem [resolvable:$true] %s86
      %s88 = sshll.u32 %s3, 4
      %s89 = int_to_ptr.hbm [resolvable:$true] %s88
      %94 = dma.vmem_to_hbm [thread:$0]  %s87, 256, %s89, [#allocation4], 128, 128, 8
    $region25: #{transformer_forward.57} parent=1 // pred_fallthru
      _
    // Predicated region
    $region26: #{transformer_forward.57} parent=1 // pred_check
      _
    $region27: #{transformer_forward.57} parent=1 // pred_check_branch
      %96 = sbr.rel (0) target = $region29
    $region28: #{transformer_forward.57} parent=1 // pred_region
      %98 = dma.done [#allocation4], 256
    $region29: #{transformer_forward.57} parent=1 // pred_fallthru
      _
    %99 = vsyncpa [#allocation4], 1

</llo_original>
